<compile_context>
chip_gen: v5e
topology: v5e:2x2
jax: 0.10.0
libtpu: 0.0.40
codegen_flags: <defaults>
</compile_context>

<pallas_src>
import functools

import jax
import jax.numpy as jnp
from jax.experimental import pallas as pl
from jax.experimental.pallas import tpu as pltpu


def _round_up(x, m):
    return (x + m - 1) // m * m


# ----------------------------------------------------------------------------
# Fused generator kernel: one grid step == one image of the batch.
#   gin_ref : (Cin_pad, src_len) bf16 zero-padded, row-major-flattened 5-ch
#             input [R,R,R,D,L,0,0,0]; index 0 == padded pixel (0, 0).
#   mask_ref: (1, H*Wpad) f32, 1.0 on valid columns (x < W).
#   w*_ref  : (K*K, Cout, Cin) bf16 per-tap weight matrices.
#   b3_ref  : (out_nc, 1) f32.  (b1/b2 are provably dead before IN(affine=False).)
#   o_ref   : (out_nc, H*Wpad) f32 (junk columns sliced off in the wrapper).
#   pf_ref  : (ngf, pf_len) bf16 padded-flat inter-layer activation; index F
#             corresponds to padded pixel (1, 1).
# ----------------------------------------------------------------------------
def _netg_fused_kernel(gin_ref, mask_ref, w1_ref, w2_ref, w3_ref, b3_ref,
                       o_ref, pf_ref, *, H, W, Wpad, K, F, ngf, eps):
    L = H * Wpad
    taps = [(dy, dx) for dy in range(K) for dx in range(K)]
    mask = mask_ref[...]                          # (1, L), 1.0 where x < W
    inv_hw = 1.0 / (H * W)

    # Only the pad prefix/suffix of pf must be zero; the interior is fully
    # overwritten each layer (junk columns zeroed via the IN mask), so the
    # previous full-buffer zero-fill (a full-width store pass) is gone.
    pf_ref[:, :F] = jnp.zeros((ngf, F), pf_ref.dtype)
    pf_ref[:, F + L:] = jnp.zeros((ngf, pf_ref.shape[1] - F - L), pf_ref.dtype)

    def conv_accum(src_ref, base, w_ref):
        # Tap-accumulated conv3x3: no materialized im2col.  Each tap is one
        # small bf16 MXU matmul on a lane-shifted contiguous slice of the
        # padded flat source (row stride Wpad); f32 accumulation.
        acc = None
        for t, (dy, dx) in enumerate(taps):
            s = base + dy * Wpad + dx             # static lane offset
            part = jnp.dot(w_ref[t], src_ref[:, s:s + L],
                           preferred_element_type=jnp.float32)
            acc = part if acc is None else acc + part
        return acc                                # (Cout, L) f32

    def inorm_relu(acc):
        # Two-pass InstanceNorm(affine=False) over the valid columns only.
        # Masked centering also zeroes the junk columns, so the store into pf
        # doubles as the next layer's zero padding (no extra mask multiply)
        # and avoids the E[x^2]-E[x]^2 cancellation of a one-pass variance.
        mean = jnp.sum(acc * mask, axis=1, keepdims=True) * inv_hw
        cen = (acc - mean) * mask
        var = jnp.sum(cen * cen, axis=1, keepdims=True) * inv_hw
        return jnp.maximum(cen * jax.lax.rsqrt(var + eps), 0.0)

    base = F - (Wpad + 1)                         # pf offset of padded (0, 0)

    # ---- layer 1: conv3x3 + IN + ReLU straight off the 5(+3 pad)-ch input --
    pf_ref[:, F:F + L] = inorm_relu(
        conv_accum(gin_ref, 0, w1_ref)).astype(pf_ref.dtype)

    # ---- layer 2: conv3x3 + IN + ReLU on the padded-flat activation --------
    pf_ref[:, F:F + L] = inorm_relu(
        conv_accum(pf_ref, base, w2_ref)).astype(pf_ref.dtype)

    # ---- layer 3: conv3x3 + bias + tanh head --------------------------------
    o_ref[...] = jnp.tanh(conv_accum(pf_ref, base, w3_ref) + b3_ref[...])


def _pick_vmem_limit():
    # v5e/v6e have 128 MiB physical VMEM (scoped defaults 16/32 MiB -> raise);
    # v7x has 64 MiB -> keep ~16 MiB of pipeline headroom.
    try:
        cap = pltpu.get_tpu_info().vmem_capacity_bytes
    except Exception:
        cap = 64 * 1024 * 1024
    return 100 * 1024 * 1024 if cap >= 128 * 1024 * 1024 else 48 * 1024 * 1024


# ----------------------------------------------------------------------------
# Wrapper: data prep (concat / padding / flattening / dtype) + pallas_call.
# ----------------------------------------------------------------------------
def netG_apply(params, resize_R, proj_D, proj_L):
    N, _, H, W = resize_R.shape
    K = params["w1"].shape[0]
    pad = K // 2
    c_in = params["w1"].shape[2]                     # 5
    c_in_pad = _round_up(c_in, 8)                    # sublane-aligned channels
    ngf = params["w1"].shape[-1]
    out_nc = params["w3"].shape[-1]

    Hpad, Wpad = H + 2 * pad, W + 2 * pad
    L = H * Wpad                                     # flattened compute width
    src_len = _round_up(Hpad * Wpad + K - 1, 128)    # padded-flat source length
    F = _round_up(Wpad + 1, 128)                     # aligned store offset in pf
    pf_len = F + _round_up(L + Wpad + 1, 128)

    # Channel concat + zero pad + flatten (tiny: c_in_pad x Hpad x Wpad bf16).
    gin = jnp.concatenate([resize_R, proj_D, proj_L], axis=1)   # (N, 5, H, W)
    gin = jnp.pad(gin, ((0, 0), (0, c_in_pad - c_in), (pad, pad), (pad, pad)))
    gin = gin.reshape(N, c_in_pad, Hpad * Wpad)
    gin = jnp.pad(gin, ((0, 0), (0, 0), (0, src_len - Hpad * Wpad)))
    gin = gin.astype(jnp.bfloat16)

    col = jnp.arange(L, dtype=jnp.int32) % Wpad
    mask = (col < W).astype(jnp.float32).reshape(1, L)

    def prep_w(w, cin_pad):  # (K, K, Cin, Cout) -> (K*K, Cout, Cin_pad) bf16
        kk, _, cin, cout = w.shape
        wt = jnp.transpose(w.reshape(kk * kk, cin, cout), (0, 2, 1))
        wt = jnp.pad(wt, ((0, 0), (0, 0), (0, cin_pad - cin)))
        return wt.astype(jnp.bfloat16)

    w1 = prep_w(params["w1"], c_in_pad)              # (9, ngf, 8)
    w2 = prep_w(params["w2"], ngf)                   # (9, ngf, ngf)
    w3 = prep_w(params["w3"], ngf)                   # (9, out_nc, ngf)
    # b1/b2 are added immediately before InstanceNorm(affine=False); the mean
    # subtraction cancels them exactly, so they are intentionally not loaded.
    b3 = params["b3"].reshape(-1, 1).astype(jnp.float32)

    kernel = functools.partial(_netg_fused_kernel, H=H, W=W, Wpad=Wpad, K=K,
                               F=F, ngf=ngf, eps=1e-5)

    out_flat = pl.pallas_call(
        kernel,
        out_shape=jax.ShapeDtypeStruct((N, out_nc, L), jnp.float32),
        grid=(N,),
        in_specs=[
            pl.BlockSpec((None, c_in_pad, src_len), lambda n: (n, 0, 0)),
            pl.BlockSpec((1, L), lambda n: (0, 0)),
            pl.BlockSpec(w1.shape, lambda n: (0, 0, 0)),
            pl.BlockSpec(w2.shape, lambda n: (0, 0, 0)),
            pl.BlockSpec(w3.shape, lambda n: (0, 0, 0)),
            pl.BlockSpec(b3.shape, lambda n: (0, 0)),
        ],
        out_specs=pl.BlockSpec((None, out_nc, L), lambda n: (n, 0, 0)),
        scratch_shapes=[
            pltpu.VMEM((ngf, pf_len), jnp.bfloat16),  # inter-layer activations
        ],
        compiler_params=pltpu.CompilerParams(
            dimension_semantics=("parallel",),        # batch -> both TCs on v7x
            vmem_limit_bytes=_pick_vmem_limit(),
        ),
    )(gin, mask, w1, w2, w3, b3)

    # Drop junk columns (x >= W); only touches the small 3-channel output once.
    return out_flat.reshape(N, out_nc, H, Wpad)[:, :, :, :W]


# ----------------------------------------------------------------------------
# geo_projection: satellite depth/label -> panorama coordinates.
# TODO(synk): the original geo_projection source is not provided; a polar
# ray-cast (nearest-neighbor sampling along azimuth columns) is used as a
# shape-faithful stand-in.  Pure gather -> plain JAX, no Pallas win.
# ----------------------------------------------------------------------------
def geo_projection(real_D, real_L, ori, sate_gsd, pano_size, is_normalized=True):
    N, _, Hs, Ws = real_D.shape
    Hp, Wp = pano_size
    cy, cx = (Hs - 1) / 2.0, (Ws - 1) / 2.0
    r_max = min(cy, cx)

    j = jnp.arange(Wp, dtype=jnp.float32)
    i = jnp.arange(Hp, dtype=jnp.float32)
    theta = 2.0 * jnp.pi * j / Wp                   # azimuth per column
    r = r_max * (1.0 - i / (Hp - 1))                # radius per row
    del sate_gsd  # scale folded into the (already normalized) depth values

    def _one(D, L, o):
        th = theta + o
        yy = cy - r[:, None] * jnp.cos(th)[None, :]
        xx = cx + r[:, None] * jnp.sin(th)[None, :]
        yi = jnp.clip(jnp.round(yy).astype(jnp.int32), 0, Hs - 1)
        xi = jnp.clip(jnp.round(xx).astype(jnp.int32), 0, Ws - 1)
        return D[0][yi, xi][None], L[0][yi, xi][None]

    proj_D, proj_L = jax.vmap(_one)(real_D, real_L, ori)
    return proj_D, proj_L                           # each (N, 1, Hp, Wp)


# ----------------------------------------------------------------------------
# DL2S.tile(a, 3, 2): repeat + index_select with order [0, W, 1, W+1, ...]
# applied to [a, a] is exactly an interleaved repeat along width.
# ----------------------------------------------------------------------------
def tile_w2(a):
    return jnp.repeat(a, 2, axis=3)


# ----------------------------------------------------------------------------
# netG parameters.
# TODO(synk): networks.define_G source is not provided; a representative small
# conv/IN/ReLU generator with a tanh head is used (5 -> ngf -> ngf -> 3).
# b1/b2 exist for structural parity with the torch convs but are mathematically
# dead before InstanceNorm(affine=False) and are not consumed by the kernel.
# ----------------------------------------------------------------------------
def init_netG_params(key, in_nc=5, out_nc=3, ngf=16):
    ks = jax.random.split(key, 3)
    scale = 0.02  # pix2pix "normal" init, init_gain = 0.02
    return {
        "w1": scale * jax.random.normal(ks[0], (3, 3, in_nc, ngf), jnp.float32),
        "b1": jnp.zeros((ngf,), jnp.float32),
        "w2": scale * jax.random.normal(ks[1], (3, 3, ngf, ngf), jnp.float32),
        "b2": jnp.zeros((ngf,), jnp.float32),
        "w3": scale * jax.random.normal(ks[2], (3, 3, ngf, out_nc), jnp.float32),
        "b3": jnp.zeros((out_nc,), jnp.float32),
    }


# ----------------------------------------------------------------------------
# DL2S.forward()
# ----------------------------------------------------------------------------
@functools.partial(jax.jit, static_argnames=("sate_gsd", "pano_size"))
def dl2s_forward(params, real_R, real_D, real_L, ori, *, sate_gsd, pano_size):
    proj_D, proj_L = geo_projection(real_D, real_L, ori, sate_gsd, pano_size,
                                    is_normalized=True)
    resize_R = tile_w2(real_R)                                  # (N, 3, Hp, Wp)
    # The torch cat([resize_R, proj_D, proj_L], 1) plus the layout transpose is
    # a tiny wrapper concat; the whole generator runs in one Pallas call.
    return netG_apply(params, resize_R, proj_D, proj_L)         # (N, 3, Hp, Wp)


if __name__ == "__main__":
    key = jax.random.PRNGKey(0)
    k_r, k_d, k_l, k_o, k_p = jax.random.split(key, 5)

    N, Hs, Ws = 2, 16, 16
    pano_size = (Hs, 2 * Hs)        # (16, 32)
    sate_gsd = 0.5

    real_R = jax.random.uniform(k_r, (N, 3, Hs, Ws), jnp.float32, -1.0, 1.0)
    real_D = jax.random.uniform(k_d, (N, 1, Hs, Ws), jnp.float32, -1.0, 1.0)
    real_L = jax.random.uniform(k_l, (N, 1, Hs, Ws), jnp.float32, -1.0, 1.0)
    ori = jax.random.uniform(k_o, (N,), jnp.float32, 0.0, 2.0 * jnp.pi)

    params = init_netG_params(k_p, in_nc=5, out_nc=3, ngf=16)

    fake_S = dl2s_forward(params, real_R, real_D, real_L, ori,
                          sate_gsd=sate_gsd, pano_size=pano_size)
    fake_S = jax.block_until_ready(fake_S)

    assert fake_S.shape == (N, 3, pano_size[0], pano_size[1]), fake_S.shape
    assert bool(jnp.all(jnp.isfinite(fake_S)))
    print("KERNEL_OK")
</pallas_src>

<mosaic_0001>
module attributes {stable_mosaic.version = 11 : i64} {
  func.func @_netg_fused_kernel(%arg0: i32, %arg1: memref<1x8x640xbf16, #tpu.memory_space<vmem>>, %arg2: memref<1x544xf32, #tpu.memory_space<vmem>>, %arg3: memref<9x16x8xbf16, #tpu.memory_space<vmem>>, %arg4: memref<9x16x16xbf16, #tpu.memory_space<vmem>>, %arg5: memref<9x3x16xbf16, #tpu.memory_space<vmem>>, %arg6: memref<3x1xf32, #tpu.memory_space<vmem>>, %arg7: memref<1x3x544xf32, #tpu.memory_space<vmem>>, %arg8: memref<16x768xbf16, #tpu.memory_space<vmem>>) attributes {dimension_semantics = [#tpu.dimension_semantics<parallel>], iteration_bounds = array<i64: 2>, scalar_prefetch = 0 : i64, scratch_operands = 1 : i64, tpu.core_type = #tpu.core_type<tc>, window_params = [{transform_indices = @transform_0, window_bounds = array<i64: 1, 8, 640>}, {pipeline_mode = #tpu.pipeline_mode<synchronous>, transform_indices = @transform_1, window_bounds = array<i64: 1, 544>}, {pipeline_mode = #tpu.pipeline_mode<synchronous>, transform_indices = @transform_2, window_bounds = array<i64: 9, 16, 8>}, {pipeline_mode = #tpu.pipeline_mode<synchronous>, transform_indices = @transform_3, window_bounds = array<i64: 9, 16, 16>}, {pipeline_mode = #tpu.pipeline_mode<synchronous>, transform_indices = @transform_4, window_bounds = array<i64: 9, 3, 16>}, {pipeline_mode = #tpu.pipeline_mode<synchronous>, transform_indices = @transform_5, window_bounds = array<i64: 3, 1>}, {transform_indices = @transform_6, window_bounds = array<i64: 1, 3, 544>}]} {
    %c0 = arith.constant 0 : index
    %c0_0 = arith.constant 0 : index
    %0 = vector.load %arg2[%c0, %c0_0] : memref<1x544xf32, #tpu.memory_space<vmem>>, vector<1x544xf32>
    %cst = arith.constant 0.000000e+00 : bf16
    %1 = vector.broadcast %cst : bf16 to vector<16x128xbf16>
    %c0_1 = arith.constant 0 : index
    %c0_2 = arith.constant 0 : index
    %2 = vector.load %arg8[%c0_1, %c0_2] : memref<16x768xbf16, #tpu.memory_space<vmem>>, vector<16x128xbf16>
    tpu.vector_store %arg8[%c0_1, %c0_2], %1 {strides = array<i32>} : memref<16x768xbf16, #tpu.memory_space<vmem>>, vector<16x128xbf16>,
    %cst_3 = arith.constant 0.000000e+00 : bf16
    %3 = vector.broadcast %cst_3 : bf16 to vector<16x96xbf16>
    %c0_4 = arith.constant 0 : index
    %c672 = arith.constant 672 : index
    %4 = vector.load %arg8[%c0_4, %c672] : memref<16x768xbf16, #tpu.memory_space<vmem>>, vector<16x96xbf16>
    tpu.vector_store %arg8[%c0_4, %c672], %3 {strides = array<i32>} : memref<16x768xbf16, #tpu.memory_space<vmem>>, vector<16x96xbf16>,
    %c0_5 = arith.constant 0 : index
    %c0_6 = arith.constant 0 : index
    %c0_7 = arith.constant 0 : index
    %5 = vector.load %arg3[%c0_5, %c0_6, %c0_7] : memref<9x16x8xbf16, #tpu.memory_space<vmem>>, vector<1x16x8xbf16>
    %6 = vector.shape_cast %5 : vector<1x16x8xbf16> to vector<16x8xbf16>
    %c0_8 = arith.constant 0 : index
    %c0_9 = arith.constant 0 : index
    %c0_10 = arith.constant 0 : index
    %7 = vector.load %arg1[%c0_8, %c0_9, %c0_10] : memref<1x8x640xbf16, #tpu.memory_space<vmem>>, vector<1x8x544xbf16>
    %8 = vector.shape_cast %7 : vector<1x8x544xbf16> to vector<8x544xbf16>
    %cst_11 = arith.constant dense<0.000000e+00> : vector<16x544xf32>
    %9 = tpu.matmul %6, %8, %cst_11 {dimension_numbers = #tpu.dot_dimension_numbers<[1], [0], [0], [1], [0, 0, 1, 1], [], []>} : vector<16x8xbf16>, vector<8x544xbf16>, vector<16x544xf32> -> vector<16x544xf32>
    %c1 = arith.constant 1 : index
    %c0_12 = arith.constant 0 : index
    %c0_13 = arith.constant 0 : index
    %10 = vector.load %arg3[%c1, %c0_12, %c0_13] : memref<9x16x8xbf16, #tpu.memory_space<vmem>>, vector<1x16x8xbf16>
    %11 = vector.shape_cast %10 : vector<1x16x8xbf16> to vector<16x8xbf16>
    %c0_14 = arith.constant 0 : index
    %c0_15 = arith.constant 0 : index
    %c1_16 = arith.constant 1 : index
    %12 = vector.load %arg1[%c0_14, %c0_15, %c1_16] : memref<1x8x640xbf16, #tpu.memory_space<vmem>>, vector<1x8x544xbf16>
    %13 = vector.shape_cast %12 : vector<1x8x544xbf16> to vector<8x544xbf16>
    %cst_17 = arith.constant dense<0.000000e+00> : vector<16x544xf32>
    %14 = tpu.matmul %11, %13, %cst_17 {dimension_numbers = #tpu.dot_dimension_numbers<[1], [0], [0], [1], [0, 0, 1, 1], [], []>} : vector<16x8xbf16>, vector<8x544xbf16>, vector<16x544xf32> -> vector<16x544xf32>
    %15 = arith.addf %9, %14 : vector<16x544xf32>
    %c2 = arith.constant 2 : index
    %c0_18 = arith.constant 0 : index
    %c0_19 = arith.constant 0 : index
    %16 = vector.load %arg3[%c2, %c0_18, %c0_19] : memref<9x16x8xbf16, #tpu.memory_space<vmem>>, vector<1x16x8xbf16>
    %17 = vector.shape_cast %16 : vector<1x16x8xbf16> to vector<16x8xbf16>
    %c0_20 = arith.constant 0 : index
    %c0_21 = arith.constant 0 : index
    %c2_22 = arith.constant 2 : index
    %18 = vector.load %arg1[%c0_20, %c0_21, %c2_22] : memref<1x8x640xbf16, #tpu.memory_space<vmem>>, vector<1x8x544xbf16>
    %19 = vector.shape_cast %18 : vector<1x8x544xbf16> to vector<8x544xbf16>
    %cst_23 = arith.constant dense<0.000000e+00> : vector<16x544xf32>
    %20 = tpu.matmul %17, %19, %cst_23 {dimension_numbers = #tpu.dot_dimension_numbers<[1], [0], [0], [1], [0, 0, 1, 1], [], []>} : vector<16x8xbf16>, vector<8x544xbf16>, vector<16x544xf32> -> vector<16x544xf32>
    %21 = arith.addf %15, %20 : vector<16x544xf32>
    %c3 = arith.constant 3 : index
    %c0_24 = arith.constant 0 : index
    %c0_25 = arith.constant 0 : index
    %22 = vector.load %arg3[%c3, %c0_24, %c0_25] : memref<9x16x8xbf16, #tpu.memory_space<vmem>>, vector<1x16x8xbf16>
    %23 = vector.shape_cast %22 : vector<1x16x8xbf16> to vector<16x8xbf16>
    %c0_26 = arith.constant 0 : index
    %c0_27 = arith.constant 0 : index
    %c34 = arith.constant 34 : index
    %24 = vector.load %arg1[%c0_26, %c0_27, %c34] : memref<1x8x640xbf16, #tpu.memory_space<vmem>>, vector<1x8x544xbf16>
    %25 = vector.shape_cast %24 : vector<1x8x544xbf16> to vector<8x544xbf16>
    %cst_28 = arith.constant dense<0.000000e+00> : vector<16x544xf32>
    %26 = tpu.matmul %23, %25, %cst_28 {dimension_numbers = #tpu.dot_dimension_numbers<[1], [0], [0], [1], [0, 0, 1, 1], [], []>} : vector<16x8xbf16>, vector<8x544xbf16>, vector<16x544xf32> -> vector<16x544xf32>
    %27 = arith.addf %21, %26 : vector<16x544xf32>
    %c4 = arith.constant 4 : index
    %c0_29 = arith.constant 0 : index
    %c0_30 = arith.constant 0 : index
    %28 = vector.load %arg3[%c4, %c0_29, %c0_30] : memref<9x16x8xbf16, #tpu.memory_space<vmem>>, vector<1x16x8xbf16>
    %29 = vector.shape_cast %28 : vector<1x16x8xbf16> to vector<16x8xbf16>
    %c0_31 = arith.constant 0 : index
    %c0_32 = arith.constant 0 : index
    %c35 = arith.constant 35 : index
    %30 = vector.load %arg1[%c0_31, %c0_32, %c35] : memref<1x8x640xbf16, #tpu.memory_space<vmem>>, vector<1x8x544xbf16>
    %31 = vector.shape_cast %30 : vector<1x8x544xbf16> to vector<8x544xbf16>
    %cst_33 = arith.constant dense<0.000000e+00> : vector<16x544xf32>
    %32 = tpu.matmul %29, %31, %cst_33 {dimension_numbers = #tpu.dot_dimension_numbers<[1], [0], [0], [1], [0, 0, 1, 1], [], []>} : vector<16x8xbf16>, vector<8x544xbf16>, vector<16x544xf32> -> vector<16x544xf32>
    %33 = arith.addf %27, %32 : vector<16x544xf32>
    %c5 = arith.constant 5 : index
    %c0_34 = arith.constant 0 : index
    %c0_35 = arith.constant 0 : index
    %34 = vector.load %arg3[%c5, %c0_34, %c0_35] : memref<9x16x8xbf16, #tpu.memory_space<vmem>>, vector<1x16x8xbf16>
    %35 = vector.shape_cast %34 : vector<1x16x8xbf16> to vector<16x8xbf16>
    %c0_36 = arith.constant 0 : index
    %c0_37 = arith.constant 0 : index
    %c36 = arith.constant 36 : index
    %36 = vector.load %arg1[%c0_36, %c0_37, %c36] : memref<1x8x640xbf16, #tpu.memory_space<vmem>>, vector<1x8x544xbf16>
    %37 = vector.shape_cast %36 : vector<1x8x544xbf16> to vector<8x544xbf16>
    %cst_38 = arith.constant dense<0.000000e+00> : vector<16x544xf32>
    %38 = tpu.matmul %35, %37, %cst_38 {dimension_numbers = #tpu.dot_dimension_numbers<[1], [0], [0], [1], [0, 0, 1, 1], [], []>} : vector<16x8xbf16>, vector<8x544xbf16>, vector<16x544xf32> -> vector<16x544xf32>
    %39 = arith.addf %33, %38 : vector<16x544xf32>
    %c6 = arith.constant 6 : index
    %c0_39 = arith.constant 0 : index
    %c0_40 = arith.constant 0 : index
    %40 = vector.load %arg3[%c6, %c0_39, %c0_40] : memref<9x16x8xbf16, #tpu.memory_space<vmem>>, vector<1x16x8xbf16>
    %41 = vector.shape_cast %40 : vector<1x16x8xbf16> to vector<16x8xbf16>
    %c0_41 = arith.constant 0 : index
    %c0_42 = arith.constant 0 : index
    %c68 = arith.constant 68 : index
    %42 = vector.load %arg1[%c0_41, %c0_42, %c68] : memref<1x8x640xbf16, #tpu.memory_space<vmem>>, vector<1x8x544xbf16>
    %43 = vector.shape_cast %42 : vector<1x8x544xbf16> to vector<8x544xbf16>
    %cst_43 = arith.constant dense<0.000000e+00> : vector<16x544xf32>
    %44 = tpu.matmul %41, %43, %cst_43 {dimension_numbers = #tpu.dot_dimension_numbers<[1], [0], [0], [1], [0, 0, 1, 1], [], []>} : vector<16x8xbf16>, vector<8x544xbf16>, vector<16x544xf32> -> vector<16x544xf32>
    %45 = arith.addf %39, %44 : vector<16x544xf32>
    %c7 = arith.constant 7 : index
    %c0_44 = arith.constant 0 : index
    %c0_45 = arith.constant 0 : index
    %46 = vector.load %arg3[%c7, %c0_44, %c0_45] : memref<9x16x8xbf16, #tpu.memory_space<vmem>>, vector<1x16x8xbf16>
    %47 = vector.shape_cast %46 : vector<1x16x8xbf16> to vector<16x8xbf16>
    %c0_46 = arith.constant 0 : index
    %c0_47 = arith.constant 0 : index
    %c69 = arith.constant 69 : index
    %48 = vector.load %arg1[%c0_46, %c0_47, %c69] : memref<1x8x640xbf16, #tpu.memory_space<vmem>>, vector<1x8x544xbf16>
    %49 = vector.shape_cast %48 : vector<1x8x544xbf16> to vector<8x544xbf16>
    %cst_48 = arith.constant dense<0.000000e+00> : vector<16x544xf32>
    %50 = tpu.matmul %47, %49, %cst_48 {dimension_numbers = #tpu.dot_dimension_numbers<[1], [0], [0], [1], [0, 0, 1, 1], [], []>} : vector<16x8xbf16>, vector<8x544xbf16>, vector<16x544xf32> -> vector<16x544xf32>
    %51 = arith.addf %45, %50 : vector<16x544xf32>
    %c8 = arith.constant 8 : index
    %c0_49 = arith.constant 0 : index
    %c0_50 = arith.constant 0 : index
    %52 = vector.load %arg3[%c8, %c0_49, %c0_50] : memref<9x16x8xbf16, #tpu.memory_space<vmem>>, vector<1x16x8xbf16>
    %53 = vector.shape_cast %52 : vector<1x16x8xbf16> to vector<16x8xbf16>
    %c0_51 = arith.constant 0 : index
    %c0_52 = arith.constant 0 : index
    %c70 = arith.constant 70 : index
    %54 = vector.load %arg1[%c0_51, %c0_52, %c70] : memref<1x8x640xbf16, #tpu.memory_space<vmem>>, vector<1x8x544xbf16>
    %55 = vector.shape_cast %54 : vector<1x8x544xbf16> to vector<8x544xbf16>
    %cst_53 = arith.constant dense<0.000000e+00> : vector<16x544xf32>
    %56 = tpu.matmul %53, %55, %cst_53 {dimension_numbers = #tpu.dot_dimension_numbers<[1], [0], [0], [1], [0, 0, 1, 1], [], []>} : vector<16x8xbf16>, vector<8x544xbf16>, vector<16x544xf32> -> vector<16x544xf32>
    %57 = arith.addf %51, %56 : vector<16x544xf32>
    %58 = vector.broadcast %0 : vector<1x544xf32> to vector<16x544xf32>
    %59 = arith.mulf %57, %58 : vector<16x544xf32>
    %cst_54 = arith.constant dense<0.000000e+00> : vector<16xf32>
    %60 = vector.multi_reduction <add>, %59, %cst_54 [1] : vector<16x544xf32> to vector<16xf32>
    %61 = vector.shape_cast %60 : vector<16xf32> to vector<16x1xf32>
    %cst_55 = arith.constant 0.001953125 : f32
    %62 = vector.broadcast %cst_55 : f32 to vector<16x1xf32>
    %63 = arith.mulf %61, %62 : vector<16x1xf32>
    %64 = vector.broadcast %63 : vector<16x1xf32> to vector<16x544xf32>
    %65 = arith.subf %57, %64 : vector<16x544xf32>
    %66 = vector.broadcast %0 : vector<1x544xf32> to vector<16x544xf32>
    %67 = arith.mulf %65, %66 : vector<16x544xf32>
    %68 = arith.mulf %67, %67 : vector<16x544xf32>
    %cst_56 = arith.constant dense<0.000000e+00> : vector<16xf32>
    %69 = vector.multi_reduction <add>, %68, %cst_56 [1] : vector<16x544xf32> to vector<16xf32>
    %70 = vector.shape_cast %69 : vector<16xf32> to vector<16x1xf32>
    %cst_57 = arith.constant 0.001953125 : f32
    %71 = vector.broadcast %cst_57 : f32 to vector<16x1xf32>
    %72 = arith.mulf %70, %71 : vector<16x1xf32>
    %cst_58 = arith.constant 9.99999974E-6 : f32
    %73 = vector.broadcast %cst_58 : f32 to vector<16x1xf32>
    %74 = arith.addf %72, %73 : vector<16x1xf32>
    %75 = math.rsqrt %74 : vector<16x1xf32>
    %76 = vector.broadcast %75 : vector<16x1xf32> to vector<16x544xf32>
    %77 = arith.mulf %67, %76 : vector<16x544xf32>
    %cst_59 = arith.constant 0.000000e+00 : f32
    %78 = vector.broadcast %cst_59 : f32 to vector<16x544xf32>
    %79 = arith.maximumf %77, %78 : vector<16x544xf32>
    %80 = arith.truncf %79 : vector<16x544xf32> to vector<16x544xbf16>
    %c0_60 = arith.constant 0 : index
    %c128 = arith.constant 128 : index
    %81 = vector.load %arg8[%c0_60, %c128] : memref<16x768xbf16, #tpu.memory_space<vmem>>, vector<16x544xbf16>
    tpu.vector_store %arg8[%c0_60, %c128], %80 {strides = array<i32>} : memref<16x768xbf16, #tpu.memory_space<vmem>>, vector<16x544xbf16>,
    %c0_61 = arith.constant 0 : index
    %c0_62 = arith.constant 0 : index
    %c0_63 = arith.constant 0 : index
    %82 = vector.load %arg4[%c0_61, %c0_62, %c0_63] : memref<9x16x16xbf16, #tpu.memory_space<vmem>>, vector<1x16x16xbf16>
    %83 = vector.shape_cast %82 : vector<1x16x16xbf16> to vector<16x16xbf16>
    %c0_64 = arith.constant 0 : index
    %c93 = arith.constant 93 : index
    %84 = vector.load %arg8[%c0_64, %c93] : memref<16x768xbf16, #tpu.memory_space<vmem>>, vector<16x544xbf16>
    %cst_65 = arith.constant dense<0.000000e+00> : vector<16x544xf32>
    %85 = tpu.matmul %83, %84, %cst_65 {dimension_numbers = #tpu.dot_dimension_numbers<[1], [0], [0], [1], [0, 0, 1, 1], [], []>} : vector<16x16xbf16>, vector<16x544xbf16>, vector<16x544xf32> -> vector<16x544xf32>
    %c1_66 = arith.constant 1 : index
    %c0_67 = arith.constant 0 : index
    %c0_68 = arith.constant 0 : index
    %86 = vector.load %arg4[%c1_66, %c0_67, %c0_68] : memref<9x16x16xbf16, #tpu.memory_space<vmem>>, vector<1x16x16xbf16>
    %87 = vector.shape_cast %86 : vector<1x16x16xbf16> to vector<16x16xbf16>
    %c0_69 = arith.constant 0 : index
    %c94 = arith.constant 94 : index
    %88 = vector.load %arg8[%c0_69, %c94] : memref<16x768xbf16, #tpu.memory_space<vmem>>, vector<16x544xbf16>
    %cst_70 = arith.constant dense<0.000000e+00> : vector<16x544xf32>
    %89 = tpu.matmul %87, %88, %cst_70 {dimension_numbers = #tpu.dot_dimension_numbers<[1], [0], [0], [1], [0, 0, 1, 1], [], []>} : vector<16x16xbf16>, vector<16x544xbf16>, vector<16x544xf32> -> vector<16x544xf32>
    %90 = arith.addf %85, %89 : vector<16x544xf32>
    %c2_71 = arith.constant 2 : index
    %c0_72 = arith.constant 0 : index
    %c0_73 = arith.constant 0 : index
    %91 = vector.load %arg4[%c2_71, %c0_72, %c0_73] : memref<9x16x16xbf16, #tpu.memory_space<vmem>>, vector<1x16x16xbf16>
    %92 = vector.shape_cast %91 : vector<1x16x16xbf16> to vector<16x16xbf16>
    %c0_74 = arith.constant 0 : index
    %c95 = arith.constant 95 : index
    %93 = vector.load %arg8[%c0_74, %c95] : memref<16x768xbf16, #tpu.memory_space<vmem>>, vector<16x544xbf16>
    %cst_75 = arith.constant dense<0.000000e+00> : vector<16x544xf32>
    %94 = tpu.matmul %92, %93, %cst_75 {dimension_numbers = #tpu.dot_dimension_numbers<[1], [0], [0], [1], [0, 0, 1, 1], [], []>} : vector<16x16xbf16>, vector<16x544xbf16>, vector<16x544xf32> -> vector<16x544xf32>
    %95 = arith.addf %90, %94 : vector<16x544xf32>
    %c3_76 = arith.constant 3 : index
    %c0_77 = arith.constant 0 : index
    %c0_78 = arith.constant 0 : index
    %96 = vector.load %arg4[%c3_76, %c0_77, %c0_78] : memref<9x16x16xbf16, #tpu.memory_space<vmem>>, vector<1x16x16xbf16>
    %97 = vector.shape_cast %96 : vector<1x16x16xbf16> to vector<16x16xbf16>
    %c0_79 = arith.constant 0 : index
    %c127 = arith.constant 127 : index
    %98 = vector.load %arg8[%c0_79, %c127] : memref<16x768xbf16, #tpu.memory_space<vmem>>, vector<16x544xbf16>
    %cst_80 = arith.constant dense<0.000000e+00> : vector<16x544xf32>
    %99 = tpu.matmul %97, %98, %cst_80 {dimension_numbers = #tpu.dot_dimension_numbers<[1], [0], [0], [1], [0, 0, 1, 1], [], []>} : vector<16x16xbf16>, vector<16x544xbf16>, vector<16x544xf32> -> vector<16x544xf32>
    %100 = arith.addf %95, %99 : vector<16x544xf32>
    %c4_81 = arith.constant 4 : index
    %c0_82 = arith.constant 0 : index
    %c0_83 = arith.constant 0 : index
    %101 = vector.load %arg4[%c4_81, %c0_82, %c0_83] : memref<9x16x16xbf16, #tpu.memory_space<vmem>>, vector<1x16x16xbf16>
    %102 = vector.shape_cast %101 : vector<1x16x16xbf16> to vector<16x16xbf16>
    %c0_84 = arith.constant 0 : index
    %c128_85 = arith.constant 128 : index
    %103 = vector.load %arg8[%c0_84, %c128_85] : memref<16x768xbf16, #tpu.memory_space<vmem>>, vector<16x544xbf16>
    %cst_86 = arith.constant dense<0.000000e+00> : vector<16x544xf32>
    %104 = tpu.matmul %102, %103, %cst_86 {dimension_numbers = #tpu.dot_dimension_numbers<[1], [0], [0], [1], [0, 0, 1, 1], [], []>} : vector<16x16xbf16>, vector<16x544xbf16>, vector<16x544xf32> -> vector<16x544xf32>
    %105 = arith.addf %100, %104 : vector<16x544xf32>
    %c5_87 = arith.constant 5 : index
    %c0_88 = arith.constant 0 : index
    %c0_89 = arith.constant 0 : index
    %106 = vector.load %arg4[%c5_87, %c0_88, %c0_89] : memref<9x16x16xbf16, #tpu.memory_space<vmem>>, vector<1x16x16xbf16>
    %107 = vector.shape_cast %106 : vector<1x16x16xbf16> to vector<16x16xbf16>
    %c0_90 = arith.constant 0 : index
    %c129 = arith.constant 129 : index
    %108 = vector.load %arg8[%c0_90, %c129] : memref<16x768xbf16, #tpu.memory_space<vmem>>, vector<16x544xbf16>
    %cst_91 = arith.constant dense<0.000000e+00> : vector<16x544xf32>
    %109 = tpu.matmul %107, %108, %cst_91 {dimension_numbers = #tpu.dot_dimension_numbers<[1], [0], [0], [1], [0, 0, 1, 1], [], []>} : vector<16x16xbf16>, vector<16x544xbf16>, vector<16x544xf32> -> vector<16x544xf32>
    %110 = arith.addf %105, %109 : vector<16x544xf32>
    %c6_92 = arith.constant 6 : index
    %c0_93 = arith.constant 0 : index
    %c0_94 = arith.constant 0 : index
    %111 = vector.load %arg4[%c6_92, %c0_93, %c0_94] : memref<9x16x16xbf16, #tpu.memory_space<vmem>>, vector<1x16x16xbf16>
    %112 = vector.shape_cast %111 : vector<1x16x16xbf16> to vector<16x16xbf16>
    %c0_95 = arith.constant 0 : index
    %c161 = arith.constant 161 : index
    %113 = vector.load %arg8[%c0_95, %c161] : memref<16x768xbf16, #tpu.memory_space<vmem>>, vector<16x544xbf16>
    %cst_96 = arith.constant dense<0.000000e+00> : vector<16x544xf32>
    %114 = tpu.matmul %112, %113, %cst_96 {dimension_numbers = #tpu.dot_dimension_numbers<[1], [0], [0], [1], [0, 0, 1, 1], [], []>} : vector<16x16xbf16>, vector<16x544xbf16>, vector<16x544xf32> -> vector<16x544xf32>
    %115 = arith.addf %110, %114 : vector<16x544xf32>
    %c7_97 = arith.constant 7 : index
    %c0_98 = arith.constant 0 : index
    %c0_99 = arith.constant 0 : index
    %116 = vector.load %arg4[%c7_97, %c0_98, %c0_99] : memref<9x16x16xbf16, #tpu.memory_space<vmem>>, vector<1x16x16xbf16>
    %117 = vector.shape_cast %116 : vector<1x16x16xbf16> to vector<16x16xbf16>
    %c0_100 = arith.constant 0 : index
    %c162 = arith.constant 162 : index
    %118 = vector.load %arg8[%c0_100, %c162] : memref<16x768xbf16, #tpu.memory_space<vmem>>, vector<16x544xbf16>
    %cst_101 = arith.constant dense<0.000000e+00> : vector<16x544xf32>
    %119 = tpu.matmul %117, %118, %cst_101 {dimension_numbers = #tpu.dot_dimension_numbers<[1], [0], [0], [1], [0, 0, 1, 1], [], []>} : vector<16x16xbf16>, vector<16x544xbf16>, vector<16x544xf32> -> vector<16x544xf32>
    %120 = arith.addf %115, %119 : vector<16x544xf32>
    %c8_102 = arith.constant 8 : index
    %c0_103 = arith.constant 0 : index
    %c0_104 = arith.constant 0 : index
    %121 = vector.load %arg4[%c8_102, %c0_103, %c0_104] : memref<9x16x16xbf16, #tpu.memory_space<vmem>>, vector<1x16x16xbf16>
    %122 = vector.shape_cast %121 : vector<1x16x16xbf16> to vector<16x16xbf16>
    %c0_105 = arith.constant 0 : index
    %c163 = arith.constant 163 : index
    %123 = vector.load %arg8[%c0_105, %c163] : memref<16x768xbf16, #tpu.memory_space<vmem>>, vector<16x544xbf16>
    %cst_106 = arith.constant dense<0.000000e+00> : vector<16x544xf32>
    %124 = tpu.matmul %122, %123, %cst_106 {dimension_numbers = #tpu.dot_dimension_numbers<[1], [0], [0], [1], [0, 0, 1, 1], [], []>} : vector<16x16xbf16>, vector<16x544xbf16>, vector<16x544xf32> -> vector<16x544xf32>
    %125 = arith.addf %120, %124 : vector<16x544xf32>
    %126 = vector.broadcast %0 : vector<1x544xf32> to vector<16x544xf32>
    %127 = arith.mulf %125, %126 : vector<16x544xf32>
    %cst_107 = arith.constant dense<0.000000e+00> : vector<16xf32>
    %128 = vector.multi_reduction <add>, %127, %cst_107 [1] : vector<16x544xf32> to vector<16xf32>
    %129 = vector.shape_cast %128 : vector<16xf32> to vector<16x1xf32>
    %cst_108 = arith.constant 0.001953125 : f32
    %130 = vector.broadcast %cst_108 : f32 to vector<16x1xf32>
    %131 = arith.mulf %129, %130 : vector<16x1xf32>
    %132 = vector.broadcast %131 : vector<16x1xf32> to vector<16x544xf32>
    %133 = arith.subf %125, %132 : vector<16x544xf32>
    %134 = vector.broadcast %0 : vector<1x544xf32> to vector<16x544xf32>
    %135 = arith.mulf %133, %134 : vector<16x544xf32>
    %136 = arith.mulf %135, %135 : vector<16x544xf32>
    %cst_109 = arith.constant dense<0.000000e+00> : vector<16xf32>
    %137 = vector.multi_reduction <add>, %136, %cst_109 [1] : vector<16x544xf32> to vector<16xf32>
    %138 = vector.shape_cast %137 : vector<16xf32> to vector<16x1xf32>
    %cst_110 = arith.constant 0.001953125 : f32
    %139 = vector.broadcast %cst_110 : f32 to vector<16x1xf32>
    %140 = arith.mulf %138, %139 : vector<16x1xf32>
    %cst_111 = arith.constant 9.99999974E-6 : f32
    %141 = vector.broadcast %cst_111 : f32 to vector<16x1xf32>
    %142 = arith.addf %140, %141 : vector<16x1xf32>
    %143 = math.rsqrt %142 : vector<16x1xf32>
    %144 = vector.broadcast %143 : vector<16x1xf32> to vector<16x544xf32>
    %145 = arith.mulf %135, %144 : vector<16x544xf32>
    %cst_112 = arith.constant 0.000000e+00 : f32
    %146 = vector.broadcast %cst_112 : f32 to vector<16x544xf32>
    %147 = arith.maximumf %145, %146 : vector<16x544xf32>
    %148 = arith.truncf %147 : vector<16x544xf32> to vector<16x544xbf16>
    %c0_113 = arith.constant 0 : index
    %c128_114 = arith.constant 128 : index
    %149 = vector.load %arg8[%c0_113, %c128_114] : memref<16x768xbf16, #tpu.memory_space<vmem>>, vector<16x544xbf16>
    tpu.vector_store %arg8[%c0_113, %c128_114], %148 {strides = array<i32>} : memref<16x768xbf16, #tpu.memory_space<vmem>>, vector<16x544xbf16>,
    %c0_115 = arith.constant 0 : index
    %c0_116 = arith.constant 0 : index
    %c0_117 = arith.constant 0 : index
    %150 = vector.load %arg5[%c0_115, %c0_116, %c0_117] : memref<9x3x16xbf16, #tpu.memory_space<vmem>>, vector<1x3x16xbf16>
    %151 = vector.shape_cast %150 : vector<1x3x16xbf16> to vector<3x16xbf16>
    %c0_118 = arith.constant 0 : index
    %c93_119 = arith.constant 93 : index
    %152 = vector.load %arg8[%c0_118, %c93_119] : memref<16x768xbf16, #tpu.memory_space<vmem>>, vector<16x544xbf16>
    %cst_120 = arith.constant dense<0.000000e+00> : vector<3x544xf32>
    %153 = tpu.matmul %151, %152, %cst_120 {dimension_numbers = #tpu.dot_dimension_numbers<[1], [0], [0], [1], [0, 0, 1, 1], [], []>} : vector<3x16xbf16>, vector<16x544xbf16>, vector<3x544xf32> -> vector<3x544xf32>
    %c1_121 = arith.constant 1 : index
    %c0_122 = arith.constant 0 : index
    %c0_123 = arith.constant 0 : index
    %154 = vector.load %arg5[%c1_121, %c0_122, %c0_123] : memref<9x3x16xbf16, #tpu.memory_space<vmem>>, vector<1x3x16xbf16>
    %155 = vector.shape_cast %154 : vector<1x3x16xbf16> to vector<3x16xbf16>
    %c0_124 = arith.constant 0 : index
    %c94_125 = arith.constant 94 : index
    %156 = vector.load %arg8[%c0_124, %c94_125] : memref<16x768xbf16, #tpu.memory_space<vmem>>, vector<16x544xbf16>
    %cst_126 = arith.constant dense<0.000000e+00> : vector<3x544xf32>
    %157 = tpu.matmul %155, %156, %cst_126 {dimension_numbers = #tpu.dot_dimension_numbers<[1], [0], [0], [1], [0, 0, 1, 1], [], []>} : vector<3x16xbf16>, vector<16x544xbf16>, vector<3x544xf32> -> vector<3x544xf32>
    %158 = arith.addf %153, %157 : vector<3x544xf32>
    %c2_127 = arith.constant 2 : index
    %c0_128 = arith.constant 0 : index
    %c0_129 = arith.constant 0 : index
    %159 = vector.load %arg5[%c2_127, %c0_128, %c0_129] : memref<9x3x16xbf16, #tpu.memory_space<vmem>>, vector<1x3x16xbf16>
    %160 = vector.shape_cast %159 : vector<1x3x16xbf16> to vector<3x16xbf16>
    %c0_130 = arith.constant 0 : index
    %c95_131 = arith.constant 95 : index
    %161 = vector.load %arg8[%c0_130, %c95_131] : memref<16x768xbf16, #tpu.memory_space<vmem>>, vector<16x544xbf16>
    %cst_132 = arith.constant dense<0.000000e+00> : vector<3x544xf32>
    %162 = tpu.matmul %160, %161, %cst_132 {dimension_numbers = #tpu.dot_dimension_numbers<[1], [0], [0], [1], [0, 0, 1, 1], [], []>} : vector<3x16xbf16>, vector<16x544xbf16>, vector<3x544xf32> -> vector<3x544xf32>
    %163 = arith.addf %158, %162 : vector<3x544xf32>
    %c3_133 = arith.constant 3 : index
    %c0_134 = arith.constant 0 : index
    %c0_135 = arith.constant 0 : index
    %164 = vector.load %arg5[%c3_133, %c0_134, %c0_135] : memref<9x3x16xbf16, #tpu.memory_space<vmem>>, vector<1x3x16xbf16>
    %165 = vector.shape_cast %164 : vector<1x3x16xbf16> to vector<3x16xbf16>
    %c0_136 = arith.constant 0 : index
    %c127_137 = arith.constant 127 : index
    %166 = vector.load %arg8[%c0_136, %c127_137] : memref<16x768xbf16, #tpu.memory_space<vmem>>, vector<16x544xbf16>
    %cst_138 = arith.constant dense<0.000000e+00> : vector<3x544xf32>
    %167 = tpu.matmul %165, %166, %cst_138 {dimension_numbers = #tpu.dot_dimension_numbers<[1], [0], [0], [1], [0, 0, 1, 1], [], []>} : vector<3x16xbf16>, vector<16x544xbf16>, vector<3x544xf32> -> vector<3x544xf32>
    %168 = arith.addf %163, %167 : vector<3x544xf32>
    %c4_139 = arith.constant 4 : index
    %c0_140 = arith.constant 0 : index
    %c0_141 = arith.constant 0 : index
    %169 = vector.load %arg5[%c4_139, %c0_140, %c0_141] : memref<9x3x16xbf16, #tpu.memory_space<vmem>>, vector<1x3x16xbf16>
    %170 = vector.shape_cast %169 : vector<1x3x16xbf16> to vector<3x16xbf16>
    %c0_142 = arith.constant 0 : index
    %c128_143 = arith.constant 128 : index
    %171 = vector.load %arg8[%c0_142, %c128_143] : memref<16x768xbf16, #tpu.memory_space<vmem>>, vector<16x544xbf16>
    %cst_144 = arith.constant dense<0.000000e+00> : vector<3x544xf32>
    %172 = tpu.matmul %170, %171, %cst_144 {dimension_numbers = #tpu.dot_dimension_numbers<[1], [0], [0], [1], [0, 0, 1, 1], [], []>} : vector<3x16xbf16>, vector<16x544xbf16>, vector<3x544xf32> -> vector<3x544xf32>
    %173 = arith.addf %168, %172 : vector<3x544xf32>
    %c5_145 = arith.constant 5 : index
    %c0_146 = arith.constant 0 : index
    %c0_147 = arith.constant 0 : index
    %174 = vector.load %arg5[%c5_145, %c0_146, %c0_147] : memref<9x3x16xbf16, #tpu.memory_space<vmem>>, vector<1x3x16xbf16>
    %175 = vector.shape_cast %174 : vector<1x3x16xbf16> to vector<3x16xbf16>
    %c0_148 = arith.constant 0 : index
    %c129_149 = arith.constant 129 : index
    %176 = vector.load %arg8[%c0_148, %c129_149] : memref<16x768xbf16, #tpu.memory_space<vmem>>, vector<16x544xbf16>
    %cst_150 = arith.constant dense<0.000000e+00> : vector<3x544xf32>
    %177 = tpu.matmul %175, %176, %cst_150 {dimension_numbers = #tpu.dot_dimension_numbers<[1], [0], [0], [1], [0, 0, 1, 1], [], []>} : vector<3x16xbf16>, vector<16x544xbf16>, vector<3x544xf32> -> vector<3x544xf32>
    %178 = arith.addf %173, %177 : vector<3x544xf32>
    %c6_151 = arith.constant 6 : index
    %c0_152 = arith.constant 0 : index
    %c0_153 = arith.constant 0 : index
    %179 = vector.load %arg5[%c6_151, %c0_152, %c0_153] : memref<9x3x16xbf16, #tpu.memory_space<vmem>>, vector<1x3x16xbf16>
    %180 = vector.shape_cast %179 : vector<1x3x16xbf16> to vector<3x16xbf16>
    %c0_154 = arith.constant 0 : index
    %c161_155 = arith.constant 161 : index
    %181 = vector.load %arg8[%c0_154, %c161_155] : memref<16x768xbf16, #tpu.memory_space<vmem>>, vector<16x544xbf16>
    %cst_156 = arith.constant dense<0.000000e+00> : vector<3x544xf32>
    %182 = tpu.matmul %180, %181, %cst_156 {dimension_numbers = #tpu.dot_dimension_numbers<[1], [0], [0], [1], [0, 0, 1, 1], [], []>} : vector<3x16xbf16>, vector<16x544xbf16>, vector<3x544xf32> -> vector<3x544xf32>
    %183 = arith.addf %178, %182 : vector<3x544xf32>
    %c7_157 = arith.constant 7 : index
    %c0_158 = arith.constant 0 : index
    %c0_159 = arith.constant 0 : index
    %184 = vector.load %arg5[%c7_157, %c0_158, %c0_159] : memref<9x3x16xbf16, #tpu.memory_space<vmem>>, vector<1x3x16xbf16>
    %185 = vector.shape_cast %184 : vector<1x3x16xbf16> to vector<3x16xbf16>
    %c0_160 = arith.constant 0 : index
    %c162_161 = arith.constant 162 : index
    %186 = vector.load %arg8[%c0_160, %c162_161] : memref<16x768xbf16, #tpu.memory_space<vmem>>, vector<16x544xbf16>
    %cst_162 = arith.constant dense<0.000000e+00> : vector<3x544xf32>
    %187 = tpu.matmul %185, %186, %cst_162 {dimension_numbers = #tpu.dot_dimension_numbers<[1], [0], [0], [1], [0, 0, 1, 1], [], []>} : vector<3x16xbf16>, vector<16x544xbf16>, vector<3x544xf32> -> vector<3x544xf32>
    %188 = arith.addf %183, %187 : vector<3x544xf32>
    %c8_163 = arith.constant 8 : index
    %c0_164 = arith.constant 0 : index
    %c0_165 = arith.constant 0 : index
    %189 = vector.load %arg5[%c8_163, %c0_164, %c0_165] : memref<9x3x16xbf16, #tpu.memory_space<vmem>>, vector<1x3x16xbf16>
    %190 = vector.shape_cast %189 : vector<1x3x16xbf16> to vector<3x16xbf16>
    %c0_166 = arith.constant 0 : index
    %c163_167 = arith.constant 163 : index
    %191 = vector.load %arg8[%c0_166, %c163_167] : memref<16x768xbf16, #tpu.memory_space<vmem>>, vector<16x544xbf16>
    %cst_168 = arith.constant dense<0.000000e+00> : vector<3x544xf32>
    %192 = tpu.matmul %190, %191, %cst_168 {dimension_numbers = #tpu.dot_dimension_numbers<[1], [0], [0], [1], [0, 0, 1, 1], [], []>} : vector<3x16xbf16>, vector<16x544xbf16>, vector<3x544xf32> -> vector<3x544xf32>
    %193 = arith.addf %188, %192 : vector<3x544xf32>
    %c0_169 = arith.constant 0 : index
    %c0_170 = arith.constant 0 : index
    %194 = vector.load %arg6[%c0_169, %c0_170] : memref<3x1xf32, #tpu.memory_space<vmem>>, vector<3x1xf32>
    %195 = vector.broadcast %194 : vector<3x1xf32> to vector<3x544xf32>
    %196 = arith.addf %193, %195 : vector<3x544xf32>
    %197 = math.tanh %196 : vector<3x544xf32>
    %c0_171 = arith.constant 0 : index
    %c0_172 = arith.constant 0 : index
    %c0_173 = arith.constant 0 : index
    %198 = vector.load %arg7[%c0_171, %c0_172, %c0_173] : memref<1x3x544xf32, #tpu.memory_space<vmem>>, vector<1x3x544xf32>
    %199 = vector.shape_cast %198 : vector<1x3x544xf32> to vector<3x544xf32>
    %200 = vector.shape_cast %197 : vector<3x544xf32> to vector<1x3x544xf32>
    tpu.vector_store %arg7[%c0_171, %c0_172, %c0_173], %200 {strides = array<i32>} : memref<1x3x544xf32, #tpu.memory_space<vmem>>, vector<1x3x544xf32>,
    return
  }
  func.func @transform_0(%arg0: i32) -> (i32, i32, i32) {
    %c0_i32 = arith.constant 0 : i32
    %c0_i32_0 = arith.constant 0 : i32
    %c0_i32_1 = arith.constant 0 : i32
    return %arg0, %c0_i32, %c0_i32_0 : i32, i32, i32
  }
  func.func @transform_1(%arg0: i32) -> (i32, i32) {
    %c0_i32 = arith.constant 0 : i32
    %c0_i32_0 = arith.constant 0 : i32
    %c0_i32_1 = arith.constant 0 : i32
    return %c0_i32, %c0_i32_0 : i32, i32
  }
  func.func @transform_2(%arg0: i32) -> (i32, i32, i32) {
    %c0_i32 = arith.constant 0 : i32
    %c0_i32_0 = arith.constant 0 : i32
    %c0_i32_1 = arith.constant 0 : i32
    %c0_i32_2 = arith.constant 0 : i32
    return %c0_i32, %c0_i32_0, %c0_i32_1 : i32, i32, i32
  }
  func.func @transform_3(%arg0: i32) -> (i32, i32, i32) {
    %c0_i32 = arith.constant 0 : i32
    %c0_i32_0 = arith.constant 0 : i32
    %c0_i32_1 = arith.constant 0 : i32
    %c0_i32_2 = arith.constant 0 : i32
    return %c0_i32, %c0_i32_0, %c0_i32_1 : i32, i32, i32
  }
  func.func @transform_4(%arg0: i32) -> (i32, i32, i32) {
    %c0_i32 = arith.constant 0 : i32
    %c0_i32_0 = arith.constant 0 : i32
    %c0_i32_1 = arith.constant 0 : i32
    %c0_i32_2 = arith.constant 0 : i32
    return %c0_i32, %c0_i32_0, %c0_i32_1 : i32, i32, i32
  }
  func.func @transform_5(%arg0: i32) -> (i32, i32) {
    %c0_i32 = arith.constant 0 : i32
    %c0_i32_0 = arith.constant 0 : i32
    %c0_i32_1 = arith.constant 0 : i32
    return %c0_i32, %c0_i32_0 : i32, i32
  }
  func.func @transform_6(%arg0: i32) -> (i32, i32, i32) {
    %c0_i32 = arith.constant 0 : i32
    %c0_i32_0 = arith.constant 0 : i32
    %c0_i32_1 = arith.constant 0 : i32
    return %arg0, %c0_i32, %c0_i32_0 : i32, i32, i32
  }
}

</mosaic_0001>

<llo_original>
// kernel: dl2s_forward.1
$region0: #{dl2s_forward.1}
  #allocation0 [shape = 'u32[]', space=smem, size = 0x4, offset = 0x4, fixed_abs, tag = 'smem constant byte address 0x4 - core index']
  #allocation1 [shape = 'u32[72,128]{1,0:T(1,128)}', space=vmem, size = 0x9000, scoped, tag = 'internal scratch']
  #allocation2 [shape = 'bf16[16,768]{1,0:T(8,128)(2,1)}', space=vmem, size = 0x6000, scoped, tag = 'scratch operand']
  %s0 = inlined_call_operand.vmem [shape: bf16[2,8,640], index: 0, kind: input, shape index: {}]
  %s1 = inlined_call_operand.vmem [shape: f32[1,544], index: 1, kind: input, shape index: {}]
  %s2 = inlined_call_operand.vmem [shape: bf16[9,16,8], index: 2, kind: input, shape index: {}]
  %s3 = inlined_call_operand.vmem [shape: bf16[9,16,16], index: 3, kind: input, shape index: {}]
  %s4 = inlined_call_operand.vmem [shape: bf16[9,3,16], index: 4, kind: input, shape index: {}]
  %s5 = inlined_call_operand.vmem [shape: f32[3,1], index: 5, kind: input, shape index: {}]
  %s6 = inlined_call_operand.vmem [shape: f32[2,3,544], index: 6, kind: output, shape index: {}]
  %s7 = sld [smem:[#allocation0]]
  $region57: #{dl2s_forward.1} parent=0
    _
  %s9 = ssub.s32 1, %s7
  %s10 = scalar_select 0, %s9, %s7
  loop: start=0, step=1, limit=4
  $region2: #{dl2s_forward.1} parent=0 // loop_pre_header
    _
  $region3: #{dl2s_forward.1} parent=0 // loop_header
    %s12 = sphi 0, %s16
    %p13 = scmp.ge.s32.totalorder %s12, 4
    %s22 = sphi 0, %s24
    %s25 = sphi 0, %s22
    %s26 = sphi 0, %s25
    %s42 = sphi 0, %s26
    %s46 = sphi 0, %s46
    %s48 = sphi 0, %s46
    %s49 = sphi 0, %s48
    %s63 = sphi 0, %s49
    %s67 = sphi 0, %s67
    %s69 = sphi 0, %s67
    %s70 = sphi 0, %s69
    %s84 = sphi 0, %s70
    %s88 = sphi 0, %s88
    %s90 = sphi 0, %s88
    %s91 = sphi 0, %s90
    %s105 = sphi 0, %s91
    %s109 = sphi 0, %s109
    %s111 = sphi 0, %s109
    %s112 = sphi 0, %s111
    %s126 = sphi 0, %s112
    %s130 = sphi 0, %s130
    %s132 = sphi 0, %s130
    %s133 = sphi 0, %s132
    %s147 = sphi 0, %s133
    %s153 = sphi 0, %s155
    %s156 = sphi 0, %s153
    %s157 = sphi 0, %s156
    %s173 = sphi 0, %s157
  $region4: #{dl2s_forward.1} parent=0 // loop_header_branch
    %15 = sbr.rel (%p13) target = $region8
  $region5: #{dl2s_forward.1} parent=0 // loop_body
    %s17 = ssub.s32 %s12, 1
    %s18 = ssub.s32 %s12, 2
    %s19 = sadd.s32 %s12, 1
    %s20 = ssub.s32 %s12, %s19
    %p21 = scmp.eq.s32.totalorder %s20, 0
    %s23 = sadd.s32 %s22, 1
    %s24 = scalar_select %p21, %s22, %s23
    %p27 = pneg %p21
    %p28 = scmp.eq.s32.totalorder %s12, 1
    %p29 = por %p27, %p28
    %p30 = scmp.ne.s32.totalorder %s22, %s25
    %p31 = scmp.eq.s32.totalorder %s12, 0
    %p32 = por %p30, %p31
    %p33 = scmp.ne.s32.totalorder %s22, %s25
    %p34 = scmp.eq.s32.totalorder %s17, 1
    %p35 = por %p33, %p34
    %p36 = scmp.ne.s32.totalorder %s25, %s26
    %p37 = scmp.eq.s32.totalorder %s17, 0
    %p38 = por %p36, %p37
    %p39 = scmp.ne.s32.totalorder %s25, %s26
    %p40 = scmp.eq.s32.totalorder %s18, 1
    %p41 = por %p39, %p40
    %p43 = scmp.ne.s32.totalorder %s26, %s42
    %p44 = scmp.eq.s32.totalorder %s18, 0
    %p45 = por %p43, %p44
    %s47 = sadd.s32 %s46, 1
    %p50 = scmp.eq.s32.totalorder %s12, 1
    %p51 = scmp.ne.s32.totalorder %s46, %s48
    %p52 = scmp.eq.s32.totalorder %s12, 0
    %p53 = por %p51, %p52
    %p54 = scmp.ne.s32.totalorder %s46, %s48
    %p55 = scmp.eq.s32.totalorder %s17, 1
    %p56 = por %p54, %p55
    %p57 = scmp.ne.s32.totalorder %s48, %s49
    %p58 = scmp.eq.s32.totalorder %s17, 0
    %p59 = por %p57, %p58
    %p60 = scmp.ne.s32.totalorder %s48, %s49
    %p61 = scmp.eq.s32.totalorder %s18, 1
    %p62 = por %p60, %p61
    %p64 = scmp.ne.s32.totalorder %s49, %s63
    %p65 = scmp.eq.s32.totalorder %s18, 0
    %p66 = por %p64, %p65
    %s68 = sadd.s32 %s67, 1
    %p71 = scmp.eq.s32.totalorder %s12, 1
    %p72 = scmp.ne.s32.totalorder %s67, %s69
    %p73 = scmp.eq.s32.totalorder %s12, 0
    %p74 = por %p72, %p73
    %p75 = scmp.ne.s32.totalorder %s67, %s69
    %p76 = scmp.eq.s32.totalorder %s17, 1
    %p77 = por %p75, %p76
    %p78 = scmp.ne.s32.totalorder %s69, %s70
    %p79 = scmp.eq.s32.totalorder %s17, 0
    %p80 = por %p78, %p79
    %p81 = scmp.ne.s32.totalorder %s69, %s70
    %p82 = scmp.eq.s32.totalorder %s18, 1
    %p83 = por %p81, %p82
    %p85 = scmp.ne.s32.totalorder %s70, %s84
    %p86 = scmp.eq.s32.totalorder %s18, 0
    %p87 = por %p85, %p86
    %s89 = sadd.s32 %s88, 1
    %p92 = scmp.eq.s32.totalorder %s12, 1
    %p93 = scmp.ne.s32.totalorder %s88, %s90
    %p94 = scmp.eq.s32.totalorder %s12, 0
    %p95 = por %p93, %p94
    %p96 = scmp.ne.s32.totalorder %s88, %s90
    %p97 = scmp.eq.s32.totalorder %s17, 1
    %p98 = por %p96, %p97
    %p99 = scmp.ne.s32.totalorder %s90, %s91
    %p100 = scmp.eq.s32.totalorder %s17, 0
    %p101 = por %p99, %p100
    %p102 = scmp.ne.s32.totalorder %s90, %s91
    %p103 = scmp.eq.s32.totalorder %s18, 1
    %p104 = por %p102, %p103
    %p106 = scmp.ne.s32.totalorder %s91, %s105
    %p107 = scmp.eq.s32.totalorder %s18, 0
    %p108 = por %p106, %p107
    %s110 = sadd.s32 %s109, 1
    %p113 = scmp.eq.s32.totalorder %s12, 1
    %p114 = scmp.ne.s32.totalorder %s109, %s111
    %p115 = scmp.eq.s32.totalorder %s12, 0
    %p116 = por %p114, %p115
    %p117 = scmp.ne.s32.totalorder %s109, %s111
    %p118 = scmp.eq.s32.totalorder %s17, 1
    %p119 = por %p117, %p118
    %p120 = scmp.ne.s32.totalorder %s111, %s112
    %p121 = scmp.eq.s32.totalorder %s17, 0
    %p122 = por %p120, %p121
    %p123 = scmp.ne.s32.totalorder %s111, %s112
    %p124 = scmp.eq.s32.totalorder %s18, 1
    %p125 = por %p123, %p124
    %p127 = scmp.ne.s32.totalorder %s112, %s126
    %p128 = scmp.eq.s32.totalorder %s18, 0
    %p129 = por %p127, %p128
    %s131 = sadd.s32 %s130, 1
    %p134 = scmp.eq.s32.totalorder %s12, 1
    %p135 = scmp.ne.s32.totalorder %s130, %s132
    %p136 = scmp.eq.s32.totalorder %s12, 0
    %p137 = por %p135, %p136
    %p138 = scmp.ne.s32.totalorder %s130, %s132
    %p139 = scmp.eq.s32.totalorder %s17, 1
    %p140 = por %p138, %p139
    %p141 = scmp.ne.s32.totalorder %s132, %s133
    %p142 = scmp.eq.s32.totalorder %s17, 0
    %p143 = por %p141, %p142
    %p144 = scmp.ne.s32.totalorder %s132, %s133
    %p145 = scmp.eq.s32.totalorder %s18, 1
    %p146 = por %p144, %p145
    %p148 = scmp.ne.s32.totalorder %s133, %s147
    %p149 = scmp.eq.s32.totalorder %s18, 0
    %p150 = por %p148, %p149
    %s151 = ssub.s32 %s12, %s19
    %p152 = scmp.eq.s32.totalorder %s151, 0
    %s154 = sadd.s32 %s153, 1
    %s155 = scalar_select %p152, %s153, %s154
    %p158 = pneg %p152
    %p159 = scmp.eq.s32.totalorder %s12, 1
    %p160 = por %p158, %p159
    %p161 = scmp.ne.s32.totalorder %s153, %s156
    %p162 = scmp.eq.s32.totalorder %s12, 0
    %p163 = por %p161, %p162
    %p164 = scmp.ne.s32.totalorder %s153, %s156
    %p165 = scmp.eq.s32.totalorder %s17, 1
    %p166 = por %p164, %p165
    %p167 = scmp.ne.s32.totalorder %s156, %s157
    %p168 = scmp.eq.s32.totalorder %s17, 0
    %p169 = por %p167, %p168
    %p170 = scmp.ne.s32.totalorder %s156, %s157
    %p171 = scmp.eq.s32.totalorder %s18, 1
    %p172 = por %p170, %p171
    %p174 = scmp.ne.s32.totalorder %s157, %s173
    %p175 = scmp.eq.s32.totalorder %s18, 0
    %p176 = por %p174, %p175
    %p177 = scmp.le.s32.totalorder 1, %s12
    %p178 = scmp.lt.s32.totalorder %s12, 3
    %p179 = pnand %p177, %p178
    %p180 = pneg %p179
    // Predicated region
    $region9: #{dl2s_forward.1} parent=5 // pred_check
      _
    $region10: #{dl2s_forward.1} parent=5 // pred_check_branch
      %182 = sbr.rel (%p179) target = $region12
    $region11: #{dl2s_forward.1} parent=5 // pred_region
      %s183 = ssub.s32 %s12, 1
      // Predicated region
      $region13: #{dl2s_forward.1} parent=11 // pred_check
        %p184 = pneg %p59
      $region14: #{dl2s_forward.1} parent=11 // pred_check_branch
        %186 = sbr.rel (%p184) target = $region16
      $region15: #{dl2s_forward.1} parent=11 // pred_region
        _
      $region16: #{dl2s_forward.1} parent=11 // pred_fallthru
        _
      // Predicated region
      $region17: #{dl2s_forward.1} parent=11 // pred_check
        %p187 = pneg %p80
      $region18: #{dl2s_forward.1} parent=11 // pred_check_branch
        %189 = sbr.rel (%p187) target = $region20
      $region19: #{dl2s_forward.1} parent=11 // pred_region
        _
      $region20: #{dl2s_forward.1} parent=11 // pred_fallthru
        _
      // Predicated region
      $region21: #{dl2s_forward.1} parent=11 // pred_check
        %p190 = pneg %p101
      $region22: #{dl2s_forward.1} parent=11 // pred_check_branch
        %192 = sbr.rel (%p190) target = $region24
      $region23: #{dl2s_forward.1} parent=11 // pred_region
        _
      $region24: #{dl2s_forward.1} parent=11 // pred_fallthru
        _
      // Predicated region
      $region25: #{dl2s_forward.1} parent=11 // pred_check
        %p193 = pneg %p122
      $region26: #{dl2s_forward.1} parent=11 // pred_check_branch
        %195 = sbr.rel (%p193) target = $region28
      $region27: #{dl2s_forward.1} parent=11 // pred_region
        _
      $region28: #{dl2s_forward.1} parent=11 // pred_fallthru
        _
      // Predicated region
      $region29: #{dl2s_forward.1} parent=11 // pred_check
        %p196 = pneg %p143
      $region30: #{dl2s_forward.1} parent=11 // pred_check_branch
        %198 = sbr.rel (%p196) target = $region32
      $region31: #{dl2s_forward.1} parent=11 // pred_region
        _
      $region32: #{dl2s_forward.1} parent=11 // pred_fallthru
        _
    $region12: #{dl2s_forward.1} parent=5 // pred_fallthru
      _
    %p199 = scmp.lt.s32.totalorder %s12, 2
    // Predicated region
    $region33: #{dl2s_forward.1} parent=5 // pred_check
      %p200 = pneg %p199
    $region34: #{dl2s_forward.1} parent=5 // pred_check_branch
      %202 = sbr.rel (%p200) target = $region36
    $region35: #{dl2s_forward.1} parent=5 // pred_region
      // Predicated region
      $region37: #{dl2s_forward.1} parent=35 // pred_check
        %p203 = pneg %p32
      $region38: #{dl2s_forward.1} parent=35 // pred_check_branch
        %205 = sbr.rel (%p203) target = $region40
      $region39: #{dl2s_forward.1} parent=35 // pred_region
        %p206 = scmp.lt.s32.totalorder %s12, 1
        %s207 = scalar_select %p206, %s12, 1
        %s208 = smul.addr %s207, 5
        %s209 = smul.addr %s208, 4
        %s210 = scalar_lea.vmem %s0, %s209
      $region40: #{dl2s_forward.1} parent=35 // pred_fallthru
        _
    $region36: #{dl2s_forward.1} parent=5 // pred_fallthru
      _
    %p211 = scmp.le.s32.totalorder 1, %s12
    %p212 = scmp.lt.s32.totalorder %s12, 3
    %p213 = pnand %p211, %p212
    %p214 = pneg %p213
    // Predicated region
    $region41: #{dl2s_forward.1} parent=5 // pred_check
      _
    $region42: #{dl2s_forward.1} parent=5 // pred_check_branch
      %216 = sbr.rel (%p213) target = $region44
    $region43: #{dl2s_forward.1} parent=5 // pred_region
      %s217 = ssub.s32 %s12, 1
      %p218 = scmp.lt.s32.totalorder %s17, 1
      %s219 = scalar_select %p218, %s17, 1
      %s220 = smul.addr %s219, 5
      %s221 = smul.addr %s220, 4
      %s222 = scalar_lea.vmem %s0, %s221
      %p223 = pneg %p38
      %p224 = pneg %p35
      %p225 = pneg %p59
      %p226 = pneg %p56
      %p227 = pneg %p80
      %p228 = pneg %p77
      %p229 = pneg %p101
      %p230 = pneg %p98
      %p231 = pneg %p122
      %p232 = pneg %p119
      %p233 = pneg %p143
      %p234 = pneg %p140
      %p235 = pneg %p169
      %p236 = pneg %p166
      %p237 = scmp.lt.s32.totalorder %s17, 1
      %s238 = scalar_select %p237, %s17, 1
      %s239 = smul.addr %s238, 5
      %s240 = smul.addr %s239, 4
      %s241 = scalar_lea.vmem %s6, %s240
      %p242 = scmp.lt.s32.totalorder %s17, 1
      %s243 = scalar_select %p242, %s17, 1
      %s244 = smul.addr %s243, 5
      %s245 = smul.addr %s244, 4
      %s246 = scalar_lea.vmem %s0, %s245
      %p247 = scmp.lt.s32.totalorder %s17, 1
      %s248 = scalar_select %p247, %s17, 1
      %s249 = smul.addr %s248, 5
      %s250 = smul.addr %s249, 4
      %s251 = scalar_lea.vmem %s6, %s250
      %v253 = vld [vmem:[%s1] sm:$0x1f]
      %254 = vst [vmem:[#allocation2] sm:$0xf] 0
      %255 = vst [vmem:[#allocation2 + $0x18] sm:$0xf] 0
      %vm256 = vcmask 1043712
      %257 = vst.msk [vmem:[#allocation2 + $0x14] sm:$0xf] %vm256, 0
      %258 = vst.msk [vmem:[#allocation2 + $0x2c] sm:$0xf] %vm256, 0
      %v259 = vld [vmem:[%s2] sm:$0xf]
      %v260 = vld [vmem:[%s2 + $0x4] sm:$0xf]
      %v261 = vld [vmem:[%s246] sm:$0xff]
      %v262 = vld [vmem:[%s246 + $0x8] sm:$0xff]
      %v263 = vld [vmem:[%s246 + $0x10] sm:$0xf]
      %s264 = scalar_lea.vmem %s2, 8
      %v265 = vld [vmem:[%s264] sm:$0xf]
      %v266 = vld [vmem:[%s264 + $0x4] sm:$0xf]
      %v269 = vunpack.c.l.b16 %v265
      %v270 = vunpack.c.l.b16 %v266
      %v271 = vpack.c.b16 %v270, %v269
      %v275 = vunpack.c.l.b16 %v261
      %v276 = vunpack.c.h.b16 %v261
      %v277 = vunpack.c.l.b16 %v262
      %v278 = vunpack.c.h.b16 %v262
      %v279 = vunpack.c.l.b16 %v263
      %v280 = vpack.c.b16 %v275, %v275
      %v281 = vpack.c.b16 %v276, %v276
      %v282 = vpack.c.b16 %v277, %v277
      %v283 = vpack.c.b16 %v278, %v278
      %v284 = vpack.c.b16 %v279, %v279
      %285 = vrot.lane.b32.xlu0 %v280, 127
      %v286 = vpop.permute.xlu0 %285
      %287 = vrot.lane.b32.xlu0 %v281, 127
      %v288 = vpop.permute.xlu0 %287
      %289 = vrot.lane.b32.xlu0 %v282, 127
      %v290 = vpop.permute.xlu0 %289
      %291 = vrot.lane.b32.xlu0 %v283, 127
      %v292 = vpop.permute.xlu0 %291
      %293 = vrot.lane.b32.xlu0 %v284, 127
      %v294 = vpop.permute.xlu0 %293
      %vm295 = vcmask 1039360
      %v296 = vsel %vm295, %v286, %v288
      %v297 = vsel %vm295, %v288, %v290
      %v298 = vsel %vm295, %v290, %v292
      %v299 = vsel %vm295, %v292, %v294
      %vm300 = vcmask 64512
      %v302 = vsel %vm300, %v271, 0
      %vm304 = vcmask 1043456
      %v306 = vsel %vm304, %v296, 0
      %v309 = vsel %vm304, %v297, 0
      %v312 = vsel %vm304, %v298, 0
      %v315 = vsel %vm304, %v299, 0
      %v318 = vsel %vm304, %v294, 0
      %320 = vmatpush.bf16.msra.mxu0 0
      %321 = vmatpush.bf16.msra.mxu0 0
      %322 = vmatpush.bf16.msra.mxu0 0
      %323 = vmatpush.bf16.msra.mxu0 0
      %324 = vmatpush.bf16.msra.mxu0 0
      %325 = vmatpush.bf16.msra.mxu0 0
      %326 = vmatpush.bf16.msra.mxu0 0
      %327 = vmatpush.bf16.msra.mxu0 %v306
      %328 = vmatmul.bf16.gmra.mxu0 %v302
      %v329 = vpop.f32.mrf.mxu0
      %v330 = vadd.f32 0.0, %v329
      %v331 = vpop.f32.mrf.mxu0
      %v332 = vadd.f32 0.0, %v331
      %333 = vdwg.mxu0
      %334 = vmatpush.bf16.msra.mxu0 0
      %335 = vmatpush.bf16.msra.mxu0 0
      %336 = vmatpush.bf16.msra.mxu0 0
      %337 = vmatpush.bf16.msra.mxu0 0
      %338 = vmatpush.bf16.msra.mxu0 0
      %339 = vmatpush.bf16.msra.mxu0 0
      %340 = vmatpush.bf16.msra.mxu0 0
      %341 = vmatpush.bf16.msra.mxu0 %v309
      %342 = vmatmul.bf16.gmra.mxu0 %v302
      %v343 = vpop.f32.mrf.mxu0
      %v344 = vadd.f32 0.0, %v343
      %v345 = vpop.f32.mrf.mxu0
      %v346 = vadd.f32 0.0, %v345
      %347 = vdwg.mxu0
      %348 = vmatpush.bf16.msra.mxu0 0
      %349 = vmatpush.bf16.msra.mxu0 0
      %350 = vmatpush.bf16.msra.mxu0 0
      %351 = vmatpush.bf16.msra.mxu0 0
      %352 = vmatpush.bf16.msra.mxu0 0
      %353 = vmatpush.bf16.msra.mxu0 0
      %354 = vmatpush.bf16.msra.mxu0 0
      %355 = vmatpush.bf16.msra.mxu0 %v312
      %356 = vmatmul.bf16.gmra.mxu0 %v302
      %v357 = vpop.f32.mrf.mxu0
      %v358 = vadd.f32 0.0, %v357
      %v359 = vpop.f32.mrf.mxu0
      %v360 = vadd.f32 0.0, %v359
      %361 = vdwg.mxu0
      %362 = vmatpush.bf16.msra.mxu0 0
      %363 = vmatpush.bf16.msra.mxu0 0
      %364 = vmatpush.bf16.msra.mxu0 0
      %365 = vmatpush.bf16.msra.mxu0 0
      %366 = vmatpush.bf16.msra.mxu0 0
      %367 = vmatpush.bf16.msra.mxu0 0
      %368 = vmatpush.bf16.msra.mxu0 0
      %369 = vmatpush.bf16.msra.mxu0 %v315
      %370 = vmatmul.bf16.gmra.mxu0 %v302
      %v371 = vpop.f32.mrf.mxu0
      %v372 = vadd.f32 0.0, %v371
      %v373 = vpop.f32.mrf.mxu0
      %v374 = vadd.f32 0.0, %v373
      %375 = vdwg.mxu0
      %376 = vmatpush.bf16.msra.mxu0 0
      %377 = vmatpush.bf16.msra.mxu0 0
      %378 = vmatpush.bf16.msra.mxu0 0
      %379 = vmatpush.bf16.msra.mxu0 0
      %380 = vmatpush.bf16.msra.mxu0 0
      %381 = vmatpush.bf16.msra.mxu0 0
      %382 = vmatpush.bf16.msra.mxu0 0
      %383 = vmatpush.bf16.msra.mxu0 %v318
      %384 = vmatmul.bf16.gmra.mxu0 %v302
      %v385 = vpop.f32.mrf.mxu0
      %v386 = vadd.f32 0.0, %v385
      %v387 = vpop.f32.mrf.mxu0
      %v388 = vadd.f32 0.0, %v387
      %389 = vdwg.mxu0
      %v392 = vunpack.c.l.b16 %v259
      %v393 = vunpack.c.l.b16 %v260
      %v394 = vpack.c.b16 %v393, %v392
      %v396 = vsel %vm300, %v394, 0
      %v399 = vsel %vm304, %v280, 0
      %v402 = vsel %vm304, %v281, 0
      %v405 = vsel %vm304, %v282, 0
      %v408 = vsel %vm304, %v283, 0
      %v411 = vsel %vm304, %v284, 0
      %413 = vmatpush.bf16.msra.mxu0 0
      %414 = vmatpush.bf16.msra.mxu0 0
      %415 = vmatpush.bf16.msra.mxu0 0
      %416 = vmatpush.bf16.msra.mxu0 0
      %417 = vmatpush.bf16.msra.mxu0 0
      %418 = vmatpush.bf16.msra.mxu0 0
      %419 = vmatpush.bf16.msra.mxu0 0
      %420 = vmatpush.bf16.msra.mxu0 %v399
      %421 = vmatmul.bf16.gmra.mxu0 %v396
      %v422 = vpop.f32.mrf.mxu0
      %v423 = vadd.f32 %v330, %v422
      %v424 = vpop.f32.mrf.mxu0
      %v425 = vadd.f32 %v332, %v424
      %426 = vdwg.mxu0
      %427 = vmatpush.bf16.msra.mxu0 0
      %428 = vmatpush.bf16.msra.mxu0 0
      %429 = vmatpush.bf16.msra.mxu0 0
      %430 = vmatpush.bf16.msra.mxu0 0
      %431 = vmatpush.bf16.msra.mxu0 0
      %432 = vmatpush.bf16.msra.mxu0 0
      %433 = vmatpush.bf16.msra.mxu0 0
      %434 = vmatpush.bf16.msra.mxu0 %v402
      %435 = vmatmul.bf16.gmra.mxu0 %v396
      %v436 = vpop.f32.mrf.mxu0
      %v437 = vadd.f32 %v344, %v436
      %v438 = vpop.f32.mrf.mxu0
      %v439 = vadd.f32 %v346, %v438
      %440 = vdwg.mxu0
      %441 = vmatpush.bf16.msra.mxu0 0
      %442 = vmatpush.bf16.msra.mxu0 0
      %443 = vmatpush.bf16.msra.mxu0 0
      %444 = vmatpush.bf16.msra.mxu0 0
      %445 = vmatpush.bf16.msra.mxu0 0
      %446 = vmatpush.bf16.msra.mxu0 0
      %447 = vmatpush.bf16.msra.mxu0 0
      %448 = vmatpush.bf16.msra.mxu0 %v405
      %449 = vmatmul.bf16.gmra.mxu0 %v396
      %v450 = vpop.f32.mrf.mxu0
      %v451 = vadd.f32 %v358, %v450
      %v452 = vpop.f32.mrf.mxu0
      %v453 = vadd.f32 %v360, %v452
      %454 = vdwg.mxu0
      %455 = vmatpush.bf16.msra.mxu0 0
      %456 = vmatpush.bf16.msra.mxu0 0
      %457 = vmatpush.bf16.msra.mxu0 0
      %458 = vmatpush.bf16.msra.mxu0 0
      %459 = vmatpush.bf16.msra.mxu0 0
      %460 = vmatpush.bf16.msra.mxu0 0
      %461 = vmatpush.bf16.msra.mxu0 0
      %462 = vmatpush.bf16.msra.mxu0 %v408
      %463 = vmatmul.bf16.gmra.mxu0 %v396
      %v464 = vpop.f32.mrf.mxu0
      %v465 = vadd.f32 %v372, %v464
      %v466 = vpop.f32.mrf.mxu0
      %v467 = vadd.f32 %v374, %v466
      %468 = vdwg.mxu0
      %469 = vmatpush.bf16.msra.mxu0 0
      %470 = vmatpush.bf16.msra.mxu0 0
      %471 = vmatpush.bf16.msra.mxu0 0
      %472 = vmatpush.bf16.msra.mxu0 0
      %473 = vmatpush.bf16.msra.mxu0 0
      %474 = vmatpush.bf16.msra.mxu0 0
      %475 = vmatpush.bf16.msra.mxu0 0
      %476 = vmatpush.bf16.msra.mxu0 %v411
      %477 = vmatmul.bf16.gmra.mxu0 %v396
      %v478 = vpop.f32.mrf.mxu0
      %v479 = vadd.f32 %v386, %v478
      %v480 = vpop.f32.mrf.mxu0
      %v481 = vadd.f32 %v388, %v480
      %482 = vdwg.mxu0
      %s483 = scalar_lea.vmem %s2, 16
      %v484 = vld [vmem:[%s483] sm:$0xf]
      %v485 = vld [vmem:[%s483 + $0x4] sm:$0xf]
      %v488 = vunpack.c.l.b16 %v484
      %v489 = vunpack.c.l.b16 %v485
      %v490 = vpack.c.b16 %v489, %v488
      %491 = vrot.lane.b32.xlu0 %v280, 126
      %v492 = vpop.permute.xlu0 %491
      %493 = vrot.lane.b32.xlu0 %v281, 126
      %v494 = vpop.permute.xlu0 %493
      %495 = vrot.lane.b32.xlu0 %v282, 126
      %v496 = vpop.permute.xlu0 %495
      %497 = vrot.lane.b32.xlu0 %v283, 126
      %v498 = vpop.permute.xlu0 %497
      %499 = vrot.lane.b32.xlu0 %v284, 126
      %v500 = vpop.permute.xlu0 %499
      %vm501 = vcmask 1031168
      %v502 = vsel %vm501, %v492, %v494
      %v503 = vsel %vm501, %v494, %v496
      %v504 = vsel %vm501, %v496, %v498
      %v505 = vsel %vm501, %v498, %v500
      %v507 = vsel %vm300, %v490, 0
      %v510 = vsel %vm304, %v502, 0
      %v513 = vsel %vm304, %v503, 0
      %v516 = vsel %vm304, %v504, 0
      %v519 = vsel %vm304, %v505, 0
      %v522 = vsel %vm304, %v500, 0
      %524 = vmatpush.bf16.msra.mxu0 0
      %525 = vmatpush.bf16.msra.mxu0 0
      %526 = vmatpush.bf16.msra.mxu0 0
      %527 = vmatpush.bf16.msra.mxu0 0
      %528 = vmatpush.bf16.msra.mxu0 0
      %529 = vmatpush.bf16.msra.mxu0 0
      %530 = vmatpush.bf16.msra.mxu0 0
      %531 = vmatpush.bf16.msra.mxu0 %v510
      %532 = vmatmul.bf16.gmra.mxu0 %v507
      %v533 = vpop.f32.mrf.mxu0
      %v534 = vadd.f32 0.0, %v533
      %v535 = vpop.f32.mrf.mxu0
      %v536 = vadd.f32 0.0, %v535
      %537 = vdwg.mxu0
      %538 = vmatpush.bf16.msra.mxu0 0
      %539 = vmatpush.bf16.msra.mxu0 0
      %540 = vmatpush.bf16.msra.mxu0 0
      %541 = vmatpush.bf16.msra.mxu0 0
      %542 = vmatpush.bf16.msra.mxu0 0
      %543 = vmatpush.bf16.msra.mxu0 0
      %544 = vmatpush.bf16.msra.mxu0 0
      %545 = vmatpush.bf16.msra.mxu0 %v513
      %546 = vmatmul.bf16.gmra.mxu0 %v507
      %v547 = vpop.f32.mrf.mxu0
      %v548 = vadd.f32 0.0, %v547
      %v549 = vpop.f32.mrf.mxu0
      %v550 = vadd.f32 0.0, %v549
      %551 = vdwg.mxu0
      %552 = vmatpush.bf16.msra.mxu0 0
      %553 = vmatpush.bf16.msra.mxu0 0
      %554 = vmatpush.bf16.msra.mxu0 0
      %555 = vmatpush.bf16.msra.mxu0 0
      %556 = vmatpush.bf16.msra.mxu0 0
      %557 = vmatpush.bf16.msra.mxu0 0
      %558 = vmatpush.bf16.msra.mxu0 0
      %559 = vmatpush.bf16.msra.mxu0 %v516
      %560 = vmatmul.bf16.gmra.mxu0 %v507
      %v561 = vpop.f32.mrf.mxu0
      %v562 = vadd.f32 0.0, %v561
      %v563 = vpop.f32.mrf.mxu0
      %v564 = vadd.f32 0.0, %v563
      %565 = vdwg.mxu0
      %566 = vmatpush.bf16.msra.mxu0 0
      %567 = vmatpush.bf16.msra.mxu0 0
      %568 = vmatpush.bf16.msra.mxu0 0
      %569 = vmatpush.bf16.msra.mxu0 0
      %570 = vmatpush.bf16.msra.mxu0 0
      %571 = vmatpush.bf16.msra.mxu0 0
      %572 = vmatpush.bf16.msra.mxu0 0
      %573 = vmatpush.bf16.msra.mxu0 %v519
      %574 = vmatmul.bf16.gmra.mxu0 %v507
      %v575 = vpop.f32.mrf.mxu0
      %v576 = vadd.f32 0.0, %v575
      %v577 = vpop.f32.mrf.mxu0
      %v578 = vadd.f32 0.0, %v577
      %579 = vdwg.mxu0
      %580 = vmatpush.bf16.msra.mxu0 0
      %581 = vmatpush.bf16.msra.mxu0 0
      %582 = vmatpush.bf16.msra.mxu0 0
      %583 = vmatpush.bf16.msra.mxu0 0
      %584 = vmatpush.bf16.msra.mxu0 0
      %585 = vmatpush.bf16.msra.mxu0 0
      %586 = vmatpush.bf16.msra.mxu0 0
      %587 = vmatpush.bf16.msra.mxu0 %v522
      %588 = vmatmul.bf16.gmra.mxu0 %v507
      %v589 = vpop.f32.mrf.mxu0
      %v590 = vadd.f32 0.0, %v589
      %v591 = vpop.f32.mrf.mxu0
      %v592 = vadd.f32 0.0, %v591
      %593 = vdwg.mxu0
      %v594 = vadd.f32 %v423, %v534
      %v595 = vadd.f32 %v437, %v548
      %v596 = vadd.f32 %v451, %v562
      %v597 = vadd.f32 %v465, %v576
      %v598 = vadd.f32 %v479, %v590
      %v599 = vadd.f32 %v425, %v536
      %v600 = vadd.f32 %v439, %v550
      %v601 = vadd.f32 %v453, %v564
      %v602 = vadd.f32 %v467, %v578
      %v603 = vadd.f32 %v481, %v592
      %s604 = scalar_lea.vmem %s2, 24
      %v605 = vld [vmem:[%s604] sm:$0xf]
      %v606 = vld [vmem:[%s604 + $0x4] sm:$0xf]
      %v609 = vunpack.c.l.b16 %v605
      %v610 = vunpack.c.l.b16 %v606
      %v611 = vpack.c.b16 %v610, %v609
      %612 = vrot.lane.b32.xlu0 %v280, 94
      %v613 = vpop.permute.xlu0 %612
      %614 = vrot.lane.b32.xlu0 %v281, 94
      %v615 = vpop.permute.xlu0 %614
      %616 = vrot.lane.b32.xlu0 %v282, 94
      %v617 = vpop.permute.xlu0 %616
      %618 = vrot.lane.b32.xlu0 %v283, 94
      %v619 = vpop.permute.xlu0 %618
      %620 = vrot.lane.b32.xlu0 %v284, 94
      %v621 = vpop.permute.xlu0 %620
      %vm622 = vcmask 769024
      %v623 = vsel %vm622, %v613, %v615
      %v624 = vsel %vm622, %v615, %v617
      %v625 = vsel %vm622, %v617, %v619
      %v626 = vsel %vm622, %v619, %v621
      %v628 = vsel %vm300, %v611, 0
      %v631 = vsel %vm304, %v623, 0
      %v634 = vsel %vm304, %v624, 0
      %v637 = vsel %vm304, %v625, 0
      %v640 = vsel %vm304, %v626, 0
      %v643 = vsel %vm304, %v621, 0
      %645 = vmatpush.bf16.msra.mxu0 0
      %646 = vmatpush.bf16.msra.mxu0 0
      %647 = vmatpush.bf16.msra.mxu0 0
      %648 = vmatpush.bf16.msra.mxu0 0
      %649 = vmatpush.bf16.msra.mxu0 0
      %650 = vmatpush.bf16.msra.mxu0 0
      %651 = vmatpush.bf16.msra.mxu0 0
      %652 = vmatpush.bf16.msra.mxu0 %v631
      %653 = vmatmul.bf16.gmra.mxu0 %v628
      %v654 = vpop.f32.mrf.mxu0
      %v655 = vadd.f32 0.0, %v654
      %v656 = vpop.f32.mrf.mxu0
      %v657 = vadd.f32 0.0, %v656
      %658 = vdwg.mxu0
      %659 = vmatpush.bf16.msra.mxu0 0
      %660 = vmatpush.bf16.msra.mxu0 0
      %661 = vmatpush.bf16.msra.mxu0 0
      %662 = vmatpush.bf16.msra.mxu0 0
      %663 = vmatpush.bf16.msra.mxu0 0
      %664 = vmatpush.bf16.msra.mxu0 0
      %665 = vmatpush.bf16.msra.mxu0 0
      %666 = vmatpush.bf16.msra.mxu0 %v634
      %667 = vmatmul.bf16.gmra.mxu0 %v628
      %v668 = vpop.f32.mrf.mxu0
      %v669 = vadd.f32 0.0, %v668
      %v670 = vpop.f32.mrf.mxu0
      %v671 = vadd.f32 0.0, %v670
      %672 = vdwg.mxu0
      %673 = vmatpush.bf16.msra.mxu0 0
      %674 = vmatpush.bf16.msra.mxu0 0
      %675 = vmatpush.bf16.msra.mxu0 0
      %676 = vmatpush.bf16.msra.mxu0 0
      %677 = vmatpush.bf16.msra.mxu0 0
      %678 = vmatpush.bf16.msra.mxu0 0
      %679 = vmatpush.bf16.msra.mxu0 0
      %680 = vmatpush.bf16.msra.mxu0 %v637
      %681 = vmatmul.bf16.gmra.mxu0 %v628
      %v682 = vpop.f32.mrf.mxu0
      %v683 = vadd.f32 0.0, %v682
      %v684 = vpop.f32.mrf.mxu0
      %v685 = vadd.f32 0.0, %v684
      %686 = vdwg.mxu0
      %687 = vmatpush.bf16.msra.mxu0 0
      %688 = vmatpush.bf16.msra.mxu0 0
      %689 = vmatpush.bf16.msra.mxu0 0
      %690 = vmatpush.bf16.msra.mxu0 0
      %691 = vmatpush.bf16.msra.mxu0 0
      %692 = vmatpush.bf16.msra.mxu0 0
      %693 = vmatpush.bf16.msra.mxu0 0
      %694 = vmatpush.bf16.msra.mxu0 %v640
      %695 = vmatmul.bf16.gmra.mxu0 %v628
      %v696 = vpop.f32.mrf.mxu0
      %v697 = vadd.f32 0.0, %v696
      %v698 = vpop.f32.mrf.mxu0
      %v699 = vadd.f32 0.0, %v698
      %700 = vdwg.mxu0
      %701 = vmatpush.bf16.msra.mxu0 0
      %702 = vmatpush.bf16.msra.mxu0 0
      %703 = vmatpush.bf16.msra.mxu0 0
      %704 = vmatpush.bf16.msra.mxu0 0
      %705 = vmatpush.bf16.msra.mxu0 0
      %706 = vmatpush.bf16.msra.mxu0 0
      %707 = vmatpush.bf16.msra.mxu0 0
      %708 = vmatpush.bf16.msra.mxu0 %v643
      %709 = vmatmul.bf16.gmra.mxu0 %v628
      %v710 = vpop.f32.mrf.mxu0
      %v711 = vadd.f32 0.0, %v710
      %v712 = vpop.f32.mrf.mxu0
      %v713 = vadd.f32 0.0, %v712
      %714 = vdwg.mxu0
      %v715 = vadd.f32 %v594, %v655
      %v716 = vadd.f32 %v595, %v669
      %v717 = vadd.f32 %v596, %v683
      %v718 = vadd.f32 %v597, %v697
      %v719 = vadd.f32 %v598, %v711
      %v720 = vadd.f32 %v599, %v657
      %v721 = vadd.f32 %v600, %v671
      %v722 = vadd.f32 %v601, %v685
      %v723 = vadd.f32 %v602, %v699
      %v724 = vadd.f32 %v603, %v713
      %s725 = scalar_lea.vmem %s2, 32
      %v726 = vld [vmem:[%s725] sm:$0xf]
      %v727 = vld [vmem:[%s725 + $0x4] sm:$0xf]
      %v730 = vunpack.c.l.b16 %v726
      %v731 = vunpack.c.l.b16 %v727
      %v732 = vpack.c.b16 %v731, %v730
      %733 = vrot.lane.b32.xlu0 %v280, 93
      %v734 = vpop.permute.xlu0 %733
      %735 = vrot.lane.b32.xlu0 %v281, 93
      %v736 = vpop.permute.xlu0 %735
      %737 = vrot.lane.b32.xlu0 %v282, 93
      %v738 = vpop.permute.xlu0 %737
      %739 = vrot.lane.b32.xlu0 %v283, 93
      %v740 = vpop.permute.xlu0 %739
      %741 = vrot.lane.b32.xlu0 %v284, 93
      %v742 = vpop.permute.xlu0 %741
      %vm743 = vcmask 760832
      %v744 = vsel %vm743, %v734, %v736
      %v745 = vsel %vm743, %v736, %v738
      %v746 = vsel %vm743, %v738, %v740
      %v747 = vsel %vm743, %v740, %v742
      %v749 = vsel %vm300, %v732, 0
      %v752 = vsel %vm304, %v744, 0
      %v755 = vsel %vm304, %v745, 0
      %v758 = vsel %vm304, %v746, 0
      %v761 = vsel %vm304, %v747, 0
      %v764 = vsel %vm304, %v742, 0
      %766 = vmatpush.bf16.msra.mxu0 0
      %767 = vmatpush.bf16.msra.mxu0 0
      %768 = vmatpush.bf16.msra.mxu0 0
      %769 = vmatpush.bf16.msra.mxu0 0
      %770 = vmatpush.bf16.msra.mxu0 0
      %771 = vmatpush.bf16.msra.mxu0 0
      %772 = vmatpush.bf16.msra.mxu0 0
      %773 = vmatpush.bf16.msra.mxu0 %v752
      %774 = vmatmul.bf16.gmra.mxu0 %v749
      %v775 = vpop.f32.mrf.mxu0
      %v776 = vadd.f32 0.0, %v775
      %v777 = vpop.f32.mrf.mxu0
      %v778 = vadd.f32 0.0, %v777
      %779 = vdwg.mxu0
      %780 = vmatpush.bf16.msra.mxu0 0
      %781 = vmatpush.bf16.msra.mxu0 0
      %782 = vmatpush.bf16.msra.mxu0 0
      %783 = vmatpush.bf16.msra.mxu0 0
      %784 = vmatpush.bf16.msra.mxu0 0
      %785 = vmatpush.bf16.msra.mxu0 0
      %786 = vmatpush.bf16.msra.mxu0 0
      %787 = vmatpush.bf16.msra.mxu0 %v755
      %788 = vmatmul.bf16.gmra.mxu0 %v749
      %v789 = vpop.f32.mrf.mxu0
      %v790 = vadd.f32 0.0, %v789
      %v791 = vpop.f32.mrf.mxu0
      %v792 = vadd.f32 0.0, %v791
      %793 = vdwg.mxu0
      %794 = vmatpush.bf16.msra.mxu0 0
      %795 = vmatpush.bf16.msra.mxu0 0
      %796 = vmatpush.bf16.msra.mxu0 0
      %797 = vmatpush.bf16.msra.mxu0 0
      %798 = vmatpush.bf16.msra.mxu0 0
      %799 = vmatpush.bf16.msra.mxu0 0
      %800 = vmatpush.bf16.msra.mxu0 0
      %801 = vmatpush.bf16.msra.mxu0 %v758
      %802 = vmatmul.bf16.gmra.mxu0 %v749
      %v803 = vpop.f32.mrf.mxu0
      %v804 = vadd.f32 0.0, %v803
      %v805 = vpop.f32.mrf.mxu0
      %v806 = vadd.f32 0.0, %v805
      %807 = vdwg.mxu0
      %808 = vmatpush.bf16.msra.mxu0 0
      %809 = vmatpush.bf16.msra.mxu0 0
      %810 = vmatpush.bf16.msra.mxu0 0
      %811 = vmatpush.bf16.msra.mxu0 0
      %812 = vmatpush.bf16.msra.mxu0 0
      %813 = vmatpush.bf16.msra.mxu0 0
      %814 = vmatpush.bf16.msra.mxu0 0
      %815 = vmatpush.bf16.msra.mxu0 %v761
      %816 = vmatmul.bf16.gmra.mxu0 %v749
      %v817 = vpop.f32.mrf.mxu0
      %v818 = vadd.f32 0.0, %v817
      %v819 = vpop.f32.mrf.mxu0
      %v820 = vadd.f32 0.0, %v819
      %821 = vdwg.mxu0
      %822 = vmatpush.bf16.msra.mxu0 0
      %823 = vmatpush.bf16.msra.mxu0 0
      %824 = vmatpush.bf16.msra.mxu0 0
      %825 = vmatpush.bf16.msra.mxu0 0
      %826 = vmatpush.bf16.msra.mxu0 0
      %827 = vmatpush.bf16.msra.mxu0 0
      %828 = vmatpush.bf16.msra.mxu0 0
      %829 = vmatpush.bf16.msra.mxu0 %v764
      %830 = vmatmul.bf16.gmra.mxu0 %v749
      %v831 = vpop.f32.mrf.mxu0
      %v832 = vadd.f32 0.0, %v831
      %v833 = vpop.f32.mrf.mxu0
      %v834 = vadd.f32 0.0, %v833
      %835 = vdwg.mxu0
      %v836 = vadd.f32 %v715, %v776
      %v837 = vadd.f32 %v716, %v790
      %v838 = vadd.f32 %v717, %v804
      %v839 = vadd.f32 %v718, %v818
      %v840 = vadd.f32 %v719, %v832
      %v841 = vadd.f32 %v720, %v778
      %v842 = vadd.f32 %v721, %v792
      %v843 = vadd.f32 %v722, %v806
      %v844 = vadd.f32 %v723, %v820
      %v845 = vadd.f32 %v724, %v834
      %s846 = scalar_lea.vmem %s2, 40
      %v847 = vld [vmem:[%s846] sm:$0xf]
      %v848 = vld [vmem:[%s846 + $0x4] sm:$0xf]
      %v851 = vunpack.c.l.b16 %v847
      %v852 = vunpack.c.l.b16 %v848
      %v853 = vpack.c.b16 %v852, %v851
      %854 = vrot.lane.b32.xlu0 %v280, 92
      %v855 = vpop.permute.xlu0 %854
      %856 = vrot.lane.b32.xlu0 %v281, 92
      %v857 = vpop.permute.xlu0 %856
      %858 = vrot.lane.b32.xlu0 %v282, 92
      %v859 = vpop.permute.xlu0 %858
      %860 = vrot.lane.b32.xlu0 %v283, 92
      %v861 = vpop.permute.xlu0 %860
      %862 = vrot.lane.b32.xlu0 %v284, 92
      %v863 = vpop.permute.xlu0 %862
      %vm864 = vcmask 752640
      %v865 = vsel %vm864, %v855, %v857
      %v866 = vsel %vm864, %v857, %v859
      %v867 = vsel %vm864, %v859, %v861
      %v868 = vsel %vm864, %v861, %v863
      %v870 = vsel %vm300, %v853, 0
      %v873 = vsel %vm304, %v865, 0
      %v876 = vsel %vm304, %v866, 0
      %v879 = vsel %vm304, %v867, 0
      %v882 = vsel %vm304, %v868, 0
      %v885 = vsel %vm304, %v863, 0
      %887 = vmatpush.bf16.msra.mxu0 0
      %888 = vmatpush.bf16.msra.mxu0 0
      %889 = vmatpush.bf16.msra.mxu0 0
      %890 = vmatpush.bf16.msra.mxu0 0
      %891 = vmatpush.bf16.msra.mxu0 0
      %892 = vmatpush.bf16.msra.mxu0 0
      %893 = vmatpush.bf16.msra.mxu0 0
      %894 = vmatpush.bf16.msra.mxu0 %v873
      %895 = vmatmul.bf16.gmra.mxu0 %v870
      %v896 = vpop.f32.mrf.mxu0
      %v897 = vadd.f32 0.0, %v896
      %v898 = vpop.f32.mrf.mxu0
      %v899 = vadd.f32 0.0, %v898
      %900 = vdwg.mxu0
      %901 = vmatpush.bf16.msra.mxu0 0
      %902 = vmatpush.bf16.msra.mxu0 0
      %903 = vmatpush.bf16.msra.mxu0 0
      %904 = vmatpush.bf16.msra.mxu0 0
      %905 = vmatpush.bf16.msra.mxu0 0
      %906 = vmatpush.bf16.msra.mxu0 0
      %907 = vmatpush.bf16.msra.mxu0 0
      %908 = vmatpush.bf16.msra.mxu0 %v876
      %909 = vmatmul.bf16.gmra.mxu0 %v870
      %v910 = vpop.f32.mrf.mxu0
      %v911 = vadd.f32 0.0, %v910
      %v912 = vpop.f32.mrf.mxu0
      %v913 = vadd.f32 0.0, %v912
      %914 = vdwg.mxu0
      %915 = vmatpush.bf16.msra.mxu0 0
      %916 = vmatpush.bf16.msra.mxu0 0
      %917 = vmatpush.bf16.msra.mxu0 0
      %918 = vmatpush.bf16.msra.mxu0 0
      %919 = vmatpush.bf16.msra.mxu0 0
      %920 = vmatpush.bf16.msra.mxu0 0
      %921 = vmatpush.bf16.msra.mxu0 0
      %922 = vmatpush.bf16.msra.mxu0 %v879
      %923 = vmatmul.bf16.gmra.mxu0 %v870
      %v924 = vpop.f32.mrf.mxu0
      %v925 = vadd.f32 0.0, %v924
      %v926 = vpop.f32.mrf.mxu0
      %v927 = vadd.f32 0.0, %v926
      %928 = vdwg.mxu0
      %929 = vmatpush.bf16.msra.mxu0 0
      %930 = vmatpush.bf16.msra.mxu0 0
      %931 = vmatpush.bf16.msra.mxu0 0
      %932 = vmatpush.bf16.msra.mxu0 0
      %933 = vmatpush.bf16.msra.mxu0 0
      %934 = vmatpush.bf16.msra.mxu0 0
      %935 = vmatpush.bf16.msra.mxu0 0
      %936 = vmatpush.bf16.msra.mxu0 %v882
      %937 = vmatmul.bf16.gmra.mxu0 %v870
      %v938 = vpop.f32.mrf.mxu0
      %v939 = vadd.f32 0.0, %v938
      %v940 = vpop.f32.mrf.mxu0
      %v941 = vadd.f32 0.0, %v940
      %942 = vdwg.mxu0
      %943 = vmatpush.bf16.msra.mxu0 0
      %944 = vmatpush.bf16.msra.mxu0 0
      %945 = vmatpush.bf16.msra.mxu0 0
      %946 = vmatpush.bf16.msra.mxu0 0
      %947 = vmatpush.bf16.msra.mxu0 0
      %948 = vmatpush.bf16.msra.mxu0 0
      %949 = vmatpush.bf16.msra.mxu0 0
      %950 = vmatpush.bf16.msra.mxu0 %v885
      %951 = vmatmul.bf16.gmra.mxu0 %v870
      %v952 = vpop.f32.mrf.mxu0
      %v953 = vadd.f32 0.0, %v952
      %v954 = vpop.f32.mrf.mxu0
      %v955 = vadd.f32 0.0, %v954
      %956 = vdwg.mxu0
      %v957 = vadd.f32 %v836, %v897
      %v958 = vadd.f32 %v837, %v911
      %v959 = vadd.f32 %v838, %v925
      %v960 = vadd.f32 %v839, %v939
      %v961 = vadd.f32 %v840, %v953
      %v962 = vadd.f32 %v841, %v899
      %v963 = vadd.f32 %v842, %v913
      %v964 = vadd.f32 %v843, %v927
      %v965 = vadd.f32 %v844, %v941
      %v966 = vadd.f32 %v845, %v955
      %s967 = scalar_lea.vmem %s2, 48
      %v968 = vld [vmem:[%s967] sm:$0xf]
      %v969 = vld [vmem:[%s967 + $0x4] sm:$0xf]
      %v972 = vunpack.c.l.b16 %v968
      %v973 = vunpack.c.l.b16 %v969
      %v974 = vpack.c.b16 %v973, %v972
      %975 = vrot.lane.b32.xlu0 %v280, 60
      %v976 = vpop.permute.xlu0 %975
      %977 = vrot.lane.b32.xlu0 %v281, 60
      %v978 = vpop.permute.xlu0 %977
      %979 = vrot.lane.b32.xlu0 %v282, 60
      %v980 = vpop.permute.xlu0 %979
      %981 = vrot.lane.b32.xlu0 %v283, 60
      %v982 = vpop.permute.xlu0 %981
      %983 = vrot.lane.b32.xlu0 %v284, 60
      %v984 = vpop.permute.xlu0 %983
      %vm985 = vcmask 490496
      %v986 = vsel %vm985, %v976, %v978
      %v987 = vsel %vm985, %v978, %v980
      %v988 = vsel %vm985, %v980, %v982
      %v989 = vsel %vm985, %v982, %v984
      %v991 = vsel %vm300, %v974, 0
      %v994 = vsel %vm304, %v986, 0
      %v997 = vsel %vm304, %v987, 0
      %v1000 = vsel %vm304, %v988, 0
      %v1003 = vsel %vm304, %v989, 0
      %v1006 = vsel %vm304, %v984, 0
      %1008 = vmatpush.bf16.msra.mxu0 0
      %1009 = vmatpush.bf16.msra.mxu0 0
      %1010 = vmatpush.bf16.msra.mxu0 0
      %1011 = vmatpush.bf16.msra.mxu0 0
      %1012 = vmatpush.bf16.msra.mxu0 0
      %1013 = vmatpush.bf16.msra.mxu0 0
      %1014 = vmatpush.bf16.msra.mxu0 0
      %1015 = vmatpush.bf16.msra.mxu0 %v994
      %1016 = vmatmul.bf16.gmra.mxu0 %v991
      %v1017 = vpop.f32.mrf.mxu0
      %v1018 = vadd.f32 0.0, %v1017
      %v1019 = vpop.f32.mrf.mxu0
      %v1020 = vadd.f32 0.0, %v1019
      %1021 = vdwg.mxu0
      %1022 = vmatpush.bf16.msra.mxu0 0
      %1023 = vmatpush.bf16.msra.mxu0 0
      %1024 = vmatpush.bf16.msra.mxu0 0
      %1025 = vmatpush.bf16.msra.mxu0 0
      %1026 = vmatpush.bf16.msra.mxu0 0
      %1027 = vmatpush.bf16.msra.mxu0 0
      %1028 = vmatpush.bf16.msra.mxu0 0
      %1029 = vmatpush.bf16.msra.mxu0 %v997
      %1030 = vmatmul.bf16.gmra.mxu0 %v991
      %v1031 = vpop.f32.mrf.mxu0
      %v1032 = vadd.f32 0.0, %v1031
      %v1033 = vpop.f32.mrf.mxu0
      %v1034 = vadd.f32 0.0, %v1033
      %1035 = vdwg.mxu0
      %1036 = vmatpush.bf16.msra.mxu0 0
      %1037 = vmatpush.bf16.msra.mxu0 0
      %1038 = vmatpush.bf16.msra.mxu0 0
      %1039 = vmatpush.bf16.msra.mxu0 0
      %1040 = vmatpush.bf16.msra.mxu0 0
      %1041 = vmatpush.bf16.msra.mxu0 0
      %1042 = vmatpush.bf16.msra.mxu0 0
      %1043 = vmatpush.bf16.msra.mxu0 %v1000
      %1044 = vmatmul.bf16.gmra.mxu0 %v991
      %v1045 = vpop.f32.mrf.mxu0
      %v1046 = vadd.f32 0.0, %v1045
      %v1047 = vpop.f32.mrf.mxu0
      %v1048 = vadd.f32 0.0, %v1047
      %1049 = vdwg.mxu0
      %1050 = vmatpush.bf16.msra.mxu0 0
      %1051 = vmatpush.bf16.msra.mxu0 0
      %1052 = vmatpush.bf16.msra.mxu0 0
      %1053 = vmatpush.bf16.msra.mxu0 0
      %1054 = vmatpush.bf16.msra.mxu0 0
      %1055 = vmatpush.bf16.msra.mxu0 0
      %1056 = vmatpush.bf16.msra.mxu0 0
      %1057 = vmatpush.bf16.msra.mxu0 %v1003
      %1058 = vmatmul.bf16.gmra.mxu0 %v991
      %v1059 = vpop.f32.mrf.mxu0
      %v1060 = vadd.f32 0.0, %v1059
      %v1061 = vpop.f32.mrf.mxu0
      %v1062 = vadd.f32 0.0, %v1061
      %1063 = vdwg.mxu0
      %1064 = vmatpush.bf16.msra.mxu0 0
      %1065 = vmatpush.bf16.msra.mxu0 0
      %1066 = vmatpush.bf16.msra.mxu0 0
      %1067 = vmatpush.bf16.msra.mxu0 0
      %1068 = vmatpush.bf16.msra.mxu0 0
      %1069 = vmatpush.bf16.msra.mxu0 0
      %1070 = vmatpush.bf16.msra.mxu0 0
      %1071 = vmatpush.bf16.msra.mxu0 %v1006
      %1072 = vmatmul.bf16.gmra.mxu0 %v991
      %v1073 = vpop.f32.mrf.mxu0
      %v1074 = vadd.f32 0.0, %v1073
      %v1075 = vpop.f32.mrf.mxu0
      %v1076 = vadd.f32 0.0, %v1075
      %1077 = vdwg.mxu0
      %v1078 = vadd.f32 %v957, %v1018
      %v1079 = vadd.f32 %v958, %v1032
      %v1080 = vadd.f32 %v959, %v1046
      %v1081 = vadd.f32 %v960, %v1060
      %v1082 = vadd.f32 %v961, %v1074
      %v1083 = vadd.f32 %v962, %v1020
      %v1084 = vadd.f32 %v963, %v1034
      %v1085 = vadd.f32 %v964, %v1048
      %v1086 = vadd.f32 %v965, %v1062
      %v1087 = vadd.f32 %v966, %v1076
      %s1088 = scalar_lea.vmem %s2, 56
      %v1089 = vld [vmem:[%s1088] sm:$0xf]
      %v1090 = vld [vmem:[%s1088 + $0x4] sm:$0xf]
      %v1093 = vunpack.c.l.b16 %v1089
      %v1094 = vunpack.c.l.b16 %v1090
      %v1095 = vpack.c.b16 %v1094, %v1093
      %1096 = vrot.lane.b32.xlu0 %v280, 59
      %v1097 = vpop.permute.xlu0 %1096
      %1098 = vrot.lane.b32.xlu0 %v281, 59
      %v1099 = vpop.permute.xlu0 %1098
      %1100 = vrot.lane.b32.xlu0 %v282, 59
      %v1101 = vpop.permute.xlu0 %1100
      %1102 = vrot.lane.b32.xlu0 %v283, 59
      %v1103 = vpop.permute.xlu0 %1102
      %1104 = vrot.lane.b32.xlu0 %v284, 59
      %v1105 = vpop.permute.xlu0 %1104
      %vm1106 = vcmask 482304
      %v1107 = vsel %vm1106, %v1097, %v1099
      %v1108 = vsel %vm1106, %v1099, %v1101
      %v1109 = vsel %vm1106, %v1101, %v1103
      %v1110 = vsel %vm1106, %v1103, %v1105
      %v1112 = vsel %vm300, %v1095, 0
      %v1115 = vsel %vm304, %v1107, 0
      %v1118 = vsel %vm304, %v1108, 0
      %v1121 = vsel %vm304, %v1109, 0
      %v1124 = vsel %vm304, %v1110, 0
      %v1127 = vsel %vm304, %v1105, 0
      %1129 = vmatpush.bf16.msra.mxu0 0
      %1130 = vmatpush.bf16.msra.mxu0 0
      %1131 = vmatpush.bf16.msra.mxu0 0
      %1132 = vmatpush.bf16.msra.mxu0 0
      %1133 = vmatpush.bf16.msra.mxu0 0
      %1134 = vmatpush.bf16.msra.mxu0 0
      %1135 = vmatpush.bf16.msra.mxu0 0
      %1136 = vmatpush.bf16.msra.mxu0 %v1115
      %1137 = vmatmul.bf16.gmra.mxu0 %v1112
      %v1138 = vpop.f32.mrf.mxu0
      %v1139 = vadd.f32 0.0, %v1138
      %v1140 = vpop.f32.mrf.mxu0
      %v1141 = vadd.f32 0.0, %v1140
      %1142 = vdwg.mxu0
      %1143 = vmatpush.bf16.msra.mxu0 0
      %1144 = vmatpush.bf16.msra.mxu0 0
      %1145 = vmatpush.bf16.msra.mxu0 0
      %1146 = vmatpush.bf16.msra.mxu0 0
      %1147 = vmatpush.bf16.msra.mxu0 0
      %1148 = vmatpush.bf16.msra.mxu0 0
      %1149 = vmatpush.bf16.msra.mxu0 0
      %1150 = vmatpush.bf16.msra.mxu0 %v1118
      %1151 = vmatmul.bf16.gmra.mxu0 %v1112
      %v1152 = vpop.f32.mrf.mxu0
      %v1153 = vadd.f32 0.0, %v1152
      %v1154 = vpop.f32.mrf.mxu0
      %v1155 = vadd.f32 0.0, %v1154
      %1156 = vdwg.mxu0
      %1157 = vmatpush.bf16.msra.mxu0 0
      %1158 = vmatpush.bf16.msra.mxu0 0
      %1159 = vmatpush.bf16.msra.mxu0 0
      %1160 = vmatpush.bf16.msra.mxu0 0
      %1161 = vmatpush.bf16.msra.mxu0 0
      %1162 = vmatpush.bf16.msra.mxu0 0
      %1163 = vmatpush.bf16.msra.mxu0 0
      %1164 = vmatpush.bf16.msra.mxu0 %v1121
      %1165 = vmatmul.bf16.gmra.mxu0 %v1112
      %v1166 = vpop.f32.mrf.mxu0
      %v1167 = vadd.f32 0.0, %v1166
      %v1168 = vpop.f32.mrf.mxu0
      %v1169 = vadd.f32 0.0, %v1168
      %1170 = vdwg.mxu0
      %1171 = vmatpush.bf16.msra.mxu0 0
      %1172 = vmatpush.bf16.msra.mxu0 0
      %1173 = vmatpush.bf16.msra.mxu0 0
      %1174 = vmatpush.bf16.msra.mxu0 0
      %1175 = vmatpush.bf16.msra.mxu0 0
      %1176 = vmatpush.bf16.msra.mxu0 0
      %1177 = vmatpush.bf16.msra.mxu0 0
      %1178 = vmatpush.bf16.msra.mxu0 %v1124
      %1179 = vmatmul.bf16.gmra.mxu0 %v1112
      %v1180 = vpop.f32.mrf.mxu0
      %v1181 = vadd.f32 0.0, %v1180
      %v1182 = vpop.f32.mrf.mxu0
      %v1183 = vadd.f32 0.0, %v1182
      %1184 = vdwg.mxu0
      %1185 = vmatpush.bf16.msra.mxu0 0
      %1186 = vmatpush.bf16.msra.mxu0 0
      %1187 = vmatpush.bf16.msra.mxu0 0
      %1188 = vmatpush.bf16.msra.mxu0 0
      %1189 = vmatpush.bf16.msra.mxu0 0
      %1190 = vmatpush.bf16.msra.mxu0 0
      %1191 = vmatpush.bf16.msra.mxu0 0
      %1192 = vmatpush.bf16.msra.mxu0 %v1127
      %1193 = vmatmul.bf16.gmra.mxu0 %v1112
      %v1194 = vpop.f32.mrf.mxu0
      %v1195 = vadd.f32 0.0, %v1194
      %v1196 = vpop.f32.mrf.mxu0
      %v1197 = vadd.f32 0.0, %v1196
      %1198 = vdwg.mxu0
      %v1199 = vadd.f32 %v1078, %v1139
      %v1200 = vadd.f32 %v1079, %v1153
      %v1201 = vadd.f32 %v1080, %v1167
      %v1202 = vadd.f32 %v1081, %v1181
      %v1203 = vadd.f32 %v1082, %v1195
      %v1204 = vadd.f32 %v1083, %v1141
      %v1205 = vadd.f32 %v1084, %v1155
      %v1206 = vadd.f32 %v1085, %v1169
      %v1207 = vadd.f32 %v1086, %v1183
      %v1208 = vadd.f32 %v1087, %v1197
      %s1209 = scalar_lea.vmem %s2, 64
      %v1210 = vld [vmem:[%s1209] sm:$0xf]
      %v1211 = vld [vmem:[%s1209 + $0x4] sm:$0xf]
      %v1214 = vunpack.c.l.b16 %v1210
      %v1215 = vunpack.c.l.b16 %v1211
      %v1216 = vpack.c.b16 %v1215, %v1214
      %1217 = vrot.lane.b32.xlu0 %v280, 58
      %v1218 = vpop.permute.xlu0 %1217
      %1219 = vrot.lane.b32.xlu0 %v281, 58
      %v1220 = vpop.permute.xlu0 %1219
      %1221 = vrot.lane.b32.xlu0 %v282, 58
      %v1222 = vpop.permute.xlu0 %1221
      %1223 = vrot.lane.b32.xlu0 %v283, 58
      %v1224 = vpop.permute.xlu0 %1223
      %1225 = vrot.lane.b32.xlu0 %v284, 58
      %v1226 = vpop.permute.xlu0 %1225
      %vm1227 = vcmask 474112
      %v1228 = vsel %vm1227, %v1218, %v1220
      %v1229 = vsel %vm1227, %v1220, %v1222
      %v1230 = vsel %vm1227, %v1222, %v1224
      %v1231 = vsel %vm1227, %v1224, %v1226
      %v1233 = vsel %vm300, %v1216, 0
      %v1236 = vsel %vm304, %v1228, 0
      %v1239 = vsel %vm304, %v1229, 0
      %v1242 = vsel %vm304, %v1230, 0
      %v1245 = vsel %vm304, %v1231, 0
      %v1248 = vsel %vm304, %v1226, 0
      %1250 = vmatpush.bf16.msra.mxu0 0
      %1251 = vmatpush.bf16.msra.mxu0 0
      %1252 = vmatpush.bf16.msra.mxu0 0
      %1253 = vmatpush.bf16.msra.mxu0 0
      %1254 = vmatpush.bf16.msra.mxu0 0
      %1255 = vmatpush.bf16.msra.mxu0 0
      %1256 = vmatpush.bf16.msra.mxu0 0
      %1257 = vmatpush.bf16.msra.mxu0 %v1236
      %1258 = vmatmul.bf16.gmra.mxu0 %v1233
      %v1259 = vpop.f32.mrf.mxu0
      %v1260 = vadd.f32 0.0, %v1259
      %v1261 = vpop.f32.mrf.mxu0
      %v1262 = vadd.f32 0.0, %v1261
      %1263 = vdwg.mxu0
      %1264 = vmatpush.bf16.msra.mxu0 0
      %1265 = vmatpush.bf16.msra.mxu0 0
      %1266 = vmatpush.bf16.msra.mxu0 0
      %1267 = vmatpush.bf16.msra.mxu0 0
      %1268 = vmatpush.bf16.msra.mxu0 0
      %1269 = vmatpush.bf16.msra.mxu0 0
      %1270 = vmatpush.bf16.msra.mxu0 0
      %1271 = vmatpush.bf16.msra.mxu0 %v1239
      %1272 = vmatmul.bf16.gmra.mxu0 %v1233
      %v1273 = vpop.f32.mrf.mxu0
      %v1274 = vadd.f32 0.0, %v1273
      %v1275 = vpop.f32.mrf.mxu0
      %v1276 = vadd.f32 0.0, %v1275
      %1277 = vdwg.mxu0
      %1278 = vmatpush.bf16.msra.mxu0 0
      %1279 = vmatpush.bf16.msra.mxu0 0
      %1280 = vmatpush.bf16.msra.mxu0 0
      %1281 = vmatpush.bf16.msra.mxu0 0
      %1282 = vmatpush.bf16.msra.mxu0 0
      %1283 = vmatpush.bf16.msra.mxu0 0
      %1284 = vmatpush.bf16.msra.mxu0 0
      %1285 = vmatpush.bf16.msra.mxu0 %v1242
      %1286 = vmatmul.bf16.gmra.mxu0 %v1233
      %v1287 = vpop.f32.mrf.mxu0
      %v1288 = vadd.f32 0.0, %v1287
      %v1289 = vpop.f32.mrf.mxu0
      %v1290 = vadd.f32 0.0, %v1289
      %1291 = vdwg.mxu0
      %1292 = vmatpush.bf16.msra.mxu0 0
      %1293 = vmatpush.bf16.msra.mxu0 0
      %1294 = vmatpush.bf16.msra.mxu0 0
      %1295 = vmatpush.bf16.msra.mxu0 0
      %1296 = vmatpush.bf16.msra.mxu0 0
      %1297 = vmatpush.bf16.msra.mxu0 0
      %1298 = vmatpush.bf16.msra.mxu0 0
      %1299 = vmatpush.bf16.msra.mxu0 %v1245
      %1300 = vmatmul.bf16.gmra.mxu0 %v1233
      %v1301 = vpop.f32.mrf.mxu0
      %v1302 = vadd.f32 0.0, %v1301
      %v1303 = vpop.f32.mrf.mxu0
      %v1304 = vadd.f32 0.0, %v1303
      %1305 = vdwg.mxu0
      %1306 = vmatpush.bf16.msra.mxu0 0
      %1307 = vmatpush.bf16.msra.mxu0 0
      %1308 = vmatpush.bf16.msra.mxu0 0
      %1309 = vmatpush.bf16.msra.mxu0 0
      %1310 = vmatpush.bf16.msra.mxu0 0
      %1311 = vmatpush.bf16.msra.mxu0 0
      %1312 = vmatpush.bf16.msra.mxu0 0
      %1313 = vmatpush.bf16.msra.mxu0 %v1248
      %1314 = vmatmul.bf16.gmra.mxu0 %v1233
      %v1315 = vpop.f32.mrf.mxu0
      %v1316 = vadd.f32 0.0, %v1315
      %v1317 = vpop.f32.mrf.mxu0
      %v1318 = vadd.f32 0.0, %v1317
      %1319 = vdwg.mxu0
      %v1320 = vadd.f32 %v1199, %v1260
      %v1321 = vadd.f32 %v1200, %v1274
      %v1322 = vadd.f32 %v1201, %v1288
      %v1323 = vadd.f32 %v1202, %v1302
      %v1324 = vadd.f32 %v1203, %v1316
      %v1325 = vadd.f32 %v1204, %v1262
      %v1326 = vadd.f32 %v1205, %v1276
      %v1327 = vadd.f32 %v1206, %v1290
      %v1328 = vadd.f32 %v1207, %v1304
      %v1329 = vadd.f32 %v1208, %v1318
      %v1331 = vperm.slane %v253, 0
      %v1332 = vperm.slane %v253, 1
      %v1333 = vperm.slane %v253, 2
      %v1334 = vperm.slane %v253, 3
      %v1335 = vperm.slane %v253, 4
      %v1341 = vmul.f32 %v1320, %v1331
      %v1342 = vmul.f32 %v1321, %v1332
      %v1343 = vmul.f32 %v1322, %v1333
      %v1344 = vmul.f32 %v1323, %v1334
      %v1345 = vmul.f32 %v1324, %v1335
      %v1346 = vmul.f32 %v1325, %v1331
      %v1347 = vmul.f32 %v1326, %v1332
      %v1348 = vmul.f32 %v1327, %v1333
      %v1349 = vmul.f32 %v1328, %v1334
      %v1350 = vmul.f32 %v1329, %v1335
      %v1351 = vadd.f32 %v1341, %v1342
      %v1352 = vadd.f32 %v1351, %v1343
      %v1353 = vadd.f32 %v1352, %v1344
      %vm1354 = vcmask 261120
      %v1355 = vsel %vm1354, %v1345, 0.0
      %v1356 = vadd.f32 %v1353, %v1355
      %1357 = vadd.xlane.f32.xlu0 %v1356
      %v1358 = vpop.xlane.xlu0 %1357
      %v1359 = vadd.f32 %v1346, %v1347
      %v1360 = vadd.f32 %v1359, %v1348
      %v1361 = vadd.f32 %v1360, %v1349
      %v1362 = vsel %vm1354, %v1350, 0.0
      %v1363 = vadd.f32 %v1361, %v1362
      %1364 = vadd.xlane.f32.xlu0 %v1363
      %v1365 = vpop.xlane.xlu0 %1364
      %v1366 = vmul.f32 %v1358, 0.001953125
      %v1367 = vmul.f32 %v1365, 0.001953125
      %v1368 = vsub.f32 %v1320, %v1366
      %v1369 = vsub.f32 %v1321, %v1366
      %v1370 = vsub.f32 %v1322, %v1366
      %v1371 = vsub.f32 %v1323, %v1366
      %v1372 = vsub.f32 %v1324, %v1366
      %v1373 = vsub.f32 %v1325, %v1367
      %v1374 = vsub.f32 %v1326, %v1367
      %v1375 = vsub.f32 %v1327, %v1367
      %v1376 = vsub.f32 %v1328, %v1367
      %v1377 = vsub.f32 %v1329, %v1367
      %v1378 = vmul.f32 %v1368, %v1331
      %v1379 = vmul.f32 %v1369, %v1332
      %v1380 = vmul.f32 %v1370, %v1333
      %v1381 = vmul.f32 %v1371, %v1334
      %v1382 = vmul.f32 %v1372, %v1335
      %v1383 = vmul.f32 %v1373, %v1331
      %v1384 = vmul.f32 %v1374, %v1332
      %v1385 = vmul.f32 %v1375, %v1333
      %v1386 = vmul.f32 %v1376, %v1334
      %v1387 = vmul.f32 %v1377, %v1335
      %v1388 = vmul.f32 %v1378, %v1378
      %v1389 = vmul.f32 %v1379, %v1379
      %v1390 = vmul.f32 %v1380, %v1380
      %v1391 = vmul.f32 %v1381, %v1381
      %v1392 = vmul.f32 %v1382, %v1382
      %v1393 = vmul.f32 %v1383, %v1383
      %v1394 = vmul.f32 %v1384, %v1384
      %v1395 = vmul.f32 %v1385, %v1385
      %v1396 = vmul.f32 %v1386, %v1386
      %v1397 = vmul.f32 %v1387, %v1387
      %v1398 = vadd.f32 %v1388, %v1389
      %v1399 = vadd.f32 %v1398, %v1390
      %v1400 = vadd.f32 %v1399, %v1391
      %v1401 = vsel %vm1354, %v1392, 0.0
      %v1402 = vadd.f32 %v1400, %v1401
      %1403 = vadd.xlane.f32.xlu0 %v1402
      %v1404 = vpop.xlane.xlu0 %1403
      %v1405 = vadd.f32 %v1393, %v1394
      %v1406 = vadd.f32 %v1405, %v1395
      %v1407 = vadd.f32 %v1406, %v1396
      %v1408 = vsel %vm1354, %v1397, 0.0
      %v1409 = vadd.f32 %v1407, %v1408
      %1410 = vadd.xlane.f32.xlu0 %v1409
      %v1411 = vpop.xlane.xlu0 %1410
      %v1412 = vmul.f32 %v1404, 0.001953125
      %v1413 = vmul.f32 %v1411, 0.001953125
      %v1414 = vadd.f32 %v1412, 1e-05
      %v1415 = vadd.f32 %v1413, 1e-05
      %v1416 = vrsqrt.pop %v1414
      %v1417 = vmul.f32 %v1416, %v1414
      %v1418 = vmul.f32 %v1417, %v1416
      %v1419 = vmul.f32 0.5, %v1418
      %v1420 = vsub.f32 1.5, %v1419
      %v1421 = vmul.f32 %v1416, %v1420
      %vm1422 = vweird.f32 %v1414
      %vm1423 = vweird.f32 %v1416
      %vm1424 = vmor %vm1422, %vm1423
      %v1425 = vsel %vm1424, %v1416, %v1421
      %v1426 = vrsqrt.pop %v1415
      %v1427 = vmul.f32 %v1426, %v1415
      %v1428 = vmul.f32 %v1427, %v1426
      %v1429 = vmul.f32 0.5, %v1428
      %v1430 = vsub.f32 1.5, %v1429
      %v1431 = vmul.f32 %v1426, %v1430
      %vm1432 = vweird.f32 %v1415
      %vm1433 = vweird.f32 %v1426
      %vm1434 = vmor %vm1432, %vm1433
      %v1435 = vsel %vm1434, %v1426, %v1431
      %v1436 = vmul.f32 %v1378, %v1425
      %v1437 = vmul.f32 %v1379, %v1425
      %v1438 = vmul.f32 %v1380, %v1425
      %v1439 = vmul.f32 %v1381, %v1425
      %v1440 = vmul.f32 %v1382, %v1425
      %v1441 = vmul.f32 %v1383, %v1435
      %v1442 = vmul.f32 %v1384, %v1435
      %v1443 = vmul.f32 %v1385, %v1435
      %v1444 = vmul.f32 %v1386, %v1435
      %v1445 = vmul.f32 %v1387, %v1435
      %v1446 = vmax.f32 %v1436, 0.0
      %v1447 = vmax.f32 %v1437, 0.0
      %v1448 = vmax.f32 %v1438, 0.0
      %v1449 = vmax.f32 %v1439, 0.0
      %v1450 = vmax.f32 %v1440, 0.0
      %v1451 = vmax.f32 %v1441, 0.0
      %v1452 = vmax.f32 %v1442, 0.0
      %v1453 = vmax.f32 %v1443, 0.0
      %v1454 = vmax.f32 %v1444, 0.0
      %v1455 = vmax.f32 %v1445, 0.0
      %v1456 = vpack.c.bf16 %v1447, %v1446
      %v1457 = vpack.c.bf16 %v1449, %v1448
      %v1458 = vpack.c.bf16 %v1450, %v1450
      %v1459 = vpack.c.bf16 %v1452, %v1451
      %v1460 = vpack.c.bf16 %v1454, %v1453
      %v1461 = vpack.c.bf16 %v1455, %v1455
      %1462 = vst [vmem:[#allocation2 + $0x4] sm:$0xff] %v1456
      %1463 = vst [vmem:[#allocation2 + $0xc] sm:$0xff] %v1457
      %vm1464 = vcmask 257024
      %1465 = vst.msk [vmem:[#allocation2 + $0x14] sm:$0xf] %vm1464, %v1458
      %1466 = vst [vmem:[#allocation2 + $0x1c] sm:$0xff] %v1459
      %1467 = vst [vmem:[#allocation2 + $0x24] sm:$0xff] %v1460
      %1468 = vst.msk [vmem:[#allocation2 + $0x2c] sm:$0xf] %vm1464, %v1461
      %v1469 = vld [vmem:[%s3] sm:$0xf]
      %v1470 = vld [vmem:[%s3 + $0x4] sm:$0xf]
      %v1471 = vld [vmem:[#allocation2] sm:$0xff]
      %v1472 = vld [vmem:[#allocation2 + $0x8] sm:$0xff]
      %v1473 = vld [vmem:[#allocation2 + $0x10] sm:$0xf]
      %v1474 = vld [vmem:[#allocation2 + $0x18] sm:$0xff]
      %v1475 = vld [vmem:[#allocation2 + $0x20] sm:$0xff]
      %v1476 = vld [vmem:[#allocation2 + $0x28] sm:$0xf]
      %s1477 = scalar_lea.vmem %s3, 8
      %v1478 = vld [vmem:[%s1477] sm:$0xf]
      %v1479 = vld [vmem:[%s1477 + $0x4] sm:$0xf]
      %v1482 = vunpack.c.l.b16 %v1478
      %v1483 = vunpack.c.l.b16 %v1479
      %v1484 = vpack.c.b16 %v1483, %v1482
      %v1491 = vunpack.c.l.b16 %v1471
      %v1492 = vunpack.c.h.b16 %v1471
      %v1493 = vunpack.c.l.b16 %v1472
      %v1494 = vunpack.c.h.b16 %v1472
      %v1495 = vunpack.c.l.b16 %v1473
      %v1496 = vunpack.c.l.b16 %v1474
      %v1497 = vunpack.c.h.b16 %v1474
      %v1498 = vunpack.c.l.b16 %v1475
      %v1499 = vunpack.c.h.b16 %v1475
      %v1500 = vunpack.c.l.b16 %v1476
      %v1501 = vpack.c.b16 %v1496, %v1491
      %v1502 = vpack.c.b16 %v1497, %v1492
      %v1503 = vpack.c.b16 %v1498, %v1493
      %v1504 = vpack.c.b16 %v1499, %v1494
      %v1505 = vpack.c.b16 %v1500, %v1495
      %1506 = vrot.lane.b32.xlu0 %v1501, 34
      %v1507 = vpop.permute.xlu0 %1506
      %1508 = vrot.lane.b32.xlu0 %v1502, 34
      %v1509 = vpop.permute.xlu0 %1508
      %1510 = vrot.lane.b32.xlu0 %v1503, 34
      %v1511 = vpop.permute.xlu0 %1510
      %1512 = vrot.lane.b32.xlu0 %v1504, 34
      %v1513 = vpop.permute.xlu0 %1512
      %1514 = vrot.lane.b32.xlu0 %v1505, 34
      %v1515 = vpop.permute.xlu0 %1514
      %vm1516 = vcmask 277504
      %v1517 = vsel %vm1516, %v1507, %v1509
      %v1518 = vsel %vm1516, %v1509, %v1511
      %v1519 = vsel %vm1516, %v1511, %v1513
      %v1520 = vsel %vm1516, %v1513, %v1515
      %vm1526 = vcmask 130048
      %v1528 = vsel %vm1526, %v1484, 0
      %1530 = vmatpush.bf16.msra.mxu0 0
      %1531 = vmatpush.bf16.msra.mxu0 0
      %1532 = vmatpush.bf16.msra.mxu0 0
      %1533 = vmatpush.bf16.msra.mxu0 0
      %1534 = vmatpush.bf16.msra.mxu0 0
      %1535 = vmatpush.bf16.msra.mxu0 0
      %1536 = vmatpush.bf16.msra.mxu0 0
      %1537 = vmatpush.bf16.msra.mxu0 %v1517
      %1538 = vmatmul.bf16.gmra.mxu0 %v1528
      %v1539 = vpop.f32.mrf.mxu0
      %v1540 = vadd.f32 0.0, %v1539
      %v1541 = vpop.f32.mrf.mxu0
      %v1542 = vadd.f32 0.0, %v1541
      %1543 = vdwg.mxu0
      %1544 = vmatpush.bf16.msra.mxu0 0
      %1545 = vmatpush.bf16.msra.mxu0 0
      %1546 = vmatpush.bf16.msra.mxu0 0
      %1547 = vmatpush.bf16.msra.mxu0 0
      %1548 = vmatpush.bf16.msra.mxu0 0
      %1549 = vmatpush.bf16.msra.mxu0 0
      %1550 = vmatpush.bf16.msra.mxu0 0
      %1551 = vmatpush.bf16.msra.mxu0 %v1518
      %1552 = vmatmul.bf16.gmra.mxu0 %v1528
      %v1553 = vpop.f32.mrf.mxu0
      %v1554 = vadd.f32 0.0, %v1553
      %v1555 = vpop.f32.mrf.mxu0
      %v1556 = vadd.f32 0.0, %v1555
      %1557 = vdwg.mxu0
      %1558 = vmatpush.bf16.msra.mxu0 0
      %1559 = vmatpush.bf16.msra.mxu0 0
      %1560 = vmatpush.bf16.msra.mxu0 0
      %1561 = vmatpush.bf16.msra.mxu0 0
      %1562 = vmatpush.bf16.msra.mxu0 0
      %1563 = vmatpush.bf16.msra.mxu0 0
      %1564 = vmatpush.bf16.msra.mxu0 0
      %1565 = vmatpush.bf16.msra.mxu0 %v1519
      %1566 = vmatmul.bf16.gmra.mxu0 %v1528
      %v1567 = vpop.f32.mrf.mxu0
      %v1568 = vadd.f32 0.0, %v1567
      %v1569 = vpop.f32.mrf.mxu0
      %v1570 = vadd.f32 0.0, %v1569
      %1571 = vdwg.mxu0
      %1572 = vmatpush.bf16.msra.mxu0 0
      %1573 = vmatpush.bf16.msra.mxu0 0
      %1574 = vmatpush.bf16.msra.mxu0 0
      %1575 = vmatpush.bf16.msra.mxu0 0
      %1576 = vmatpush.bf16.msra.mxu0 0
      %1577 = vmatpush.bf16.msra.mxu0 0
      %1578 = vmatpush.bf16.msra.mxu0 0
      %1579 = vmatpush.bf16.msra.mxu0 %v1520
      %1580 = vmatmul.bf16.gmra.mxu0 %v1528
      %v1581 = vpop.f32.mrf.mxu0
      %v1582 = vadd.f32 0.0, %v1581
      %v1583 = vpop.f32.mrf.mxu0
      %v1584 = vadd.f32 0.0, %v1583
      %1585 = vdwg.mxu0
      %1586 = vmatpush.bf16.msra.mxu0 0
      %1587 = vmatpush.bf16.msra.mxu0 0
      %1588 = vmatpush.bf16.msra.mxu0 0
      %1589 = vmatpush.bf16.msra.mxu0 0
      %1590 = vmatpush.bf16.msra.mxu0 0
      %1591 = vmatpush.bf16.msra.mxu0 0
      %1592 = vmatpush.bf16.msra.mxu0 0
      %1593 = vmatpush.bf16.msra.mxu0 %v1515
      %1594 = vmatmul.bf16.gmra.mxu0 %v1528
      %v1595 = vpop.f32.mrf.mxu0
      %v1596 = vadd.f32 0.0, %v1595
      %v1597 = vpop.f32.mrf.mxu0
      %v1598 = vadd.f32 0.0, %v1597
      %1599 = vdwg.mxu0
      %v1602 = vunpack.c.l.b16 %v1469
      %v1603 = vunpack.c.l.b16 %v1470
      %v1604 = vpack.c.b16 %v1603, %v1602
      %1605 = vrot.lane.b32.xlu0 %v1501, 35
      %v1606 = vpop.permute.xlu0 %1605
      %1607 = vrot.lane.b32.xlu0 %v1502, 35
      %v1608 = vpop.permute.xlu0 %1607
      %1609 = vrot.lane.b32.xlu0 %v1503, 35
      %v1610 = vpop.permute.xlu0 %1609
      %1611 = vrot.lane.b32.xlu0 %v1504, 35
      %v1612 = vpop.permute.xlu0 %1611
      %1613 = vrot.lane.b32.xlu0 %v1505, 35
      %v1614 = vpop.permute.xlu0 %1613
      %vm1615 = vcmask 285696
      %v1616 = vsel %vm1615, %v1606, %v1608
      %v1617 = vsel %vm1615, %v1608, %v1610
      %v1618 = vsel %vm1615, %v1610, %v1612
      %v1619 = vsel %vm1615, %v1612, %v1614
      %v1626 = vsel %vm1526, %v1604, 0
      %1628 = vmatpush.bf16.msra.mxu0 0
      %1629 = vmatpush.bf16.msra.mxu0 0
      %1630 = vmatpush.bf16.msra.mxu0 0
      %1631 = vmatpush.bf16.msra.mxu0 0
      %1632 = vmatpush.bf16.msra.mxu0 0
      %1633 = vmatpush.bf16.msra.mxu0 0
      %1634 = vmatpush.bf16.msra.mxu0 0
      %1635 = vmatpush.bf16.msra.mxu0 %v1616
      %1636 = vmatmul.bf16.gmra.mxu0 %v1626
      %v1637 = vpop.f32.mrf.mxu0
      %v1638 = vadd.f32 %v1540, %v1637
      %v1639 = vpop.f32.mrf.mxu0
      %v1640 = vadd.f32 %v1542, %v1639
      %1641 = vdwg.mxu0
      %1642 = vmatpush.bf16.msra.mxu0 0
      %1643 = vmatpush.bf16.msra.mxu0 0
      %1644 = vmatpush.bf16.msra.mxu0 0
      %1645 = vmatpush.bf16.msra.mxu0 0
      %1646 = vmatpush.bf16.msra.mxu0 0
      %1647 = vmatpush.bf16.msra.mxu0 0
      %1648 = vmatpush.bf16.msra.mxu0 0
      %1649 = vmatpush.bf16.msra.mxu0 %v1617
      %1650 = vmatmul.bf16.gmra.mxu0 %v1626
      %v1651 = vpop.f32.mrf.mxu0
      %v1652 = vadd.f32 %v1554, %v1651
      %v1653 = vpop.f32.mrf.mxu0
      %v1654 = vadd.f32 %v1556, %v1653
      %1655 = vdwg.mxu0
      %1656 = vmatpush.bf16.msra.mxu0 0
      %1657 = vmatpush.bf16.msra.mxu0 0
      %1658 = vmatpush.bf16.msra.mxu0 0
      %1659 = vmatpush.bf16.msra.mxu0 0
      %1660 = vmatpush.bf16.msra.mxu0 0
      %1661 = vmatpush.bf16.msra.mxu0 0
      %1662 = vmatpush.bf16.msra.mxu0 0
      %1663 = vmatpush.bf16.msra.mxu0 %v1618
      %1664 = vmatmul.bf16.gmra.mxu0 %v1626
      %v1665 = vpop.f32.mrf.mxu0
      %v1666 = vadd.f32 %v1568, %v1665
      %v1667 = vpop.f32.mrf.mxu0
      %v1668 = vadd.f32 %v1570, %v1667
      %1669 = vdwg.mxu0
      %1670 = vmatpush.bf16.msra.mxu0 0
      %1671 = vmatpush.bf16.msra.mxu0 0
      %1672 = vmatpush.bf16.msra.mxu0 0
      %1673 = vmatpush.bf16.msra.mxu0 0
      %1674 = vmatpush.bf16.msra.mxu0 0
      %1675 = vmatpush.bf16.msra.mxu0 0
      %1676 = vmatpush.bf16.msra.mxu0 0
      %1677 = vmatpush.bf16.msra.mxu0 %v1619
      %1678 = vmatmul.bf16.gmra.mxu0 %v1626
      %v1679 = vpop.f32.mrf.mxu0
      %v1680 = vadd.f32 %v1582, %v1679
      %v1681 = vpop.f32.mrf.mxu0
      %v1682 = vadd.f32 %v1584, %v1681
      %1683 = vdwg.mxu0
      %1684 = vmatpush.bf16.msra.mxu0 0
      %1685 = vmatpush.bf16.msra.mxu0 0
      %1686 = vmatpush.bf16.msra.mxu0 0
      %1687 = vmatpush.bf16.msra.mxu0 0
      %1688 = vmatpush.bf16.msra.mxu0 0
      %1689 = vmatpush.bf16.msra.mxu0 0
      %1690 = vmatpush.bf16.msra.mxu0 0
      %1691 = vmatpush.bf16.msra.mxu0 %v1614
      %1692 = vmatmul.bf16.gmra.mxu0 %v1626
      %v1693 = vpop.f32.mrf.mxu0
      %v1694 = vadd.f32 %v1596, %v1693
      %v1695 = vpop.f32.mrf.mxu0
      %v1696 = vadd.f32 %v1598, %v1695
      %1697 = vdwg.mxu0
      %s1698 = scalar_lea.vmem %s3, 16
      %v1699 = vld [vmem:[%s1698] sm:$0xf]
      %v1700 = vld [vmem:[%s1698 + $0x4] sm:$0xf]
      %v1703 = vunpack.c.l.b16 %v1699
      %v1704 = vunpack.c.l.b16 %v1700
      %v1705 = vpack.c.b16 %v1704, %v1703
      %1706 = vrot.lane.b32.xlu0 %v1501, 33
      %v1707 = vpop.permute.xlu0 %1706
      %1708 = vrot.lane.b32.xlu0 %v1502, 33
      %v1709 = vpop.permute.xlu0 %1708
      %1710 = vrot.lane.b32.xlu0 %v1503, 33
      %v1711 = vpop.permute.xlu0 %1710
      %1712 = vrot.lane.b32.xlu0 %v1504, 33
      %v1713 = vpop.permute.xlu0 %1712
      %1714 = vrot.lane.b32.xlu0 %v1505, 33
      %v1715 = vpop.permute.xlu0 %1714
      %vm1716 = vcmask 269312
      %v1717 = vsel %vm1716, %v1707, %v1709
      %v1718 = vsel %vm1716, %v1709, %v1711
      %v1719 = vsel %vm1716, %v1711, %v1713
      %v1720 = vsel %vm1716, %v1713, %v1715
      %v1727 = vsel %vm1526, %v1705, 0
      %1729 = vmatpush.bf16.msra.mxu0 0
      %1730 = vmatpush.bf16.msra.mxu0 0
      %1731 = vmatpush.bf16.msra.mxu0 0
      %1732 = vmatpush.bf16.msra.mxu0 0
      %1733 = vmatpush.bf16.msra.mxu0 0
      %1734 = vmatpush.bf16.msra.mxu0 0
      %1735 = vmatpush.bf16.msra.mxu0 0
      %1736 = vmatpush.bf16.msra.mxu0 %v1717
      %1737 = vmatmul.bf16.gmra.mxu0 %v1727
      %v1738 = vpop.f32.mrf.mxu0
      %v1739 = vadd.f32 0.0, %v1738
      %v1740 = vpop.f32.mrf.mxu0
      %v1741 = vadd.f32 0.0, %v1740
      %1742 = vdwg.mxu0
      %1743 = vmatpush.bf16.msra.mxu0 0
      %1744 = vmatpush.bf16.msra.mxu0 0
      %1745 = vmatpush.bf16.msra.mxu0 0
      %1746 = vmatpush.bf16.msra.mxu0 0
      %1747 = vmatpush.bf16.msra.mxu0 0
      %1748 = vmatpush.bf16.msra.mxu0 0
      %1749 = vmatpush.bf16.msra.mxu0 0
      %1750 = vmatpush.bf16.msra.mxu0 %v1718
      %1751 = vmatmul.bf16.gmra.mxu0 %v1727
      %v1752 = vpop.f32.mrf.mxu0
      %v1753 = vadd.f32 0.0, %v1752
      %v1754 = vpop.f32.mrf.mxu0
      %v1755 = vadd.f32 0.0, %v1754
      %1756 = vdwg.mxu0
      %1757 = vmatpush.bf16.msra.mxu0 0
      %1758 = vmatpush.bf16.msra.mxu0 0
      %1759 = vmatpush.bf16.msra.mxu0 0
      %1760 = vmatpush.bf16.msra.mxu0 0
      %1761 = vmatpush.bf16.msra.mxu0 0
      %1762 = vmatpush.bf16.msra.mxu0 0
      %1763 = vmatpush.bf16.msra.mxu0 0
      %1764 = vmatpush.bf16.msra.mxu0 %v1719
      %1765 = vmatmul.bf16.gmra.mxu0 %v1727
      %v1766 = vpop.f32.mrf.mxu0
      %v1767 = vadd.f32 0.0, %v1766
      %v1768 = vpop.f32.mrf.mxu0
      %v1769 = vadd.f32 0.0, %v1768
      %1770 = vdwg.mxu0
      %1771 = vmatpush.bf16.msra.mxu0 0
      %1772 = vmatpush.bf16.msra.mxu0 0
      %1773 = vmatpush.bf16.msra.mxu0 0
      %1774 = vmatpush.bf16.msra.mxu0 0
      %1775 = vmatpush.bf16.msra.mxu0 0
      %1776 = vmatpush.bf16.msra.mxu0 0
      %1777 = vmatpush.bf16.msra.mxu0 0
      %1778 = vmatpush.bf16.msra.mxu0 %v1720
      %1779 = vmatmul.bf16.gmra.mxu0 %v1727
      %v1780 = vpop.f32.mrf.mxu0
      %v1781 = vadd.f32 0.0, %v1780
      %v1782 = vpop.f32.mrf.mxu0
      %v1783 = vadd.f32 0.0, %v1782
      %1784 = vdwg.mxu0
      %1785 = vmatpush.bf16.msra.mxu0 0
      %1786 = vmatpush.bf16.msra.mxu0 0
      %1787 = vmatpush.bf16.msra.mxu0 0
      %1788 = vmatpush.bf16.msra.mxu0 0
      %1789 = vmatpush.bf16.msra.mxu0 0
      %1790 = vmatpush.bf16.msra.mxu0 0
      %1791 = vmatpush.bf16.msra.mxu0 0
      %1792 = vmatpush.bf16.msra.mxu0 %v1715
      %1793 = vmatmul.bf16.gmra.mxu0 %v1727
      %v1794 = vpop.f32.mrf.mxu0
      %v1795 = vadd.f32 0.0, %v1794
      %v1796 = vpop.f32.mrf.mxu0
      %v1797 = vadd.f32 0.0, %v1796
      %1798 = vdwg.mxu0
      %v1799 = vadd.f32 %v1638, %v1739
      %v1800 = vadd.f32 %v1652, %v1753
      %v1801 = vadd.f32 %v1666, %v1767
      %v1802 = vadd.f32 %v1680, %v1781
      %v1803 = vadd.f32 %v1694, %v1795
      %v1804 = vadd.f32 %v1640, %v1741
      %v1805 = vadd.f32 %v1654, %v1755
      %v1806 = vadd.f32 %v1668, %v1769
      %v1807 = vadd.f32 %v1682, %v1783
      %v1808 = vadd.f32 %v1696, %v1797
      %s1809 = scalar_lea.vmem %s3, 24
      %v1810 = vld [vmem:[%s1809] sm:$0xf]
      %v1811 = vld [vmem:[%s1809 + $0x4] sm:$0xf]
      %v1812 = vld [vmem:[#allocation2] sm:$0xff]
      %v1813 = vld [vmem:[#allocation2 + $0x8] sm:$0xff]
      %v1814 = vld [vmem:[#allocation2 + $0x10] sm:$0xff]
      %v1815 = vld [vmem:[#allocation2 + $0x18] sm:$0xff]
      %v1816 = vld [vmem:[#allocation2 + $0x20] sm:$0xff]
      %v1817 = vld [vmem:[#allocation2 + $0x28] sm:$0xff]
      %v1820 = vunpack.c.l.b16 %v1810
      %v1821 = vunpack.c.l.b16 %v1811
      %v1822 = vpack.c.b16 %v1821, %v1820
      %v1829 = vunpack.c.l.b16 %v1812
      %v1830 = vunpack.c.h.b16 %v1812
      %v1831 = vunpack.c.l.b16 %v1813
      %v1832 = vunpack.c.h.b16 %v1813
      %v1833 = vunpack.c.l.b16 %v1814
      %v1834 = vunpack.c.h.b16 %v1814
      %v1835 = vunpack.c.l.b16 %v1815
      %v1836 = vunpack.c.h.b16 %v1815
      %v1837 = vunpack.c.l.b16 %v1816
      %v1838 = vunpack.c.h.b16 %v1816
      %v1839 = vunpack.c.l.b16 %v1817
      %v1840 = vunpack.c.h.b16 %v1817
      %v1841 = vpack.c.b16 %v1835, %v1829
      %v1842 = vpack.c.b16 %v1836, %v1830
      %v1843 = vpack.c.b16 %v1837, %v1831
      %v1844 = vpack.c.b16 %v1838, %v1832
      %v1845 = vpack.c.b16 %v1839, %v1833
      %v1846 = vpack.c.b16 %v1840, %v1834
      %1847 = vrot.lane.b32.xlu0 %v1841, 1
      %v1848 = vpop.permute.xlu0 %1847
      %1849 = vrot.lane.b32.xlu0 %v1842, 1
      %v1850 = vpop.permute.xlu0 %1849
      %1851 = vrot.lane.b32.xlu0 %v1843, 1
      %v1852 = vpop.permute.xlu0 %1851
      %1853 = vrot.lane.b32.xlu0 %v1844, 1
      %v1854 = vpop.permute.xlu0 %1853
      %1855 = vrot.lane.b32.xlu0 %v1845, 1
      %v1856 = vpop.permute.xlu0 %1855
      %1857 = vrot.lane.b32.xlu0 %v1846, 1
      %v1858 = vpop.permute.xlu0 %1857
      %vm1859 = vcmask 7168
      %v1860 = vsel %vm1859, %v1848, %v1850
      %v1861 = vsel %vm1859, %v1850, %v1852
      %v1862 = vsel %vm1859, %v1852, %v1854
      %v1863 = vsel %vm1859, %v1854, %v1856
      %v1864 = vsel %vm1859, %v1856, %v1858
      %v1871 = vsel %vm1526, %v1822, 0
      %1873 = vmatpush.bf16.msra.mxu0 0
      %1874 = vmatpush.bf16.msra.mxu0 0
      %1875 = vmatpush.bf16.msra.mxu0 0
      %1876 = vmatpush.bf16.msra.mxu0 0
      %1877 = vmatpush.bf16.msra.mxu0 0
      %1878 = vmatpush.bf16.msra.mxu0 0
      %1879 = vmatpush.bf16.msra.mxu0 0
      %1880 = vmatpush.bf16.msra.mxu0 %v1860
      %1881 = vmatmul.bf16.gmra.mxu0 %v1871
      %v1882 = vpop.f32.mrf.mxu0
      %v1883 = vadd.f32 0.0, %v1882
      %v1884 = vpop.f32.mrf.mxu0
      %v1885 = vadd.f32 0.0, %v1884
      %1886 = vdwg.mxu0
      %1887 = vmatpush.bf16.msra.mxu0 0
      %1888 = vmatpush.bf16.msra.mxu0 0
      %1889 = vmatpush.bf16.msra.mxu0 0
      %1890 = vmatpush.bf16.msra.mxu0 0
      %1891 = vmatpush.bf16.msra.mxu0 0
      %1892 = vmatpush.bf16.msra.mxu0 0
      %1893 = vmatpush.bf16.msra.mxu0 0
      %1894 = vmatpush.bf16.msra.mxu0 %v1861
      %1895 = vmatmul.bf16.gmra.mxu0 %v1871
      %v1896 = vpop.f32.mrf.mxu0
      %v1897 = vadd.f32 0.0, %v1896
      %v1898 = vpop.f32.mrf.mxu0
      %v1899 = vadd.f32 0.0, %v1898
      %1900 = vdwg.mxu0
      %1901 = vmatpush.bf16.msra.mxu0 0
      %1902 = vmatpush.bf16.msra.mxu0 0
      %1903 = vmatpush.bf16.msra.mxu0 0
      %1904 = vmatpush.bf16.msra.mxu0 0
      %1905 = vmatpush.bf16.msra.mxu0 0
      %1906 = vmatpush.bf16.msra.mxu0 0
      %1907 = vmatpush.bf16.msra.mxu0 0
      %1908 = vmatpush.bf16.msra.mxu0 %v1862
      %1909 = vmatmul.bf16.gmra.mxu0 %v1871
      %v1910 = vpop.f32.mrf.mxu0
      %v1911 = vadd.f32 0.0, %v1910
      %v1912 = vpop.f32.mrf.mxu0
      %v1913 = vadd.f32 0.0, %v1912
      %1914 = vdwg.mxu0
      %1915 = vmatpush.bf16.msra.mxu0 0
      %1916 = vmatpush.bf16.msra.mxu0 0
      %1917 = vmatpush.bf16.msra.mxu0 0
      %1918 = vmatpush.bf16.msra.mxu0 0
      %1919 = vmatpush.bf16.msra.mxu0 0
      %1920 = vmatpush.bf16.msra.mxu0 0
      %1921 = vmatpush.bf16.msra.mxu0 0
      %1922 = vmatpush.bf16.msra.mxu0 %v1863
      %1923 = vmatmul.bf16.gmra.mxu0 %v1871
      %v1924 = vpop.f32.mrf.mxu0
      %v1925 = vadd.f32 0.0, %v1924
      %v1926 = vpop.f32.mrf.mxu0
      %v1927 = vadd.f32 0.0, %v1926
      %1928 = vdwg.mxu0
      %1929 = vmatpush.bf16.msra.mxu0 0
      %1930 = vmatpush.bf16.msra.mxu0 0
      %1931 = vmatpush.bf16.msra.mxu0 0
      %1932 = vmatpush.bf16.msra.mxu0 0
      %1933 = vmatpush.bf16.msra.mxu0 0
      %1934 = vmatpush.bf16.msra.mxu0 0
      %1935 = vmatpush.bf16.msra.mxu0 0
      %1936 = vmatpush.bf16.msra.mxu0 %v1864
      %1937 = vmatmul.bf16.gmra.mxu0 %v1871
      %v1938 = vpop.f32.mrf.mxu0
      %v1939 = vadd.f32 0.0, %v1938
      %v1940 = vpop.f32.mrf.mxu0
      %v1941 = vadd.f32 0.0, %v1940
      %1942 = vdwg.mxu0
      %v1943 = vadd.f32 %v1799, %v1883
      %v1944 = vadd.f32 %v1800, %v1897
      %v1945 = vadd.f32 %v1801, %v1911
      %v1946 = vadd.f32 %v1802, %v1925
      %v1947 = vadd.f32 %v1803, %v1939
      %v1948 = vadd.f32 %v1804, %v1885
      %v1949 = vadd.f32 %v1805, %v1899
      %v1950 = vadd.f32 %v1806, %v1913
      %v1951 = vadd.f32 %v1807, %v1927
      %v1952 = vadd.f32 %v1808, %v1941
      %s1953 = scalar_lea.vmem %s3, 32
      %v1954 = vld [vmem:[%s1953] sm:$0xf]
      %v1955 = vld [vmem:[%s1953 + $0x4] sm:$0xf]
      %v1956 = vld [vmem:[#allocation2 + $0x4] sm:$0xff]
      %v1957 = vld [vmem:[#allocation2 + $0xc] sm:$0xff]
      %v1958 = vld [vmem:[#allocation2 + $0x14] sm:$0xf]
      %v1959 = vld [vmem:[#allocation2 + $0x1c] sm:$0xff]
      %v1960 = vld [vmem:[#allocation2 + $0x24] sm:$0xff]
      %v1961 = vld [vmem:[#allocation2 + $0x2c] sm:$0xf]
      %v1964 = vunpack.c.l.b16 %v1954
      %v1965 = vunpack.c.l.b16 %v1955
      %v1966 = vpack.c.b16 %v1965, %v1964
      %v1973 = vunpack.c.l.b16 %v1956
      %v1974 = vunpack.c.h.b16 %v1956
      %v1975 = vunpack.c.l.b16 %v1957
      %v1976 = vunpack.c.h.b16 %v1957
      %v1977 = vunpack.c.l.b16 %v1958
      %v1978 = vunpack.c.l.b16 %v1959
      %v1979 = vunpack.c.h.b16 %v1959
      %v1980 = vunpack.c.l.b16 %v1960
      %v1981 = vunpack.c.h.b16 %v1960
      %v1982 = vunpack.c.l.b16 %v1961
      %v1983 = vpack.c.b16 %v1978, %v1973
      %v1984 = vpack.c.b16 %v1979, %v1974
      %v1985 = vpack.c.b16 %v1980, %v1975
      %v1986 = vpack.c.b16 %v1981, %v1976
      %v1987 = vpack.c.b16 %v1982, %v1977
      %v1994 = vsel %vm1526, %v1966, 0
      %1996 = vmatpush.bf16.msra.mxu0 0
      %1997 = vmatpush.bf16.msra.mxu0 0
      %1998 = vmatpush.bf16.msra.mxu0 0
      %1999 = vmatpush.bf16.msra.mxu0 0
      %2000 = vmatpush.bf16.msra.mxu0 0
      %2001 = vmatpush.bf16.msra.mxu0 0
      %2002 = vmatpush.bf16.msra.mxu0 0
      %2003 = vmatpush.bf16.msra.mxu0 %v1983
      %2004 = vmatmul.bf16.gmra.mxu0 %v1994
      %v2005 = vpop.f32.mrf.mxu0
      %v2006 = vadd.f32 0.0, %v2005
      %v2007 = vpop.f32.mrf.mxu0
      %v2008 = vadd.f32 0.0, %v2007
      %2009 = vdwg.mxu0
      %2010 = vmatpush.bf16.msra.mxu0 0
      %2011 = vmatpush.bf16.msra.mxu0 0
      %2012 = vmatpush.bf16.msra.mxu0 0
      %2013 = vmatpush.bf16.msra.mxu0 0
      %2014 = vmatpush.bf16.msra.mxu0 0
      %2015 = vmatpush.bf16.msra.mxu0 0
      %2016 = vmatpush.bf16.msra.mxu0 0
      %2017 = vmatpush.bf16.msra.mxu0 %v1984
      %2018 = vmatmul.bf16.gmra.mxu0 %v1994
      %v2019 = vpop.f32.mrf.mxu0
      %v2020 = vadd.f32 0.0, %v2019
      %v2021 = vpop.f32.mrf.mxu0
      %v2022 = vadd.f32 0.0, %v2021
      %2023 = vdwg.mxu0
      %2024 = vmatpush.bf16.msra.mxu0 0
      %2025 = vmatpush.bf16.msra.mxu0 0
      %2026 = vmatpush.bf16.msra.mxu0 0
      %2027 = vmatpush.bf16.msra.mxu0 0
      %2028 = vmatpush.bf16.msra.mxu0 0
      %2029 = vmatpush.bf16.msra.mxu0 0
      %2030 = vmatpush.bf16.msra.mxu0 0
      %2031 = vmatpush.bf16.msra.mxu0 %v1985
      %2032 = vmatmul.bf16.gmra.mxu0 %v1994
      %v2033 = vpop.f32.mrf.mxu0
      %v2034 = vadd.f32 0.0, %v2033
      %v2035 = vpop.f32.mrf.mxu0
      %v2036 = vadd.f32 0.0, %v2035
      %2037 = vdwg.mxu0
      %2038 = vmatpush.bf16.msra.mxu0 0
      %2039 = vmatpush.bf16.msra.mxu0 0
      %2040 = vmatpush.bf16.msra.mxu0 0
      %2041 = vmatpush.bf16.msra.mxu0 0
      %2042 = vmatpush.bf16.msra.mxu0 0
      %2043 = vmatpush.bf16.msra.mxu0 0
      %2044 = vmatpush.bf16.msra.mxu0 0
      %2045 = vmatpush.bf16.msra.mxu0 %v1986
      %2046 = vmatmul.bf16.gmra.mxu0 %v1994
      %v2047 = vpop.f32.mrf.mxu0
      %v2048 = vadd.f32 0.0, %v2047
      %v2049 = vpop.f32.mrf.mxu0
      %v2050 = vadd.f32 0.0, %v2049
      %2051 = vdwg.mxu0
      %2052 = vmatpush.bf16.msra.mxu0 0
      %2053 = vmatpush.bf16.msra.mxu0 0
      %2054 = vmatpush.bf16.msra.mxu0 0
      %2055 = vmatpush.bf16.msra.mxu0 0
      %2056 = vmatpush.bf16.msra.mxu0 0
      %2057 = vmatpush.bf16.msra.mxu0 0
      %2058 = vmatpush.bf16.msra.mxu0 0
      %2059 = vmatpush.bf16.msra.mxu0 %v1987
      %2060 = vmatmul.bf16.gmra.mxu0 %v1994
      %v2061 = vpop.f32.mrf.mxu0
      %v2062 = vadd.f32 0.0, %v2061
      %v2063 = vpop.f32.mrf.mxu0
      %v2064 = vadd.f32 0.0, %v2063
      %2065 = vdwg.mxu0
      %v2066 = vadd.f32 %v1943, %v2006
      %v2067 = vadd.f32 %v1944, %v2020
      %v2068 = vadd.f32 %v1945, %v2034
      %v2069 = vadd.f32 %v1946, %v2048
      %v2070 = vadd.f32 %v1947, %v2062
      %v2071 = vadd.f32 %v1948, %v2008
      %v2072 = vadd.f32 %v1949, %v2022
      %v2073 = vadd.f32 %v1950, %v2036
      %v2074 = vadd.f32 %v1951, %v2050
      %v2075 = vadd.f32 %v1952, %v2064
      %s2076 = scalar_lea.vmem %s3, 40
      %v2077 = vld [vmem:[%s2076] sm:$0xf]
      %v2078 = vld [vmem:[%s2076 + $0x4] sm:$0xf]
      %v2081 = vunpack.c.l.b16 %v2077
      %v2082 = vunpack.c.l.b16 %v2078
      %v2083 = vpack.c.b16 %v2082, %v2081
      %2084 = vrot.lane.b32.xlu0 %v1983, 127
      %v2085 = vpop.permute.xlu0 %2084
      %2086 = vrot.lane.b32.xlu0 %v1984, 127
      %v2087 = vpop.permute.xlu0 %2086
      %2088 = vrot.lane.b32.xlu0 %v1985, 127
      %v2089 = vpop.permute.xlu0 %2088
      %2090 = vrot.lane.b32.xlu0 %v1986, 127
      %v2091 = vpop.permute.xlu0 %2090
      %2092 = vrot.lane.b32.xlu0 %v1987, 127
      %v2093 = vpop.permute.xlu0 %2092
      %v2094 = vsel %vm295, %v2085, %v2087
      %v2095 = vsel %vm295, %v2087, %v2089
      %v2096 = vsel %vm295, %v2089, %v2091
      %v2097 = vsel %vm295, %v2091, %v2093
      %v2104 = vsel %vm1526, %v2083, 0
      %2106 = vmatpush.bf16.msra.mxu0 0
      %2107 = vmatpush.bf16.msra.mxu0 0
      %2108 = vmatpush.bf16.msra.mxu0 0
      %2109 = vmatpush.bf16.msra.mxu0 0
      %2110 = vmatpush.bf16.msra.mxu0 0
      %2111 = vmatpush.bf16.msra.mxu0 0
      %2112 = vmatpush.bf16.msra.mxu0 0
      %2113 = vmatpush.bf16.msra.mxu0 %v2094
      %2114 = vmatmul.bf16.gmra.mxu0 %v2104
      %v2115 = vpop.f32.mrf.mxu0
      %v2116 = vadd.f32 0.0, %v2115
      %v2117 = vpop.f32.mrf.mxu0
      %v2118 = vadd.f32 0.0, %v2117
      %2119 = vdwg.mxu0
      %2120 = vmatpush.bf16.msra.mxu0 0
      %2121 = vmatpush.bf16.msra.mxu0 0
      %2122 = vmatpush.bf16.msra.mxu0 0
      %2123 = vmatpush.bf16.msra.mxu0 0
      %2124 = vmatpush.bf16.msra.mxu0 0
      %2125 = vmatpush.bf16.msra.mxu0 0
      %2126 = vmatpush.bf16.msra.mxu0 0
      %2127 = vmatpush.bf16.msra.mxu0 %v2095
      %2128 = vmatmul.bf16.gmra.mxu0 %v2104
      %v2129 = vpop.f32.mrf.mxu0
      %v2130 = vadd.f32 0.0, %v2129
      %v2131 = vpop.f32.mrf.mxu0
      %v2132 = vadd.f32 0.0, %v2131
      %2133 = vdwg.mxu0
      %2134 = vmatpush.bf16.msra.mxu0 0
      %2135 = vmatpush.bf16.msra.mxu0 0
      %2136 = vmatpush.bf16.msra.mxu0 0
      %2137 = vmatpush.bf16.msra.mxu0 0
      %2138 = vmatpush.bf16.msra.mxu0 0
      %2139 = vmatpush.bf16.msra.mxu0 0
      %2140 = vmatpush.bf16.msra.mxu0 0
      %2141 = vmatpush.bf16.msra.mxu0 %v2096
      %2142 = vmatmul.bf16.gmra.mxu0 %v2104
      %v2143 = vpop.f32.mrf.mxu0
      %v2144 = vadd.f32 0.0, %v2143
      %v2145 = vpop.f32.mrf.mxu0
      %v2146 = vadd.f32 0.0, %v2145
      %2147 = vdwg.mxu0
      %2148 = vmatpush.bf16.msra.mxu0 0
      %2149 = vmatpush.bf16.msra.mxu0 0
      %2150 = vmatpush.bf16.msra.mxu0 0
      %2151 = vmatpush.bf16.msra.mxu0 0
      %2152 = vmatpush.bf16.msra.mxu0 0
      %2153 = vmatpush.bf16.msra.mxu0 0
      %2154 = vmatpush.bf16.msra.mxu0 0
      %2155 = vmatpush.bf16.msra.mxu0 %v2097
      %2156 = vmatmul.bf16.gmra.mxu0 %v2104
      %v2157 = vpop.f32.mrf.mxu0
      %v2158 = vadd.f32 0.0, %v2157
      %v2159 = vpop.f32.mrf.mxu0
      %v2160 = vadd.f32 0.0, %v2159
      %2161 = vdwg.mxu0
      %2162 = vmatpush.bf16.msra.mxu0 0
      %2163 = vmatpush.bf16.msra.mxu0 0
      %2164 = vmatpush.bf16.msra.mxu0 0
      %2165 = vmatpush.bf16.msra.mxu0 0
      %2166 = vmatpush.bf16.msra.mxu0 0
      %2167 = vmatpush.bf16.msra.mxu0 0
      %2168 = vmatpush.bf16.msra.mxu0 0
      %2169 = vmatpush.bf16.msra.mxu0 %v2093
      %2170 = vmatmul.bf16.gmra.mxu0 %v2104
      %v2171 = vpop.f32.mrf.mxu0
      %v2172 = vadd.f32 0.0, %v2171
      %v2173 = vpop.f32.mrf.mxu0
      %v2174 = vadd.f32 0.0, %v2173
      %2175 = vdwg.mxu0
      %v2176 = vadd.f32 %v2066, %v2116
      %v2177 = vadd.f32 %v2067, %v2130
      %v2178 = vadd.f32 %v2068, %v2144
      %v2179 = vadd.f32 %v2069, %v2158
      %v2180 = vadd.f32 %v2070, %v2172
      %v2181 = vadd.f32 %v2071, %v2118
      %v2182 = vadd.f32 %v2072, %v2132
      %v2183 = vadd.f32 %v2073, %v2146
      %v2184 = vadd.f32 %v2074, %v2160
      %v2185 = vadd.f32 %v2075, %v2174
      %s2186 = scalar_lea.vmem %s3, 48
      %v2187 = vld [vmem:[%s2186] sm:$0xf]
      %v2188 = vld [vmem:[%s2186 + $0x4] sm:$0xf]
      %v2191 = vunpack.c.l.b16 %v2187
      %v2192 = vunpack.c.l.b16 %v2188
      %v2193 = vpack.c.b16 %v2192, %v2191
      %2194 = vrot.lane.b32.xlu0 %v1983, 95
      %v2195 = vpop.permute.xlu0 %2194
      %2196 = vrot.lane.b32.xlu0 %v1984, 95
      %v2197 = vpop.permute.xlu0 %2196
      %2198 = vrot.lane.b32.xlu0 %v1985, 95
      %v2199 = vpop.permute.xlu0 %2198
      %2200 = vrot.lane.b32.xlu0 %v1986, 95
      %v2201 = vpop.permute.xlu0 %2200
      %2202 = vrot.lane.b32.xlu0 %v1987, 95
      %v2203 = vpop.permute.xlu0 %2202
      %vm2204 = vcmask 777216
      %v2205 = vsel %vm2204, %v2195, %v2197
      %v2206 = vsel %vm2204, %v2197, %v2199
      %v2207 = vsel %vm2204, %v2199, %v2201
      %v2208 = vsel %vm2204, %v2201, %v2203
      %v2215 = vsel %vm1526, %v2193, 0
      %2217 = vmatpush.bf16.msra.mxu0 0
      %2218 = vmatpush.bf16.msra.mxu0 0
      %2219 = vmatpush.bf16.msra.mxu0 0
      %2220 = vmatpush.bf16.msra.mxu0 0
      %2221 = vmatpush.bf16.msra.mxu0 0
      %2222 = vmatpush.bf16.msra.mxu0 0
      %2223 = vmatpush.bf16.msra.mxu0 0
      %2224 = vmatpush.bf16.msra.mxu0 %v2205
      %2225 = vmatmul.bf16.gmra.mxu0 %v2215
      %v2226 = vpop.f32.mrf.mxu0
      %v2227 = vadd.f32 0.0, %v2226
      %v2228 = vpop.f32.mrf.mxu0
      %v2229 = vadd.f32 0.0, %v2228
      %2230 = vdwg.mxu0
      %2231 = vmatpush.bf16.msra.mxu0 0
      %2232 = vmatpush.bf16.msra.mxu0 0
      %2233 = vmatpush.bf16.msra.mxu0 0
      %2234 = vmatpush.bf16.msra.mxu0 0
      %2235 = vmatpush.bf16.msra.mxu0 0
      %2236 = vmatpush.bf16.msra.mxu0 0
      %2237 = vmatpush.bf16.msra.mxu0 0
      %2238 = vmatpush.bf16.msra.mxu0 %v2206
      %2239 = vmatmul.bf16.gmra.mxu0 %v2215
      %v2240 = vpop.f32.mrf.mxu0
      %v2241 = vadd.f32 0.0, %v2240
      %v2242 = vpop.f32.mrf.mxu0
      %v2243 = vadd.f32 0.0, %v2242
      %2244 = vdwg.mxu0
      %2245 = vmatpush.bf16.msra.mxu0 0
      %2246 = vmatpush.bf16.msra.mxu0 0
      %2247 = vmatpush.bf16.msra.mxu0 0
      %2248 = vmatpush.bf16.msra.mxu0 0
      %2249 = vmatpush.bf16.msra.mxu0 0
      %2250 = vmatpush.bf16.msra.mxu0 0
      %2251 = vmatpush.bf16.msra.mxu0 0
      %2252 = vmatpush.bf16.msra.mxu0 %v2207
      %2253 = vmatmul.bf16.gmra.mxu0 %v2215
      %v2254 = vpop.f32.mrf.mxu0
      %v2255 = vadd.f32 0.0, %v2254
      %v2256 = vpop.f32.mrf.mxu0
      %v2257 = vadd.f32 0.0, %v2256
      %2258 = vdwg.mxu0
      %2259 = vmatpush.bf16.msra.mxu0 0
      %2260 = vmatpush.bf16.msra.mxu0 0
      %2261 = vmatpush.bf16.msra.mxu0 0
      %2262 = vmatpush.bf16.msra.mxu0 0
      %2263 = vmatpush.bf16.msra.mxu0 0
      %2264 = vmatpush.bf16.msra.mxu0 0
      %2265 = vmatpush.bf16.msra.mxu0 0
      %2266 = vmatpush.bf16.msra.mxu0 %v2208
      %2267 = vmatmul.bf16.gmra.mxu0 %v2215
      %v2268 = vpop.f32.mrf.mxu0
      %v2269 = vadd.f32 0.0, %v2268
      %v2270 = vpop.f32.mrf.mxu0
      %v2271 = vadd.f32 0.0, %v2270
      %2272 = vdwg.mxu0
      %2273 = vmatpush.bf16.msra.mxu0 0
      %2274 = vmatpush.bf16.msra.mxu0 0
      %2275 = vmatpush.bf16.msra.mxu0 0
      %2276 = vmatpush.bf16.msra.mxu0 0
      %2277 = vmatpush.bf16.msra.mxu0 0
      %2278 = vmatpush.bf16.msra.mxu0 0
      %2279 = vmatpush.bf16.msra.mxu0 0
      %2280 = vmatpush.bf16.msra.mxu0 %v2203
      %2281 = vmatmul.bf16.gmra.mxu0 %v2215
      %v2282 = vpop.f32.mrf.mxu0
      %v2283 = vadd.f32 0.0, %v2282
      %v2284 = vpop.f32.mrf.mxu0
      %v2285 = vadd.f32 0.0, %v2284
      %2286 = vdwg.mxu0
      %v2287 = vadd.f32 %v2176, %v2227
      %v2288 = vadd.f32 %v2177, %v2241
      %v2289 = vadd.f32 %v2178, %v2255
      %v2290 = vadd.f32 %v2179, %v2269
      %v2291 = vadd.f32 %v2180, %v2283
      %v2292 = vadd.f32 %v2181, %v2229
      %v2293 = vadd.f32 %v2182, %v2243
      %v2294 = vadd.f32 %v2183, %v2257
      %v2295 = vadd.f32 %v2184, %v2271
      %v2296 = vadd.f32 %v2185, %v2285
      %s2297 = scalar_lea.vmem %s3, 56
      %v2298 = vld [vmem:[%s2297] sm:$0xf]
      %v2299 = vld [vmem:[%s2297 + $0x4] sm:$0xf]
      %v2302 = vunpack.c.l.b16 %v2298
      %v2303 = vunpack.c.l.b16 %v2299
      %v2304 = vpack.c.b16 %v2303, %v2302
      %2305 = vrot.lane.b32.xlu0 %v1983, 94
      %v2306 = vpop.permute.xlu0 %2305
      %2307 = vrot.lane.b32.xlu0 %v1984, 94
      %v2308 = vpop.permute.xlu0 %2307
      %2309 = vrot.lane.b32.xlu0 %v1985, 94
      %v2310 = vpop.permute.xlu0 %2309
      %2311 = vrot.lane.b32.xlu0 %v1986, 94
      %v2312 = vpop.permute.xlu0 %2311
      %2313 = vrot.lane.b32.xlu0 %v1987, 94
      %v2314 = vpop.permute.xlu0 %2313
      %v2315 = vsel %vm622, %v2306, %v2308
      %v2316 = vsel %vm622, %v2308, %v2310
      %v2317 = vsel %vm622, %v2310, %v2312
      %v2318 = vsel %vm622, %v2312, %v2314
      %v2325 = vsel %vm1526, %v2304, 0
      %2327 = vmatpush.bf16.msra.mxu0 0
      %2328 = vmatpush.bf16.msra.mxu0 0
      %2329 = vmatpush.bf16.msra.mxu0 0
      %2330 = vmatpush.bf16.msra.mxu0 0
      %2331 = vmatpush.bf16.msra.mxu0 0
      %2332 = vmatpush.bf16.msra.mxu0 0
      %2333 = vmatpush.bf16.msra.mxu0 0
      %2334 = vmatpush.bf16.msra.mxu0 %v2315
      %2335 = vmatmul.bf16.gmra.mxu0 %v2325
      %v2336 = vpop.f32.mrf.mxu0
      %v2337 = vadd.f32 0.0, %v2336
      %v2338 = vpop.f32.mrf.mxu0
      %v2339 = vadd.f32 0.0, %v2338
      %2340 = vdwg.mxu0
      %2341 = vmatpush.bf16.msra.mxu0 0
      %2342 = vmatpush.bf16.msra.mxu0 0
      %2343 = vmatpush.bf16.msra.mxu0 0
      %2344 = vmatpush.bf16.msra.mxu0 0
      %2345 = vmatpush.bf16.msra.mxu0 0
      %2346 = vmatpush.bf16.msra.mxu0 0
      %2347 = vmatpush.bf16.msra.mxu0 0
      %2348 = vmatpush.bf16.msra.mxu0 %v2316
      %2349 = vmatmul.bf16.gmra.mxu0 %v2325
      %v2350 = vpop.f32.mrf.mxu0
      %v2351 = vadd.f32 0.0, %v2350
      %v2352 = vpop.f32.mrf.mxu0
      %v2353 = vadd.f32 0.0, %v2352
      %2354 = vdwg.mxu0
      %2355 = vmatpush.bf16.msra.mxu0 0
      %2356 = vmatpush.bf16.msra.mxu0 0
      %2357 = vmatpush.bf16.msra.mxu0 0
      %2358 = vmatpush.bf16.msra.mxu0 0
      %2359 = vmatpush.bf16.msra.mxu0 0
      %2360 = vmatpush.bf16.msra.mxu0 0
      %2361 = vmatpush.bf16.msra.mxu0 0
      %2362 = vmatpush.bf16.msra.mxu0 %v2317
      %2363 = vmatmul.bf16.gmra.mxu0 %v2325
      %v2364 = vpop.f32.mrf.mxu0
      %v2365 = vadd.f32 0.0, %v2364
      %v2366 = vpop.f32.mrf.mxu0
      %v2367 = vadd.f32 0.0, %v2366
      %2368 = vdwg.mxu0
      %2369 = vmatpush.bf16.msra.mxu0 0
      %2370 = vmatpush.bf16.msra.mxu0 0
      %2371 = vmatpush.bf16.msra.mxu0 0
      %2372 = vmatpush.bf16.msra.mxu0 0
      %2373 = vmatpush.bf16.msra.mxu0 0
      %2374 = vmatpush.bf16.msra.mxu0 0
      %2375 = vmatpush.bf16.msra.mxu0 0
      %2376 = vmatpush.bf16.msra.mxu0 %v2318
      %2377 = vmatmul.bf16.gmra.mxu0 %v2325
      %v2378 = vpop.f32.mrf.mxu0
      %v2379 = vadd.f32 0.0, %v2378
      %v2380 = vpop.f32.mrf.mxu0
      %v2381 = vadd.f32 0.0, %v2380
      %2382 = vdwg.mxu0
      %2383 = vmatpush.bf16.msra.mxu0 0
      %2384 = vmatpush.bf16.msra.mxu0 0
      %2385 = vmatpush.bf16.msra.mxu0 0
      %2386 = vmatpush.bf16.msra.mxu0 0
      %2387 = vmatpush.bf16.msra.mxu0 0
      %2388 = vmatpush.bf16.msra.mxu0 0
      %2389 = vmatpush.bf16.msra.mxu0 0
      %2390 = vmatpush.bf16.msra.mxu0 %v2314
      %2391 = vmatmul.bf16.gmra.mxu0 %v2325
      %v2392 = vpop.f32.mrf.mxu0
      %v2393 = vadd.f32 0.0, %v2392
      %v2394 = vpop.f32.mrf.mxu0
      %v2395 = vadd.f32 0.0, %v2394
      %2396 = vdwg.mxu0
      %v2397 = vadd.f32 %v2287, %v2337
      %v2398 = vadd.f32 %v2288, %v2351
      %v2399 = vadd.f32 %v2289, %v2365
      %v2400 = vadd.f32 %v2290, %v2379
      %v2401 = vadd.f32 %v2291, %v2393
      %v2402 = vadd.f32 %v2292, %v2339
      %v2403 = vadd.f32 %v2293, %v2353
      %v2404 = vadd.f32 %v2294, %v2367
      %v2405 = vadd.f32 %v2295, %v2381
      %v2406 = vadd.f32 %v2296, %v2395
      %s2407 = scalar_lea.vmem %s3, 64
      %v2408 = vld [vmem:[%s2407] sm:$0xf]
      %v2409 = vld [vmem:[%s2407 + $0x4] sm:$0xf]
      %v2412 = vunpack.c.l.b16 %v2408
      %v2413 = vunpack.c.l.b16 %v2409
      %v2414 = vpack.c.b16 %v2413, %v2412
      %2415 = vrot.lane.b32.xlu0 %v1983, 93
      %v2416 = vpop.permute.xlu0 %2415
      %2417 = vrot.lane.b32.xlu0 %v1984, 93
      %v2418 = vpop.permute.xlu0 %2417
      %2419 = vrot.lane.b32.xlu0 %v1985, 93
      %v2420 = vpop.permute.xlu0 %2419
      %2421 = vrot.lane.b32.xlu0 %v1986, 93
      %v2422 = vpop.permute.xlu0 %2421
      %2423 = vrot.lane.b32.xlu0 %v1987, 93
      %v2424 = vpop.permute.xlu0 %2423
      %v2425 = vsel %vm743, %v2416, %v2418
      %v2426 = vsel %vm743, %v2418, %v2420
      %v2427 = vsel %vm743, %v2420, %v2422
      %v2428 = vsel %vm743, %v2422, %v2424
      %v2435 = vsel %vm1526, %v2414, 0
      %2437 = vmatpush.bf16.msra.mxu0 0
      %2438 = vmatpush.bf16.msra.mxu0 0
      %2439 = vmatpush.bf16.msra.mxu0 0
      %2440 = vmatpush.bf16.msra.mxu0 0
      %2441 = vmatpush.bf16.msra.mxu0 0
      %2442 = vmatpush.bf16.msra.mxu0 0
      %2443 = vmatpush.bf16.msra.mxu0 0
      %2444 = vmatpush.bf16.msra.mxu0 %v2425
      %2445 = vmatmul.bf16.gmra.mxu0 %v2435
      %v2446 = vpop.f32.mrf.mxu0
      %v2447 = vadd.f32 0.0, %v2446
      %v2448 = vpop.f32.mrf.mxu0
      %v2449 = vadd.f32 0.0, %v2448
      %2450 = vdwg.mxu0
      %2451 = vmatpush.bf16.msra.mxu0 0
      %2452 = vmatpush.bf16.msra.mxu0 0
      %2453 = vmatpush.bf16.msra.mxu0 0
      %2454 = vmatpush.bf16.msra.mxu0 0
      %2455 = vmatpush.bf16.msra.mxu0 0
      %2456 = vmatpush.bf16.msra.mxu0 0
      %2457 = vmatpush.bf16.msra.mxu0 0
      %2458 = vmatpush.bf16.msra.mxu0 %v2426
      %2459 = vmatmul.bf16.gmra.mxu0 %v2435
      %v2460 = vpop.f32.mrf.mxu0
      %v2461 = vadd.f32 0.0, %v2460
      %v2462 = vpop.f32.mrf.mxu0
      %v2463 = vadd.f32 0.0, %v2462
      %2464 = vdwg.mxu0
      %2465 = vmatpush.bf16.msra.mxu0 0
      %2466 = vmatpush.bf16.msra.mxu0 0
      %2467 = vmatpush.bf16.msra.mxu0 0
      %2468 = vmatpush.bf16.msra.mxu0 0
      %2469 = vmatpush.bf16.msra.mxu0 0
      %2470 = vmatpush.bf16.msra.mxu0 0
      %2471 = vmatpush.bf16.msra.mxu0 0
      %2472 = vmatpush.bf16.msra.mxu0 %v2427
      %2473 = vmatmul.bf16.gmra.mxu0 %v2435
      %v2474 = vpop.f32.mrf.mxu0
      %v2475 = vadd.f32 0.0, %v2474
      %v2476 = vpop.f32.mrf.mxu0
      %v2477 = vadd.f32 0.0, %v2476
      %2478 = vdwg.mxu0
      %2479 = vmatpush.bf16.msra.mxu0 0
      %2480 = vmatpush.bf16.msra.mxu0 0
      %2481 = vmatpush.bf16.msra.mxu0 0
      %2482 = vmatpush.bf16.msra.mxu0 0
      %2483 = vmatpush.bf16.msra.mxu0 0
      %2484 = vmatpush.bf16.msra.mxu0 0
      %2485 = vmatpush.bf16.msra.mxu0 0
      %2486 = vmatpush.bf16.msra.mxu0 %v2428
      %2487 = vmatmul.bf16.gmra.mxu0 %v2435
      %v2488 = vpop.f32.mrf.mxu0
      %v2489 = vadd.f32 0.0, %v2488
      %v2490 = vpop.f32.mrf.mxu0
      %v2491 = vadd.f32 0.0, %v2490
      %2492 = vdwg.mxu0
      %2493 = vmatpush.bf16.msra.mxu0 0
      %2494 = vmatpush.bf16.msra.mxu0 0
      %2495 = vmatpush.bf16.msra.mxu0 0
      %2496 = vmatpush.bf16.msra.mxu0 0
      %2497 = vmatpush.bf16.msra.mxu0 0
      %2498 = vmatpush.bf16.msra.mxu0 0
      %2499 = vmatpush.bf16.msra.mxu0 0
      %2500 = vmatpush.bf16.msra.mxu0 %v2424
      %2501 = vmatmul.bf16.gmra.mxu0 %v2435
      %v2502 = vpop.f32.mrf.mxu0
      %v2503 = vadd.f32 0.0, %v2502
      %v2504 = vpop.f32.mrf.mxu0
      %v2505 = vadd.f32 0.0, %v2504
      %2506 = vdwg.mxu0
      %v2507 = vadd.f32 %v2397, %v2447
      %v2508 = vadd.f32 %v2398, %v2461
      %v2509 = vadd.f32 %v2399, %v2475
      %v2510 = vadd.f32 %v2400, %v2489
      %v2511 = vadd.f32 %v2401, %v2503
      %v2512 = vadd.f32 %v2402, %v2449
      %v2513 = vadd.f32 %v2403, %v2463
      %v2514 = vadd.f32 %v2404, %v2477
      %v2515 = vadd.f32 %v2405, %v2491
      %v2516 = vadd.f32 %v2406, %v2505
      %v2517 = vmul.f32 %v2507, %v1331
      %v2518 = vmul.f32 %v2508, %v1332
      %v2519 = vmul.f32 %v2509, %v1333
      %v2520 = vmul.f32 %v2510, %v1334
      %v2521 = vmul.f32 %v2511, %v1335
      %v2522 = vmul.f32 %v2512, %v1331
      %v2523 = vmul.f32 %v2513, %v1332
      %v2524 = vmul.f32 %v2514, %v1333
      %v2525 = vmul.f32 %v2515, %v1334
      %v2526 = vmul.f32 %v2516, %v1335
      %v2527 = vadd.f32 %v2517, %v2518
      %v2528 = vadd.f32 %v2527, %v2519
      %v2529 = vadd.f32 %v2528, %v2520
      %v2530 = vsel %vm1354, %v2521, 0.0
      %v2531 = vadd.f32 %v2529, %v2530
      %2532 = vadd.xlane.f32.xlu0 %v2531
      %v2533 = vpop.xlane.xlu0 %2532
      %v2534 = vadd.f32 %v2522, %v2523
      %v2535 = vadd.f32 %v2534, %v2524
      %v2536 = vadd.f32 %v2535, %v2525
      %v2537 = vsel %vm1354, %v2526, 0.0
      %v2538 = vadd.f32 %v2536, %v2537
      %2539 = vadd.xlane.f32.xlu0 %v2538
      %v2540 = vpop.xlane.xlu0 %2539
      %v2541 = vmul.f32 %v2533, 0.001953125
      %v2542 = vmul.f32 %v2540, 0.001953125
      %v2543 = vsub.f32 %v2507, %v2541
      %v2544 = vsub.f32 %v2508, %v2541
      %v2545 = vsub.f32 %v2509, %v2541
      %v2546 = vsub.f32 %v2510, %v2541
      %v2547 = vsub.f32 %v2511, %v2541
      %v2548 = vsub.f32 %v2512, %v2542
      %v2549 = vsub.f32 %v2513, %v2542
      %v2550 = vsub.f32 %v2514, %v2542
      %v2551 = vsub.f32 %v2515, %v2542
      %v2552 = vsub.f32 %v2516, %v2542
      %v2553 = vmul.f32 %v2543, %v1331
      %v2554 = vmul.f32 %v2544, %v1332
      %v2555 = vmul.f32 %v2545, %v1333
      %v2556 = vmul.f32 %v2546, %v1334
      %v2557 = vmul.f32 %v2547, %v1335
      %v2558 = vmul.f32 %v2548, %v1331
      %v2559 = vmul.f32 %v2549, %v1332
      %v2560 = vmul.f32 %v2550, %v1333
      %v2561 = vmul.f32 %v2551, %v1334
      %v2562 = vmul.f32 %v2552, %v1335
      %v2563 = vmul.f32 %v2553, %v2553
      %v2564 = vmul.f32 %v2554, %v2554
      %v2565 = vmul.f32 %v2555, %v2555
      %v2566 = vmul.f32 %v2556, %v2556
      %v2567 = vmul.f32 %v2557, %v2557
      %v2568 = vmul.f32 %v2558, %v2558
      %v2569 = vmul.f32 %v2559, %v2559
      %v2570 = vmul.f32 %v2560, %v2560
      %v2571 = vmul.f32 %v2561, %v2561
      %v2572 = vmul.f32 %v2562, %v2562
      %v2573 = vadd.f32 %v2563, %v2564
      %v2574 = vadd.f32 %v2573, %v2565
      %v2575 = vadd.f32 %v2574, %v2566
      %v2576 = vsel %vm1354, %v2567, 0.0
      %v2577 = vadd.f32 %v2575, %v2576
      %2578 = vadd.xlane.f32.xlu0 %v2577
      %v2579 = vpop.xlane.xlu0 %2578
      %v2580 = vadd.f32 %v2568, %v2569
      %v2581 = vadd.f32 %v2580, %v2570
      %v2582 = vadd.f32 %v2581, %v2571
      %v2583 = vsel %vm1354, %v2572, 0.0
      %v2584 = vadd.f32 %v2582, %v2583
      %2585 = vadd.xlane.f32.xlu0 %v2584
      %v2586 = vpop.xlane.xlu0 %2585
      %v2587 = vmul.f32 %v2579, 0.001953125
      %v2588 = vmul.f32 %v2586, 0.001953125
      %v2589 = vadd.f32 %v2587, 1e-05
      %v2590 = vadd.f32 %v2588, 1e-05
      %v2591 = vrsqrt.pop %v2589
      %v2592 = vmul.f32 %v2591, %v2589
      %v2593 = vmul.f32 %v2592, %v2591
      %v2594 = vmul.f32 0.5, %v2593
      %v2595 = vsub.f32 1.5, %v2594
      %v2596 = vmul.f32 %v2591, %v2595
      %vm2597 = vweird.f32 %v2589
      %vm2598 = vweird.f32 %v2591
      %vm2599 = vmor %vm2597, %vm2598
      %v2600 = vsel %vm2599, %v2591, %v2596
      %v2601 = vrsqrt.pop %v2590
      %v2602 = vmul.f32 %v2601, %v2590
      %v2603 = vmul.f32 %v2602, %v2601
      %v2604 = vmul.f32 0.5, %v2603
      %v2605 = vsub.f32 1.5, %v2604
      %v2606 = vmul.f32 %v2601, %v2605
      %vm2607 = vweird.f32 %v2590
      %vm2608 = vweird.f32 %v2601
      %vm2609 = vmor %vm2607, %vm2608
      %v2610 = vsel %vm2609, %v2601, %v2606
      %v2611 = vmul.f32 %v2553, %v2600
      %v2612 = vmul.f32 %v2554, %v2600
      %v2613 = vmul.f32 %v2555, %v2600
      %v2614 = vmul.f32 %v2556, %v2600
      %v2615 = vmul.f32 %v2557, %v2600
      %v2616 = vmul.f32 %v2558, %v2610
      %v2617 = vmul.f32 %v2559, %v2610
      %v2618 = vmul.f32 %v2560, %v2610
      %v2619 = vmul.f32 %v2561, %v2610
      %v2620 = vmul.f32 %v2562, %v2610
      %v2621 = vmax.f32 %v2611, 0.0
      %v2622 = vmax.f32 %v2612, 0.0
      %v2623 = vmax.f32 %v2613, 0.0
      %v2624 = vmax.f32 %v2614, 0.0
      %v2625 = vmax.f32 %v2615, 0.0
      %v2626 = vmax.f32 %v2616, 0.0
      %v2627 = vmax.f32 %v2617, 0.0
      %v2628 = vmax.f32 %v2618, 0.0
      %v2629 = vmax.f32 %v2619, 0.0
      %v2630 = vmax.f32 %v2620, 0.0
      %v2631 = vpack.c.bf16 %v2622, %v2621
      %v2632 = vpack.c.bf16 %v2624, %v2623
      %v2633 = vpack.c.bf16 %v2625, %v2625
      %v2634 = vpack.c.bf16 %v2627, %v2626
      %v2635 = vpack.c.bf16 %v2629, %v2628
      %v2636 = vpack.c.bf16 %v2630, %v2630
      %2637 = vst [vmem:[#allocation2 + $0x4] sm:$0xff] %v2631
      %2638 = vst [vmem:[#allocation2 + $0xc] sm:$0xff] %v2632
      %2639 = vst.msk [vmem:[#allocation2 + $0x14] sm:$0xf] %vm1464, %v2633
      %2640 = vst [vmem:[#allocation2 + $0x1c] sm:$0xff] %v2634
      %2641 = vst [vmem:[#allocation2 + $0x24] sm:$0xff] %v2635
      %2642 = vst.msk [vmem:[#allocation2 + $0x2c] sm:$0xf] %vm1464, %v2636
      %v2643 = vld [vmem:[%s4] sm:$0x3]
      %v2644 = vld [vmem:[#allocation2] sm:$0xff]
      %v2645 = vld [vmem:[#allocation2 + $0x8] sm:$0xff]
      %v2646 = vld [vmem:[#allocation2 + $0x10] sm:$0xf]
      %v2647 = vld [vmem:[#allocation2 + $0x18] sm:$0xff]
      %v2648 = vld [vmem:[#allocation2 + $0x20] sm:$0xff]
      %v2649 = vld [vmem:[#allocation2 + $0x28] sm:$0xf]
      %s2650 = scalar_lea.vmem %s4, 2
      %v2651 = vld [vmem:[%s2650] sm:$0x3]
      %v2658 = vunpack.c.l.b16 %v2644
      %v2659 = vunpack.c.h.b16 %v2644
      %v2660 = vunpack.c.l.b16 %v2645
      %v2661 = vunpack.c.h.b16 %v2645
      %v2662 = vunpack.c.l.b16 %v2646
      %v2663 = vunpack.c.l.b16 %v2647
      %v2664 = vunpack.c.h.b16 %v2647
      %v2665 = vunpack.c.l.b16 %v2648
      %v2666 = vunpack.c.h.b16 %v2648
      %v2667 = vunpack.c.l.b16 %v2649
      %v2668 = vpack.c.b16 %v2663, %v2658
      %v2669 = vpack.c.b16 %v2664, %v2659
      %v2670 = vpack.c.b16 %v2665, %v2660
      %v2671 = vpack.c.b16 %v2666, %v2661
      %v2672 = vpack.c.b16 %v2667, %v2662
      %2673 = vrot.lane.b32.xlu0 %v2668, 34
      %v2674 = vpop.permute.xlu0 %2673
      %2675 = vrot.lane.b32.xlu0 %v2669, 34
      %v2676 = vpop.permute.xlu0 %2675
      %2677 = vrot.lane.b32.xlu0 %v2670, 34
      %v2678 = vpop.permute.xlu0 %2677
      %2679 = vrot.lane.b32.xlu0 %v2671, 34
      %v2680 = vpop.permute.xlu0 %2679
      %2681 = vrot.lane.b32.xlu0 %v2672, 34
      %v2682 = vpop.permute.xlu0 %2681
      %v2683 = vsel %vm1516, %v2674, %v2676
      %v2684 = vsel %vm1516, %v2676, %v2678
      %v2685 = vsel %vm1516, %v2678, %v2680
      %v2686 = vsel %vm1516, %v2680, %v2682
      %v2693 = vsel %vm1526, %v2651, 0
      %2695 = vmatpush.bf16.msra.mxu0 0
      %2696 = vmatpush.bf16.msra.mxu0 0
      %2697 = vmatpush.bf16.msra.mxu0 0
      %2698 = vmatpush.bf16.msra.mxu0 0
      %2699 = vmatpush.bf16.msra.mxu0 0
      %2700 = vmatpush.bf16.msra.mxu0 0
      %2701 = vmatpush.bf16.msra.mxu0 0
      %2702 = vmatpush.bf16.msra.mxu0 %v2683
      %2703 = vmatmul.bf16.gmra.mxu0 %v2693
      %v2704 = vpop.f32.mrf.mxu0
      %v2705 = vadd.f32 0.0, %v2704
      %v2706 = vpop.f32.mrf.mxu0
      %2707 = vdwg.mxu0
      %2708 = vmatpush.bf16.msra.mxu0 0
      %2709 = vmatpush.bf16.msra.mxu0 0
      %2710 = vmatpush.bf16.msra.mxu0 0
      %2711 = vmatpush.bf16.msra.mxu0 0
      %2712 = vmatpush.bf16.msra.mxu0 0
      %2713 = vmatpush.bf16.msra.mxu0 0
      %2714 = vmatpush.bf16.msra.mxu0 0
      %2715 = vmatpush.bf16.msra.mxu0 %v2684
      %2716 = vmatmul.bf16.gmra.mxu0 %v2693
      %v2717 = vpop.f32.mrf.mxu0
      %v2718 = vadd.f32 0.0, %v2717
      %v2719 = vpop.f32.mrf.mxu0
      %2720 = vdwg.mxu0
      %2721 = vmatpush.bf16.msra.mxu0 0
      %2722 = vmatpush.bf16.msra.mxu0 0
      %2723 = vmatpush.bf16.msra.mxu0 0
      %2724 = vmatpush.bf16.msra.mxu0 0
      %2725 = vmatpush.bf16.msra.mxu0 0
      %2726 = vmatpush.bf16.msra.mxu0 0
      %2727 = vmatpush.bf16.msra.mxu0 0
      %2728 = vmatpush.bf16.msra.mxu0 %v2685
      %2729 = vmatmul.bf16.gmra.mxu0 %v2693
      %v2730 = vpop.f32.mrf.mxu0
      %v2731 = vadd.f32 0.0, %v2730
      %v2732 = vpop.f32.mrf.mxu0
      %2733 = vdwg.mxu0
      %2734 = vmatpush.bf16.msra.mxu0 0
      %2735 = vmatpush.bf16.msra.mxu0 0
      %2736 = vmatpush.bf16.msra.mxu0 0
      %2737 = vmatpush.bf16.msra.mxu0 0
      %2738 = vmatpush.bf16.msra.mxu0 0
      %2739 = vmatpush.bf16.msra.mxu0 0
      %2740 = vmatpush.bf16.msra.mxu0 0
      %2741 = vmatpush.bf16.msra.mxu0 %v2686
      %2742 = vmatmul.bf16.gmra.mxu0 %v2693
      %v2743 = vpop.f32.mrf.mxu0
      %v2744 = vadd.f32 0.0, %v2743
      %v2745 = vpop.f32.mrf.mxu0
      %2746 = vdwg.mxu0
      %2747 = vmatpush.bf16.msra.mxu0 0
      %2748 = vmatpush.bf16.msra.mxu0 0
      %2749 = vmatpush.bf16.msra.mxu0 0
      %2750 = vmatpush.bf16.msra.mxu0 0
      %2751 = vmatpush.bf16.msra.mxu0 0
      %2752 = vmatpush.bf16.msra.mxu0 0
      %2753 = vmatpush.bf16.msra.mxu0 0
      %2754 = vmatpush.bf16.msra.mxu0 %v2682
      %2755 = vmatmul.bf16.gmra.mxu0 %v2693
      %v2756 = vpop.f32.mrf.mxu0
      %v2757 = vadd.f32 0.0, %v2756
      %v2758 = vpop.f32.mrf.mxu0
      %2759 = vdwg.mxu0
      %2760 = vrot.lane.b32.xlu0 %v2668, 35
      %v2761 = vpop.permute.xlu0 %2760
      %2762 = vrot.lane.b32.xlu0 %v2669, 35
      %v2763 = vpop.permute.xlu0 %2762
      %2764 = vrot.lane.b32.xlu0 %v2670, 35
      %v2765 = vpop.permute.xlu0 %2764
      %2766 = vrot.lane.b32.xlu0 %v2671, 35
      %v2767 = vpop.permute.xlu0 %2766
      %2768 = vrot.lane.b32.xlu0 %v2672, 35
      %v2769 = vpop.permute.xlu0 %2768
      %v2770 = vsel %vm1615, %v2761, %v2763
      %v2771 = vsel %vm1615, %v2763, %v2765
      %v2772 = vsel %vm1615, %v2765, %v2767
      %v2773 = vsel %vm1615, %v2767, %v2769
      %v2780 = vsel %vm1526, %v2643, 0
      %2782 = vmatpush.bf16.msra.mxu0 0
      %2783 = vmatpush.bf16.msra.mxu0 0
      %2784 = vmatpush.bf16.msra.mxu0 0
      %2785 = vmatpush.bf16.msra.mxu0 0
      %2786 = vmatpush.bf16.msra.mxu0 0
      %2787 = vmatpush.bf16.msra.mxu0 0
      %2788 = vmatpush.bf16.msra.mxu0 0
      %2789 = vmatpush.bf16.msra.mxu0 %v2770
      %2790 = vmatmul.bf16.gmra.mxu0 %v2780
      %v2791 = vpop.f32.mrf.mxu0
      %v2792 = vadd.f32 %v2705, %v2791
      %v2793 = vpop.f32.mrf.mxu0
      %2794 = vdwg.mxu0
      %2795 = vmatpush.bf16.msra.mxu0 0
      %2796 = vmatpush.bf16.msra.mxu0 0
      %2797 = vmatpush.bf16.msra.mxu0 0
      %2798 = vmatpush.bf16.msra.mxu0 0
      %2799 = vmatpush.bf16.msra.mxu0 0
      %2800 = vmatpush.bf16.msra.mxu0 0
      %2801 = vmatpush.bf16.msra.mxu0 0
      %2802 = vmatpush.bf16.msra.mxu0 %v2771
      %2803 = vmatmul.bf16.gmra.mxu0 %v2780
      %v2804 = vpop.f32.mrf.mxu0
      %v2805 = vadd.f32 %v2718, %v2804
      %v2806 = vpop.f32.mrf.mxu0
      %2807 = vdwg.mxu0
      %2808 = vmatpush.bf16.msra.mxu0 0
      %2809 = vmatpush.bf16.msra.mxu0 0
      %2810 = vmatpush.bf16.msra.mxu0 0
      %2811 = vmatpush.bf16.msra.mxu0 0
      %2812 = vmatpush.bf16.msra.mxu0 0
      %2813 = vmatpush.bf16.msra.mxu0 0
      %2814 = vmatpush.bf16.msra.mxu0 0
      %2815 = vmatpush.bf16.msra.mxu0 %v2772
      %2816 = vmatmul.bf16.gmra.mxu0 %v2780
      %v2817 = vpop.f32.mrf.mxu0
      %v2818 = vadd.f32 %v2731, %v2817
      %v2819 = vpop.f32.mrf.mxu0
      %2820 = vdwg.mxu0
      %2821 = vmatpush.bf16.msra.mxu0 0
      %2822 = vmatpush.bf16.msra.mxu0 0
      %2823 = vmatpush.bf16.msra.mxu0 0
      %2824 = vmatpush.bf16.msra.mxu0 0
      %2825 = vmatpush.bf16.msra.mxu0 0
      %2826 = vmatpush.bf16.msra.mxu0 0
      %2827 = vmatpush.bf16.msra.mxu0 0
      %2828 = vmatpush.bf16.msra.mxu0 %v2773
      %2829 = vmatmul.bf16.gmra.mxu0 %v2780
      %v2830 = vpop.f32.mrf.mxu0
      %v2831 = vadd.f32 %v2744, %v2830
      %v2832 = vpop.f32.mrf.mxu0
      %2833 = vdwg.mxu0
      %2834 = vmatpush.bf16.msra.mxu0 0
      %2835 = vmatpush.bf16.msra.mxu0 0
      %2836 = vmatpush.bf16.msra.mxu0 0
      %2837 = vmatpush.bf16.msra.mxu0 0
      %2838 = vmatpush.bf16.msra.mxu0 0
      %2839 = vmatpush.bf16.msra.mxu0 0
      %2840 = vmatpush.bf16.msra.mxu0 0
      %2841 = vmatpush.bf16.msra.mxu0 %v2769
      %2842 = vmatmul.bf16.gmra.mxu0 %v2780
      %v2843 = vpop.f32.mrf.mxu0
      %v2844 = vadd.f32 %v2757, %v2843
      %v2845 = vpop.f32.mrf.mxu0
      %2846 = vdwg.mxu0
      %s2847 = scalar_lea.vmem %s4, 4
      %v2848 = vld [vmem:[%s2847] sm:$0x3]
      %2849 = vrot.lane.b32.xlu0 %v2668, 33
      %v2850 = vpop.permute.xlu0 %2849
      %2851 = vrot.lane.b32.xlu0 %v2669, 33
      %v2852 = vpop.permute.xlu0 %2851
      %2853 = vrot.lane.b32.xlu0 %v2670, 33
      %v2854 = vpop.permute.xlu0 %2853
      %2855 = vrot.lane.b32.xlu0 %v2671, 33
      %v2856 = vpop.permute.xlu0 %2855
      %2857 = vrot.lane.b32.xlu0 %v2672, 33
      %v2858 = vpop.permute.xlu0 %2857
      %v2859 = vsel %vm1716, %v2850, %v2852
      %v2860 = vsel %vm1716, %v2852, %v2854
      %v2861 = vsel %vm1716, %v2854, %v2856
      %v2862 = vsel %vm1716, %v2856, %v2858
      %v2869 = vsel %vm1526, %v2848, 0
      %2871 = vmatpush.bf16.msra.mxu0 0
      %2872 = vmatpush.bf16.msra.mxu0 0
      %2873 = vmatpush.bf16.msra.mxu0 0
      %2874 = vmatpush.bf16.msra.mxu0 0
      %2875 = vmatpush.bf16.msra.mxu0 0
      %2876 = vmatpush.bf16.msra.mxu0 0
      %2877 = vmatpush.bf16.msra.mxu0 0
      %2878 = vmatpush.bf16.msra.mxu0 %v2859
      %2879 = vmatmul.bf16.gmra.mxu0 %v2869
      %v2880 = vpop.f32.mrf.mxu0
      %v2881 = vadd.f32 0.0, %v2880
      %v2882 = vpop.f32.mrf.mxu0
      %2883 = vdwg.mxu0
      %2884 = vmatpush.bf16.msra.mxu0 0
      %2885 = vmatpush.bf16.msra.mxu0 0
      %2886 = vmatpush.bf16.msra.mxu0 0
      %2887 = vmatpush.bf16.msra.mxu0 0
      %2888 = vmatpush.bf16.msra.mxu0 0
      %2889 = vmatpush.bf16.msra.mxu0 0
      %2890 = vmatpush.bf16.msra.mxu0 0
      %2891 = vmatpush.bf16.msra.mxu0 %v2860
      %2892 = vmatmul.bf16.gmra.mxu0 %v2869
      %v2893 = vpop.f32.mrf.mxu0
      %v2894 = vadd.f32 0.0, %v2893
      %v2895 = vpop.f32.mrf.mxu0
      %2896 = vdwg.mxu0
      %2897 = vmatpush.bf16.msra.mxu0 0
      %2898 = vmatpush.bf16.msra.mxu0 0
      %2899 = vmatpush.bf16.msra.mxu0 0
      %2900 = vmatpush.bf16.msra.mxu0 0
      %2901 = vmatpush.bf16.msra.mxu0 0
      %2902 = vmatpush.bf16.msra.mxu0 0
      %2903 = vmatpush.bf16.msra.mxu0 0
      %2904 = vmatpush.bf16.msra.mxu0 %v2861
      %2905 = vmatmul.bf16.gmra.mxu0 %v2869
      %v2906 = vpop.f32.mrf.mxu0
      %v2907 = vadd.f32 0.0, %v2906
      %v2908 = vpop.f32.mrf.mxu0
      %2909 = vdwg.mxu0
      %2910 = vmatpush.bf16.msra.mxu0 0
      %2911 = vmatpush.bf16.msra.mxu0 0
      %2912 = vmatpush.bf16.msra.mxu0 0
      %2913 = vmatpush.bf16.msra.mxu0 0
      %2914 = vmatpush.bf16.msra.mxu0 0
      %2915 = vmatpush.bf16.msra.mxu0 0
      %2916 = vmatpush.bf16.msra.mxu0 0
      %2917 = vmatpush.bf16.msra.mxu0 %v2862
      %2918 = vmatmul.bf16.gmra.mxu0 %v2869
      %v2919 = vpop.f32.mrf.mxu0
      %v2920 = vadd.f32 0.0, %v2919
      %v2921 = vpop.f32.mrf.mxu0
      %2922 = vdwg.mxu0
      %2923 = vmatpush.bf16.msra.mxu0 0
      %2924 = vmatpush.bf16.msra.mxu0 0
      %2925 = vmatpush.bf16.msra.mxu0 0
      %2926 = vmatpush.bf16.msra.mxu0 0
      %2927 = vmatpush.bf16.msra.mxu0 0
      %2928 = vmatpush.bf16.msra.mxu0 0
      %2929 = vmatpush.bf16.msra.mxu0 0
      %2930 = vmatpush.bf16.msra.mxu0 %v2858
      %2931 = vmatmul.bf16.gmra.mxu0 %v2869
      %v2932 = vpop.f32.mrf.mxu0
      %v2933 = vadd.f32 0.0, %v2932
      %v2934 = vpop.f32.mrf.mxu0
      %2935 = vdwg.mxu0
      %v2936 = vadd.f32 %v2792, %v2881
      %v2937 = vadd.f32 %v2805, %v2894
      %v2938 = vadd.f32 %v2818, %v2907
      %v2939 = vadd.f32 %v2831, %v2920
      %v2940 = vadd.f32 %v2844, %v2933
      %s2941 = scalar_lea.vmem %s4, 6
      %v2942 = vld [vmem:[%s2941] sm:$0x3]
      %v2943 = vld [vmem:[#allocation2] sm:$0xff]
      %v2944 = vld [vmem:[#allocation2 + $0x8] sm:$0xff]
      %v2945 = vld [vmem:[#allocation2 + $0x10] sm:$0xff]
      %v2946 = vld [vmem:[#allocation2 + $0x18] sm:$0xff]
      %v2947 = vld [vmem:[#allocation2 + $0x20] sm:$0xff]
      %v2948 = vld [vmem:[#allocation2 + $0x28] sm:$0xff]
      %v2955 = vunpack.c.l.b16 %v2943
      %v2956 = vunpack.c.h.b16 %v2943
      %v2957 = vunpack.c.l.b16 %v2944
      %v2958 = vunpack.c.h.b16 %v2944
      %v2959 = vunpack.c.l.b16 %v2945
      %v2960 = vunpack.c.h.b16 %v2945
      %v2961 = vunpack.c.l.b16 %v2946
      %v2962 = vunpack.c.h.b16 %v2946
      %v2963 = vunpack.c.l.b16 %v2947
      %v2964 = vunpack.c.h.b16 %v2947
      %v2965 = vunpack.c.l.b16 %v2948
      %v2966 = vunpack.c.h.b16 %v2948
      %v2967 = vpack.c.b16 %v2961, %v2955
      %v2968 = vpack.c.b16 %v2962, %v2956
      %v2969 = vpack.c.b16 %v2963, %v2957
      %v2970 = vpack.c.b16 %v2964, %v2958
      %v2971 = vpack.c.b16 %v2965, %v2959
      %v2972 = vpack.c.b16 %v2966, %v2960
      %2973 = vrot.lane.b32.xlu0 %v2967, 1
      %v2974 = vpop.permute.xlu0 %2973
      %2975 = vrot.lane.b32.xlu0 %v2968, 1
      %v2976 = vpop.permute.xlu0 %2975
      %2977 = vrot.lane.b32.xlu0 %v2969, 1
      %v2978 = vpop.permute.xlu0 %2977
      %2979 = vrot.lane.b32.xlu0 %v2970, 1
      %v2980 = vpop.permute.xlu0 %2979
      %2981 = vrot.lane.b32.xlu0 %v2971, 1
      %v2982 = vpop.permute.xlu0 %2981
      %2983 = vrot.lane.b32.xlu0 %v2972, 1
      %v2984 = vpop.permute.xlu0 %2983
      %v2985 = vsel %vm1859, %v2974, %v2976
      %v2986 = vsel %vm1859, %v2976, %v2978
      %v2987 = vsel %vm1859, %v2978, %v2980
      %v2988 = vsel %vm1859, %v2980, %v2982
      %v2989 = vsel %vm1859, %v2982, %v2984
      %v2996 = vsel %vm1526, %v2942, 0
      %2998 = vmatpush.bf16.msra.mxu0 0
      %2999 = vmatpush.bf16.msra.mxu0 0
      %3000 = vmatpush.bf16.msra.mxu0 0
      %3001 = vmatpush.bf16.msra.mxu0 0
      %3002 = vmatpush.bf16.msra.mxu0 0
      %3003 = vmatpush.bf16.msra.mxu0 0
      %3004 = vmatpush.bf16.msra.mxu0 0
      %3005 = vmatpush.bf16.msra.mxu0 %v2985
      %3006 = vmatmul.bf16.gmra.mxu0 %v2996
      %v3007 = vpop.f32.mrf.mxu0
      %v3008 = vadd.f32 0.0, %v3007
      %v3009 = vpop.f32.mrf.mxu0
      %3010 = vdwg.mxu0
      %3011 = vmatpush.bf16.msra.mxu0 0
      %3012 = vmatpush.bf16.msra.mxu0 0
      %3013 = vmatpush.bf16.msra.mxu0 0
      %3014 = vmatpush.bf16.msra.mxu0 0
      %3015 = vmatpush.bf16.msra.mxu0 0
      %3016 = vmatpush.bf16.msra.mxu0 0
      %3017 = vmatpush.bf16.msra.mxu0 0
      %3018 = vmatpush.bf16.msra.mxu0 %v2986
      %3019 = vmatmul.bf16.gmra.mxu0 %v2996
      %v3020 = vpop.f32.mrf.mxu0
      %v3021 = vadd.f32 0.0, %v3020
      %v3022 = vpop.f32.mrf.mxu0
      %3023 = vdwg.mxu0
      %3024 = vmatpush.bf16.msra.mxu0 0
      %3025 = vmatpush.bf16.msra.mxu0 0
      %3026 = vmatpush.bf16.msra.mxu0 0
      %3027 = vmatpush.bf16.msra.mxu0 0
      %3028 = vmatpush.bf16.msra.mxu0 0
      %3029 = vmatpush.bf16.msra.mxu0 0
      %3030 = vmatpush.bf16.msra.mxu0 0
      %3031 = vmatpush.bf16.msra.mxu0 %v2987
      %3032 = vmatmul.bf16.gmra.mxu0 %v2996
      %v3033 = vpop.f32.mrf.mxu0
      %v3034 = vadd.f32 0.0, %v3033
      %v3035 = vpop.f32.mrf.mxu0
      %3036 = vdwg.mxu0
      %3037 = vmatpush.bf16.msra.mxu0 0
      %3038 = vmatpush.bf16.msra.mxu0 0
      %3039 = vmatpush.bf16.msra.mxu0 0
      %3040 = vmatpush.bf16.msra.mxu0 0
      %3041 = vmatpush.bf16.msra.mxu0 0
      %3042 = vmatpush.bf16.msra.mxu0 0
      %3043 = vmatpush.bf16.msra.mxu0 0
      %3044 = vmatpush.bf16.msra.mxu0 %v2988
      %3045 = vmatmul.bf16.gmra.mxu0 %v2996
      %v3046 = vpop.f32.mrf.mxu0
      %v3047 = vadd.f32 0.0, %v3046
      %v3048 = vpop.f32.mrf.mxu0
      %3049 = vdwg.mxu0
      %3050 = vmatpush.bf16.msra.mxu0 0
      %3051 = vmatpush.bf16.msra.mxu0 0
      %3052 = vmatpush.bf16.msra.mxu0 0
      %3053 = vmatpush.bf16.msra.mxu0 0
      %3054 = vmatpush.bf16.msra.mxu0 0
      %3055 = vmatpush.bf16.msra.mxu0 0
      %3056 = vmatpush.bf16.msra.mxu0 0
      %3057 = vmatpush.bf16.msra.mxu0 %v2989
      %3058 = vmatmul.bf16.gmra.mxu0 %v2996
      %v3059 = vpop.f32.mrf.mxu0
      %v3060 = vadd.f32 0.0, %v3059
      %v3061 = vpop.f32.mrf.mxu0
      %3062 = vdwg.mxu0
      %v3063 = vadd.f32 %v2936, %v3008
      %v3064 = vadd.f32 %v2937, %v3021
      %v3065 = vadd.f32 %v2938, %v3034
      %v3066 = vadd.f32 %v2939, %v3047
      %v3067 = vadd.f32 %v2940, %v3060
      %s3068 = scalar_lea.vmem %s4, 8
      %v3069 = vld [vmem:[%s3068] sm:$0x3]
      %v3070 = vld [vmem:[#allocation2 + $0x4] sm:$0xff]
      %v3071 = vld [vmem:[#allocation2 + $0xc] sm:$0xff]
      %v3072 = vld [vmem:[#allocation2 + $0x14] sm:$0xf]
      %v3073 = vld [vmem:[#allocation2 + $0x1c] sm:$0xff]
      %v3074 = vld [vmem:[#allocation2 + $0x24] sm:$0xff]
      %v3075 = vld [vmem:[#allocation2 + $0x2c] sm:$0xf]
      %v3082 = vunpack.c.l.b16 %v3070
      %v3083 = vunpack.c.h.b16 %v3070
      %v3084 = vunpack.c.l.b16 %v3071
      %v3085 = vunpack.c.h.b16 %v3071
      %v3086 = vunpack.c.l.b16 %v3072
      %v3087 = vunpack.c.l.b16 %v3073
      %v3088 = vunpack.c.h.b16 %v3073
      %v3089 = vunpack.c.l.b16 %v3074
      %v3090 = vunpack.c.h.b16 %v3074
      %v3091 = vunpack.c.l.b16 %v3075
      %v3092 = vpack.c.b16 %v3087, %v3082
      %v3093 = vpack.c.b16 %v3088, %v3083
      %v3094 = vpack.c.b16 %v3089, %v3084
      %v3095 = vpack.c.b16 %v3090, %v3085
      %v3096 = vpack.c.b16 %v3091, %v3086
      %v3103 = vsel %vm1526, %v3069, 0
      %3105 = vmatpush.bf16.msra.mxu0 0
      %3106 = vmatpush.bf16.msra.mxu0 0
      %3107 = vmatpush.bf16.msra.mxu0 0
      %3108 = vmatpush.bf16.msra.mxu0 0
      %3109 = vmatpush.bf16.msra.mxu0 0
      %3110 = vmatpush.bf16.msra.mxu0 0
      %3111 = vmatpush.bf16.msra.mxu0 0
      %3112 = vmatpush.bf16.msra.mxu0 %v3092
      %3113 = vmatmul.bf16.gmra.mxu0 %v3103
      %v3114 = vpop.f32.mrf.mxu0
      %v3115 = vadd.f32 0.0, %v3114
      %v3116 = vpop.f32.mrf.mxu0
      %3117 = vdwg.mxu0
      %3118 = vmatpush.bf16.msra.mxu0 0
      %3119 = vmatpush.bf16.msra.mxu0 0
      %3120 = vmatpush.bf16.msra.mxu0 0
      %3121 = vmatpush.bf16.msra.mxu0 0
      %3122 = vmatpush.bf16.msra.mxu0 0
      %3123 = vmatpush.bf16.msra.mxu0 0
      %3124 = vmatpush.bf16.msra.mxu0 0
      %3125 = vmatpush.bf16.msra.mxu0 %v3093
      %3126 = vmatmul.bf16.gmra.mxu0 %v3103
      %v3127 = vpop.f32.mrf.mxu0
      %v3128 = vadd.f32 0.0, %v3127
      %v3129 = vpop.f32.mrf.mxu0
      %3130 = vdwg.mxu0
      %3131 = vmatpush.bf16.msra.mxu0 0
      %3132 = vmatpush.bf16.msra.mxu0 0
      %3133 = vmatpush.bf16.msra.mxu0 0
      %3134 = vmatpush.bf16.msra.mxu0 0
      %3135 = vmatpush.bf16.msra.mxu0 0
      %3136 = vmatpush.bf16.msra.mxu0 0
      %3137 = vmatpush.bf16.msra.mxu0 0
      %3138 = vmatpush.bf16.msra.mxu0 %v3094
      %3139 = vmatmul.bf16.gmra.mxu0 %v3103
      %v3140 = vpop.f32.mrf.mxu0
      %v3141 = vadd.f32 0.0, %v3140
      %v3142 = vpop.f32.mrf.mxu0
      %3143 = vdwg.mxu0
      %3144 = vmatpush.bf16.msra.mxu0 0
      %3145 = vmatpush.bf16.msra.mxu0 0
      %3146 = vmatpush.bf16.msra.mxu0 0
      %3147 = vmatpush.bf16.msra.mxu0 0
      %3148 = vmatpush.bf16.msra.mxu0 0
      %3149 = vmatpush.bf16.msra.mxu0 0
      %3150 = vmatpush.bf16.msra.mxu0 0
      %3151 = vmatpush.bf16.msra.mxu0 %v3095
      %3152 = vmatmul.bf16.gmra.mxu0 %v3103
      %v3153 = vpop.f32.mrf.mxu0
      %v3154 = vadd.f32 0.0, %v3153
      %v3155 = vpop.f32.mrf.mxu0
      %3156 = vdwg.mxu0
      %3157 = vmatpush.bf16.msra.mxu0 0
      %3158 = vmatpush.bf16.msra.mxu0 0
      %3159 = vmatpush.bf16.msra.mxu0 0
      %3160 = vmatpush.bf16.msra.mxu0 0
      %3161 = vmatpush.bf16.msra.mxu0 0
      %3162 = vmatpush.bf16.msra.mxu0 0
      %3163 = vmatpush.bf16.msra.mxu0 0
      %3164 = vmatpush.bf16.msra.mxu0 %v3096
      %3165 = vmatmul.bf16.gmra.mxu0 %v3103
      %v3166 = vpop.f32.mrf.mxu0
      %v3167 = vadd.f32 0.0, %v3166
      %v3168 = vpop.f32.mrf.mxu0
      %3169 = vdwg.mxu0
      %v3170 = vadd.f32 %v3063, %v3115
      %v3171 = vadd.f32 %v3064, %v3128
      %v3172 = vadd.f32 %v3065, %v3141
      %v3173 = vadd.f32 %v3066, %v3154
      %v3174 = vadd.f32 %v3067, %v3167
      %s3175 = scalar_lea.vmem %s4, 10
      %v3176 = vld [vmem:[%s3175] sm:$0x3]
      %3177 = vrot.lane.b32.xlu0 %v3092, 127
      %v3178 = vpop.permute.xlu0 %3177
      %3179 = vrot.lane.b32.xlu0 %v3093, 127
      %v3180 = vpop.permute.xlu0 %3179
      %3181 = vrot.lane.b32.xlu0 %v3094, 127
      %v3182 = vpop.permute.xlu0 %3181
      %3183 = vrot.lane.b32.xlu0 %v3095, 127
      %v3184 = vpop.permute.xlu0 %3183
      %3185 = vrot.lane.b32.xlu0 %v3096, 127
      %v3186 = vpop.permute.xlu0 %3185
      %v3187 = vsel %vm295, %v3178, %v3180
      %v3188 = vsel %vm295, %v3180, %v3182
      %v3189 = vsel %vm295, %v3182, %v3184
      %v3190 = vsel %vm295, %v3184, %v3186
      %v3197 = vsel %vm1526, %v3176, 0
      %3199 = vmatpush.bf16.msra.mxu0 0
      %3200 = vmatpush.bf16.msra.mxu0 0
      %3201 = vmatpush.bf16.msra.mxu0 0
      %3202 = vmatpush.bf16.msra.mxu0 0
      %3203 = vmatpush.bf16.msra.mxu0 0
      %3204 = vmatpush.bf16.msra.mxu0 0
      %3205 = vmatpush.bf16.msra.mxu0 0
      %3206 = vmatpush.bf16.msra.mxu0 %v3187
      %3207 = vmatmul.bf16.gmra.mxu0 %v3197
      %v3208 = vpop.f32.mrf.mxu0
      %v3209 = vadd.f32 0.0, %v3208
      %v3210 = vpop.f32.mrf.mxu0
      %3211 = vdwg.mxu0
      %3212 = vmatpush.bf16.msra.mxu0 0
      %3213 = vmatpush.bf16.msra.mxu0 0
      %3214 = vmatpush.bf16.msra.mxu0 0
      %3215 = vmatpush.bf16.msra.mxu0 0
      %3216 = vmatpush.bf16.msra.mxu0 0
      %3217 = vmatpush.bf16.msra.mxu0 0
      %3218 = vmatpush.bf16.msra.mxu0 0
      %3219 = vmatpush.bf16.msra.mxu0 %v3188
      %3220 = vmatmul.bf16.gmra.mxu0 %v3197
      %v3221 = vpop.f32.mrf.mxu0
      %v3222 = vadd.f32 0.0, %v3221
      %v3223 = vpop.f32.mrf.mxu0
      %3224 = vdwg.mxu0
      %3225 = vmatpush.bf16.msra.mxu0 0
      %3226 = vmatpush.bf16.msra.mxu0 0
      %3227 = vmatpush.bf16.msra.mxu0 0
      %3228 = vmatpush.bf16.msra.mxu0 0
      %3229 = vmatpush.bf16.msra.mxu0 0
      %3230 = vmatpush.bf16.msra.mxu0 0
      %3231 = vmatpush.bf16.msra.mxu0 0
      %3232 = vmatpush.bf16.msra.mxu0 %v3189
      %3233 = vmatmul.bf16.gmra.mxu0 %v3197
      %v3234 = vpop.f32.mrf.mxu0
      %v3235 = vadd.f32 0.0, %v3234
      %v3236 = vpop.f32.mrf.mxu0
      %3237 = vdwg.mxu0
      %3238 = vmatpush.bf16.msra.mxu0 0
      %3239 = vmatpush.bf16.msra.mxu0 0
      %3240 = vmatpush.bf16.msra.mxu0 0
      %3241 = vmatpush.bf16.msra.mxu0 0
      %3242 = vmatpush.bf16.msra.mxu0 0
      %3243 = vmatpush.bf16.msra.mxu0 0
      %3244 = vmatpush.bf16.msra.mxu0 0
      %3245 = vmatpush.bf16.msra.mxu0 %v3190
      %3246 = vmatmul.bf16.gmra.mxu0 %v3197
      %v3247 = vpop.f32.mrf.mxu0
      %v3248 = vadd.f32 0.0, %v3247
      %v3249 = vpop.f32.mrf.mxu0
      %3250 = vdwg.mxu0
      %3251 = vmatpush.bf16.msra.mxu0 0
      %3252 = vmatpush.bf16.msra.mxu0 0
      %3253 = vmatpush.bf16.msra.mxu0 0
      %3254 = vmatpush.bf16.msra.mxu0 0
      %3255 = vmatpush.bf16.msra.mxu0 0
      %3256 = vmatpush.bf16.msra.mxu0 0
      %3257 = vmatpush.bf16.msra.mxu0 0
      %3258 = vmatpush.bf16.msra.mxu0 %v3186
      %3259 = vmatmul.bf16.gmra.mxu0 %v3197
      %v3260 = vpop.f32.mrf.mxu0
      %v3261 = vadd.f32 0.0, %v3260
      %v3262 = vpop.f32.mrf.mxu0
      %3263 = vdwg.mxu0
      %v3264 = vadd.f32 %v3170, %v3209
      %v3265 = vadd.f32 %v3171, %v3222
      %v3266 = vadd.f32 %v3172, %v3235
      %v3267 = vadd.f32 %v3173, %v3248
      %v3268 = vadd.f32 %v3174, %v3261
      %s3269 = scalar_lea.vmem %s4, 12
      %v3270 = vld [vmem:[%s3269] sm:$0x3]
      %3271 = vrot.lane.b32.xlu0 %v3092, 95
      %v3272 = vpop.permute.xlu0 %3271
      %3273 = vrot.lane.b32.xlu0 %v3093, 95
      %v3274 = vpop.permute.xlu0 %3273
      %3275 = vrot.lane.b32.xlu0 %v3094, 95
      %v3276 = vpop.permute.xlu0 %3275
      %3277 = vrot.lane.b32.xlu0 %v3095, 95
      %v3278 = vpop.permute.xlu0 %3277
      %3279 = vrot.lane.b32.xlu0 %v3096, 95
      %v3280 = vpop.permute.xlu0 %3279
      %v3281 = vsel %vm2204, %v3272, %v3274
      %v3282 = vsel %vm2204, %v3274, %v3276
      %v3283 = vsel %vm2204, %v3276, %v3278
      %v3284 = vsel %vm2204, %v3278, %v3280
      %v3291 = vsel %vm1526, %v3270, 0
      %3293 = vmatpush.bf16.msra.mxu0 0
      %3294 = vmatpush.bf16.msra.mxu0 0
      %3295 = vmatpush.bf16.msra.mxu0 0
      %3296 = vmatpush.bf16.msra.mxu0 0
      %3297 = vmatpush.bf16.msra.mxu0 0
      %3298 = vmatpush.bf16.msra.mxu0 0
      %3299 = vmatpush.bf16.msra.mxu0 0
      %3300 = vmatpush.bf16.msra.mxu0 %v3281
      %3301 = vmatmul.bf16.gmra.mxu0 %v3291
      %v3302 = vpop.f32.mrf.mxu0
      %v3303 = vadd.f32 0.0, %v3302
      %v3304 = vpop.f32.mrf.mxu0
      %3305 = vdwg.mxu0
      %3306 = vmatpush.bf16.msra.mxu0 0
      %3307 = vmatpush.bf16.msra.mxu0 0
      %3308 = vmatpush.bf16.msra.mxu0 0
      %3309 = vmatpush.bf16.msra.mxu0 0
      %3310 = vmatpush.bf16.msra.mxu0 0
      %3311 = vmatpush.bf16.msra.mxu0 0
      %3312 = vmatpush.bf16.msra.mxu0 0
      %3313 = vmatpush.bf16.msra.mxu0 %v3282
      %3314 = vmatmul.bf16.gmra.mxu0 %v3291
      %v3315 = vpop.f32.mrf.mxu0
      %v3316 = vadd.f32 0.0, %v3315
      %v3317 = vpop.f32.mrf.mxu0
      %3318 = vdwg.mxu0
      %3319 = vmatpush.bf16.msra.mxu0 0
      %3320 = vmatpush.bf16.msra.mxu0 0
      %3321 = vmatpush.bf16.msra.mxu0 0
      %3322 = vmatpush.bf16.msra.mxu0 0
      %3323 = vmatpush.bf16.msra.mxu0 0
      %3324 = vmatpush.bf16.msra.mxu0 0
      %3325 = vmatpush.bf16.msra.mxu0 0
      %3326 = vmatpush.bf16.msra.mxu0 %v3283
      %3327 = vmatmul.bf16.gmra.mxu0 %v3291
      %v3328 = vpop.f32.mrf.mxu0
      %v3329 = vadd.f32 0.0, %v3328
      %v3330 = vpop.f32.mrf.mxu0
      %3331 = vdwg.mxu0
      %3332 = vmatpush.bf16.msra.mxu0 0
      %3333 = vmatpush.bf16.msra.mxu0 0
      %3334 = vmatpush.bf16.msra.mxu0 0
      %3335 = vmatpush.bf16.msra.mxu0 0
      %3336 = vmatpush.bf16.msra.mxu0 0
      %3337 = vmatpush.bf16.msra.mxu0 0
      %3338 = vmatpush.bf16.msra.mxu0 0
      %3339 = vmatpush.bf16.msra.mxu0 %v3284
      %3340 = vmatmul.bf16.gmra.mxu0 %v3291
      %v3341 = vpop.f32.mrf.mxu0
      %v3342 = vadd.f32 0.0, %v3341
      %v3343 = vpop.f32.mrf.mxu0
      %3344 = vdwg.mxu0
      %3345 = vmatpush.bf16.msra.mxu0 0
      %3346 = vmatpush.bf16.msra.mxu0 0
      %3347 = vmatpush.bf16.msra.mxu0 0
      %3348 = vmatpush.bf16.msra.mxu0 0
      %3349 = vmatpush.bf16.msra.mxu0 0
      %3350 = vmatpush.bf16.msra.mxu0 0
      %3351 = vmatpush.bf16.msra.mxu0 0
      %3352 = vmatpush.bf16.msra.mxu0 %v3280
      %3353 = vmatmul.bf16.gmra.mxu0 %v3291
      %v3354 = vpop.f32.mrf.mxu0
      %v3355 = vadd.f32 0.0, %v3354
      %v3356 = vpop.f32.mrf.mxu0
      %3357 = vdwg.mxu0
      %v3358 = vadd.f32 %v3264, %v3303
      %v3359 = vadd.f32 %v3265, %v3316
      %v3360 = vadd.f32 %v3266, %v3329
      %v3361 = vadd.f32 %v3267, %v3342
      %v3362 = vadd.f32 %v3268, %v3355
      %s3363 = scalar_lea.vmem %s4, 14
      %v3364 = vld [vmem:[%s3363] sm:$0x3]
      %3365 = vrot.lane.b32.xlu0 %v3092, 94
      %v3366 = vpop.permute.xlu0 %3365
      %3367 = vrot.lane.b32.xlu0 %v3093, 94
      %v3368 = vpop.permute.xlu0 %3367
      %3369 = vrot.lane.b32.xlu0 %v3094, 94
      %v3370 = vpop.permute.xlu0 %3369
      %3371 = vrot.lane.b32.xlu0 %v3095, 94
      %v3372 = vpop.permute.xlu0 %3371
      %3373 = vrot.lane.b32.xlu0 %v3096, 94
      %v3374 = vpop.permute.xlu0 %3373
      %v3375 = vsel %vm622, %v3366, %v3368
      %v3376 = vsel %vm622, %v3368, %v3370
      %v3377 = vsel %vm622, %v3370, %v3372
      %v3378 = vsel %vm622, %v3372, %v3374
      %v3385 = vsel %vm1526, %v3364, 0
      %3387 = vmatpush.bf16.msra.mxu0 0
      %3388 = vmatpush.bf16.msra.mxu0 0
      %3389 = vmatpush.bf16.msra.mxu0 0
      %3390 = vmatpush.bf16.msra.mxu0 0
      %3391 = vmatpush.bf16.msra.mxu0 0
      %3392 = vmatpush.bf16.msra.mxu0 0
      %3393 = vmatpush.bf16.msra.mxu0 0
      %3394 = vmatpush.bf16.msra.mxu0 %v3375
      %3395 = vmatmul.bf16.gmra.mxu0 %v3385
      %v3396 = vpop.f32.mrf.mxu0
      %v3397 = vadd.f32 0.0, %v3396
      %v3398 = vpop.f32.mrf.mxu0
      %3399 = vdwg.mxu0
      %3400 = vmatpush.bf16.msra.mxu0 0
      %3401 = vmatpush.bf16.msra.mxu0 0
      %3402 = vmatpush.bf16.msra.mxu0 0
      %3403 = vmatpush.bf16.msra.mxu0 0
      %3404 = vmatpush.bf16.msra.mxu0 0
      %3405 = vmatpush.bf16.msra.mxu0 0
      %3406 = vmatpush.bf16.msra.mxu0 0
      %3407 = vmatpush.bf16.msra.mxu0 %v3376
      %3408 = vmatmul.bf16.gmra.mxu0 %v3385
      %v3409 = vpop.f32.mrf.mxu0
      %v3410 = vadd.f32 0.0, %v3409
      %v3411 = vpop.f32.mrf.mxu0
      %3412 = vdwg.mxu0
      %3413 = vmatpush.bf16.msra.mxu0 0
      %3414 = vmatpush.bf16.msra.mxu0 0
      %3415 = vmatpush.bf16.msra.mxu0 0
      %3416 = vmatpush.bf16.msra.mxu0 0
      %3417 = vmatpush.bf16.msra.mxu0 0
      %3418 = vmatpush.bf16.msra.mxu0 0
      %3419 = vmatpush.bf16.msra.mxu0 0
      %3420 = vmatpush.bf16.msra.mxu0 %v3377
      %3421 = vmatmul.bf16.gmra.mxu0 %v3385
      %v3422 = vpop.f32.mrf.mxu0
      %v3423 = vadd.f32 0.0, %v3422
      %v3424 = vpop.f32.mrf.mxu0
      %3425 = vdwg.mxu0
      %3426 = vmatpush.bf16.msra.mxu0 0
      %3427 = vmatpush.bf16.msra.mxu0 0
      %3428 = vmatpush.bf16.msra.mxu0 0
      %3429 = vmatpush.bf16.msra.mxu0 0
      %3430 = vmatpush.bf16.msra.mxu0 0
      %3431 = vmatpush.bf16.msra.mxu0 0
      %3432 = vmatpush.bf16.msra.mxu0 0
      %3433 = vmatpush.bf16.msra.mxu0 %v3378
      %3434 = vmatmul.bf16.gmra.mxu0 %v3385
      %v3435 = vpop.f32.mrf.mxu0
      %v3436 = vadd.f32 0.0, %v3435
      %v3437 = vpop.f32.mrf.mxu0
      %3438 = vdwg.mxu0
      %3439 = vmatpush.bf16.msra.mxu0 0
      %3440 = vmatpush.bf16.msra.mxu0 0
      %3441 = vmatpush.bf16.msra.mxu0 0
      %3442 = vmatpush.bf16.msra.mxu0 0
      %3443 = vmatpush.bf16.msra.mxu0 0
      %3444 = vmatpush.bf16.msra.mxu0 0
      %3445 = vmatpush.bf16.msra.mxu0 0
      %3446 = vmatpush.bf16.msra.mxu0 %v3374
      %3447 = vmatmul.bf16.gmra.mxu0 %v3385
      %v3448 = vpop.f32.mrf.mxu0
      %v3449 = vadd.f32 0.0, %v3448
      %v3450 = vpop.f32.mrf.mxu0
      %3451 = vdwg.mxu0
      %v3452 = vadd.f32 %v3358, %v3397
      %v3453 = vadd.f32 %v3359, %v3410
      %v3454 = vadd.f32 %v3360, %v3423
      %v3455 = vadd.f32 %v3361, %v3436
      %v3456 = vadd.f32 %v3362, %v3449
      %s3457 = scalar_lea.vmem %s4, 16
      %v3458 = vld [vmem:[%s3457] sm:$0x3]
      %3459 = vrot.lane.b32.xlu0 %v3092, 93
      %v3460 = vpop.permute.xlu0 %3459
      %3461 = vrot.lane.b32.xlu0 %v3093, 93
      %v3462 = vpop.permute.xlu0 %3461
      %3463 = vrot.lane.b32.xlu0 %v3094, 93
      %v3464 = vpop.permute.xlu0 %3463
      %3465 = vrot.lane.b32.xlu0 %v3095, 93
      %v3466 = vpop.permute.xlu0 %3465
      %3467 = vrot.lane.b32.xlu0 %v3096, 93
      %v3468 = vpop.permute.xlu0 %3467
      %v3469 = vsel %vm743, %v3460, %v3462
      %v3470 = vsel %vm743, %v3462, %v3464
      %v3471 = vsel %vm743, %v3464, %v3466
      %v3472 = vsel %vm743, %v3466, %v3468
      %v3479 = vsel %vm1526, %v3458, 0
      %3481 = vmatpush.bf16.msra.mxu0 0
      %3482 = vmatpush.bf16.msra.mxu0 0
      %3483 = vmatpush.bf16.msra.mxu0 0
      %3484 = vmatpush.bf16.msra.mxu0 0
      %3485 = vmatpush.bf16.msra.mxu0 0
      %3486 = vmatpush.bf16.msra.mxu0 0
      %3487 = vmatpush.bf16.msra.mxu0 0
      %3488 = vmatpush.bf16.msra.mxu0 %v3469
      %3489 = vmatmul.bf16.gmra.mxu0 %v3479
      %v3490 = vpop.f32.mrf.mxu0
      %v3491 = vadd.f32 0.0, %v3490
      %v3492 = vpop.f32.mrf.mxu0
      %3493 = vdwg.mxu0
      %3494 = vmatpush.bf16.msra.mxu0 0
      %3495 = vmatpush.bf16.msra.mxu0 0
      %3496 = vmatpush.bf16.msra.mxu0 0
      %3497 = vmatpush.bf16.msra.mxu0 0
      %3498 = vmatpush.bf16.msra.mxu0 0
      %3499 = vmatpush.bf16.msra.mxu0 0
      %3500 = vmatpush.bf16.msra.mxu0 0
      %3501 = vmatpush.bf16.msra.mxu0 %v3470
      %3502 = vmatmul.bf16.gmra.mxu0 %v3479
      %v3503 = vpop.f32.mrf.mxu0
      %v3504 = vadd.f32 0.0, %v3503
      %v3505 = vpop.f32.mrf.mxu0
      %3506 = vdwg.mxu0
      %3507 = vmatpush.bf16.msra.mxu0 0
      %3508 = vmatpush.bf16.msra.mxu0 0
      %3509 = vmatpush.bf16.msra.mxu0 0
      %3510 = vmatpush.bf16.msra.mxu0 0
      %3511 = vmatpush.bf16.msra.mxu0 0
      %3512 = vmatpush.bf16.msra.mxu0 0
      %3513 = vmatpush.bf16.msra.mxu0 0
      %3514 = vmatpush.bf16.msra.mxu0 %v3471
      %3515 = vmatmul.bf16.gmra.mxu0 %v3479
      %v3516 = vpop.f32.mrf.mxu0
      %v3517 = vadd.f32 0.0, %v3516
      %v3518 = vpop.f32.mrf.mxu0
      %3519 = vdwg.mxu0
      %3520 = vmatpush.bf16.msra.mxu0 0
      %3521 = vmatpush.bf16.msra.mxu0 0
      %3522 = vmatpush.bf16.msra.mxu0 0
      %3523 = vmatpush.bf16.msra.mxu0 0
      %3524 = vmatpush.bf16.msra.mxu0 0
      %3525 = vmatpush.bf16.msra.mxu0 0
      %3526 = vmatpush.bf16.msra.mxu0 0
      %3527 = vmatpush.bf16.msra.mxu0 %v3472
      %3528 = vmatmul.bf16.gmra.mxu0 %v3479
      %v3529 = vpop.f32.mrf.mxu0
      %v3530 = vadd.f32 0.0, %v3529
      %v3531 = vpop.f32.mrf.mxu0
      %3532 = vdwg.mxu0
      %3533 = vmatpush.bf16.msra.mxu0 0
      %3534 = vmatpush.bf16.msra.mxu0 0
      %3535 = vmatpush.bf16.msra.mxu0 0
      %3536 = vmatpush.bf16.msra.mxu0 0
      %3537 = vmatpush.bf16.msra.mxu0 0
      %3538 = vmatpush.bf16.msra.mxu0 0
      %3539 = vmatpush.bf16.msra.mxu0 0
      %3540 = vmatpush.bf16.msra.mxu0 %v3468
      %3541 = vmatmul.bf16.gmra.mxu0 %v3479
      %v3542 = vpop.f32.mrf.mxu0
      %v3543 = vadd.f32 0.0, %v3542
      %v3544 = vpop.f32.mrf.mxu0
      %3545 = vdwg.mxu0
      %v3546 = vadd.f32 %v3452, %v3491
      %v3547 = vadd.f32 %v3453, %v3504
      %v3548 = vadd.f32 %v3454, %v3517
      %v3549 = vadd.f32 %v3455, %v3530
      %v3550 = vadd.f32 %v3456, %v3543
      %v3551 = vld [vmem:[%s5] sm:$0x7]
      %3553 = vset.pattern.permute.xlu0 0
      %3554 = vperm.xlu0 %3553, %v3551
      %v3555 = vpop.permute.xlu0 %3554
      %v3557 = vadd.f32 %v3546, %v3555
      %v3558 = vadd.f32 %v3547, %v3555
      %v3559 = vadd.f32 %v3548, %v3555
      %v3560 = vadd.f32 %v3549, %v3555
      %v3561 = vadd.f32 %v3550, %v3555
      %v3562 = vtanh.pop %v3557
      %v3563 = vtanh.pop %v3558
      %v3564 = vtanh.pop %v3559
      %v3565 = vtanh.pop %v3560
      %v3566 = vtanh.pop %v3561
      %v3571 = vrot.slane %v3563, 4
      %v3572 = vrot.slane %v3565, 4
      %v3573 = vsel %vm304, %v3562, %v3571
      %v3574 = vsel %vm304, %v3564, %v3572
      %3577 = vst [vmem:[%s251] sm:$0x77] %v3573
      %3578 = vst [vmem:[%s251 + $0x8] sm:$0x77] %v3574
      %vm3579 = vcmask 256000
      %3580 = vst.msk [vmem:[%s251 + $0x10] sm:$0x7] %vm3579, %v3566
      %p3581 = scmp.lt.s32.totalorder %s17, 1
      %s3582 = scalar_select %p3581, %s17, 1
      %s3583 = smul.addr %s3582, 5
      %s3584 = smul.addr %s3583, 4
      %s3585 = scalar_lea.vmem %s6, %s3584
      // Predicated region
      $region45: #{dl2s_forward.1} parent=43 // pred_check
        %p3586 = pneg %p166
      $region46: #{dl2s_forward.1} parent=43 // pred_check_branch
        %3588 = sbr.rel (%p3586) target = $region48
      $region47: #{dl2s_forward.1} parent=43 // pred_region
        _
      $region48: #{dl2s_forward.1} parent=43 // pred_fallthru
        _
    $region44: #{dl2s_forward.1} parent=5 // pred_fallthru
      _
    %p3589 = scmp.le.s32.totalorder 2, %s12
    // Predicated region
    $region49: #{dl2s_forward.1} parent=5 // pred_check
      %p3590 = pneg %p3589
    $region50: #{dl2s_forward.1} parent=5 // pred_check_branch
      %3592 = sbr.rel (%p3590) target = $region52
    $region51: #{dl2s_forward.1} parent=5 // pred_region
      %s3593 = ssub.s32 %s12, 2
      // Predicated region
      $region53: #{dl2s_forward.1} parent=51 // pred_check
        %p3594 = pneg %p172
      $region54: #{dl2s_forward.1} parent=51 // pred_check_branch
        %3596 = sbr.rel (%p3594) target = $region56
      $region55: #{dl2s_forward.1} parent=51 // pred_region
        %p3597 = scmp.lt.s32.totalorder %s18, 1
        %s3598 = scalar_select %p3597, %s18, 1
        %s3599 = smul.addr %s3598, 5
        %s3600 = smul.addr %s3599, 4
        %s3601 = scalar_lea.vmem %s6, %s3600
      $region56: #{dl2s_forward.1} parent=51 // pred_fallthru
        _
    $region52: #{dl2s_forward.1} parent=5 // pred_fallthru
      _
  $region6: #{dl2s_forward.1} parent=0 // loop_footer
    %s16 = sadd.s32 1, %s12
  $region7: #{dl2s_forward.1} parent=0 // loop_footer_branch
    %11 = sbr.rel target = $region3
  $region8: #{dl2s_forward.1} parent=0 // loop_exit
    _

</llo_original>
